<compile_context>
chip_gen: v5e
topology: v5e:2x2
jax: 0.10.0
libtpu: 0.0.40
codegen_flags: <defaults>
</compile_context>

<pallas_src>
import jax
import jax.numpy as jnp
from jax import lax
from jax.experimental import pallas as pl
from jax.experimental.pallas import tpu as pltpu

MODEL_RESOLUTION = (24, 32)   # (H, W) — stands in for model.model_resolution
N_ITERS = 6                   # unused by the synthetic head, kept for parity
SUPPORT_GRID_SIZE = 6
VIS_THRESHOLD = 0.9
HEAD_DIM = 8                  # synthetic model feature / output width


# ----------------------------------------------------------------------------
# Resize weight matrices (glue): bilinear(align_corners=True) / nearest.
# `transposed=True` builds the (n_in, n_out) matrix directly (no extra XLA .T).
# ----------------------------------------------------------------------------
def _bilinear_resize_matrix(n_in, n_out, transposed=False):
    idx = jnp.arange(n_out, dtype=jnp.float32)
    if n_out == 1:
        src = jnp.zeros((1,), jnp.float32)
    else:
        src = idx * (n_in - 1) / (n_out - 1)
    lo = jnp.clip(jnp.floor(src).astype(jnp.int32), 0, n_in - 1)
    hi = jnp.clip(lo + 1, 0, n_in - 1)
    frac = src - lo.astype(jnp.float32)
    rows = jnp.arange(n_out)
    if transposed:
        m = jnp.zeros((n_in, n_out), jnp.float32)
        m = m.at[lo, rows].add(1.0 - frac)
        m = m.at[hi, rows].add(frac)
    else:
        m = jnp.zeros((n_out, n_in), jnp.float32)
        m = m.at[rows, lo].add(1.0 - frac)
        m = m.at[rows, hi].add(frac)
    return m


def _nearest_resize_matrix(n_in, n_out, transposed=False):
    idx = jnp.arange(n_out, dtype=jnp.float32)
    src = jnp.clip(jnp.floor(idx * (n_in / n_out)).astype(jnp.int32), 0, n_in - 1)
    rows = jnp.arange(n_out)
    if transposed:
        return jnp.zeros((n_in, n_out), jnp.float32).at[src, rows].set(1.0)
    return jnp.zeros((n_out, n_in), jnp.float32).at[rows, src].set(1.0)


# ----------------------------------------------------------------------------
# Pallas kernel 1: separable resampling  out[f] = Wh @ img[f] @ Ww^T
# Many frames are folded into one grid step; the W-resample is a single tall
# MXU matmul over the whole folded block.  Optionally also emits the per-frame
# partial spatial sum (over H) so the caller never re-reads the resized frames.
# ----------------------------------------------------------------------------
def _make_resize_kernel(with_sums):
    def kernel(wh_ref, wwt_ref, img_ref, out_ref, *sum_refs):
        f_blk, h_in, w_in = img_ref.shape
        w_out = wwt_ref.shape[1]
        img = img_ref[...].astype(jnp.float32)                 # bf16/f32 in → f32
        # lane-axis (W) resample: one tall (F*Hin, Win) @ (Win, Wout) MXU matmul
        tmp = jnp.dot(img.reshape(f_blk * h_in, w_in), wwt_ref[...],
                      preferred_element_type=jnp.float32)
        tmp = tmp.reshape(f_blk, h_in, w_out)
        wh = wh_ref[...]
        # sublane-axis (H) resample, statically unrolled over the folded frames
        for f in range(f_blk):
            res = jnp.dot(wh, tmp[f], preferred_element_type=jnp.float32)
            out_ref[f] = res
            if with_sums:
                # partial spatial sum (over H); the W-sum is finished by the caller
                sum_refs[0][pl.ds(f, 1), :] = jnp.sum(res, axis=0, keepdims=True)
    return kernel


def pallas_resize(frames, w_h, w_w_t, *, with_sums=False, max_block_bytes=2 << 20):
    """out[f] = w_h @ frames[f] @ w_w_t  for every frame f (separable resample)."""
    m, h_in, w_in = frames.shape
    h_out, w_out = w_h.shape[0], w_w_t.shape[1]
    per_frame = h_in * w_in * frames.dtype.itemsize + h_out * w_out * 4
    f_blk = int(max(1, min(m, 64, max_block_bytes // max(per_frame, 1))))
    if f_blk < m:
        f_blk = max(8, (f_blk // 8) * 8)        # sublane-aligned sums block
    n_blocks = int(pl.cdiv(m, f_blk))
    m_pad = n_blocks * f_blk
    if m_pad != m:
        frames = jnp.pad(frames, ((0, m_pad - m), (0, 0), (0, 0)))

    flops = 2 * m_pad * w_out * h_in * (w_in + h_out)
    bytes_accessed = (m_pad * h_in * w_in * frames.dtype.itemsize
                      + m_pad * h_out * w_out * 4
                      + (h_out * h_in + w_in * w_out) * 4)

    frame_spec = pl.BlockSpec((f_blk, h_out, w_out), lambda i: (i, 0, 0))
    if with_sums:
        out_shape = (jax.ShapeDtypeStruct((m_pad, h_out, w_out), jnp.float32),
                     jax.ShapeDtypeStruct((m_pad, w_out), jnp.float32))
        out_specs = (frame_spec, pl.BlockSpec((f_blk, w_out), lambda i: (i, 0)))
        bytes_accessed += m_pad * w_out * 4
    else:
        out_shape = jax.ShapeDtypeStruct((m_pad, h_out, w_out), jnp.float32)
        out_specs = frame_spec

    res = pl.pallas_call(
        _make_resize_kernel(with_sums),
        out_shape=out_shape,
        grid=(n_blocks,),
        in_specs=[
            pl.BlockSpec((h_out, h_in), lambda i: (0, 0)),
            pl.BlockSpec((w_in, w_out), lambda i: (0, 0)),
            pl.BlockSpec((f_blk, h_in, w_in), lambda i: (i, 0, 0)),
        ],
        out_specs=out_specs,
        compiler_params=pltpu.CompilerParams(dimension_semantics=("parallel",)),
        cost_estimate=pl.CostEstimate(flops=int(flops), transcendentals=0,
                                      bytes_accessed=int(bytes_accessed)),
    )(w_h, w_w_t, frames)

    if with_sums:
        out, sums = res
        if m_pad != m:
            out, sums = out[:m], sums[:m]
        return out, sums
    return res if m_pad == m else res[:m]


# ----------------------------------------------------------------------------
# Pallas kernel 2 (fused): synthetic tracking head + post-processing.
#   * builds the 8 feature columns in-registers (no HBM feat/base tensors)
#   * 8-wide contraction lowered to VPU broadcast-multiply-adds (weights in SMEM)
#   * vis threshold, query-frame scatter, rescale-to-origin, pinhole 3D
#   * single packed lane-dense output slab (B, 8, T, Npad), N padded to 128:
#       channels = [traj_x, traj_y, depth, vis, conf, X3d, Y3d, Z3d]
# ----------------------------------------------------------------------------
def _make_track_kernel(inv_w, inv_h, sx, sy, fx, fy, cx, cy, thr):
    inv_fx = 1.0 / fx
    inv_fy = 1.0 / fy

    def kernel(q_ref, tf_ref, w_ref, out_ref):
        q = q_ref[...]            # (4, N): rows = (t, x, y, d) at model resolution
        tf = tf_ref[...]          # (T, 4): cols = (t_norm, mean_r, mean_g, mean_b)
        qt = q[0:1, :]
        qx = q[1:2, :]
        qy = q[2:3, :]
        qd = q[3:4, :]
        fqx = qx * inv_w
        fqy = qy * inv_h
        tnorm = tf[:, 0:1]
        mr = tf[:, 1:2]
        mg = tf[:, 2:3]
        mb = tf[:, 3:4]

        def raw(j):
            # synthetic head column j:  feat @ W[:, j]  (VPU; feat never materialized)
            cn = fqx * w_ref[0, j] + fqy * w_ref[1, j] + qd * w_ref[2, j]      # (1, N)
            ct = (tnorm * w_ref[3, j] + mr * w_ref[4, j] + mg * w_ref[5, j]
                  + mb * w_ref[6, j] + w_ref[7, j])                            # (T, 1)
            return ct + cn                                                     # (T, N)

        t_len, n_len = out_ref.shape[1], out_ref.shape[2]
        t_iota = lax.broadcasted_iota(jnp.int32, (t_len, n_len), 0)
        mask = t_iota == qt.astype(jnp.int32)

        # query-frame scatter, then scale back to the original resolution
        tx = jnp.where(mask, qx, raw(0) + qx) * sx
        ty = jnp.where(mask, qy, raw(1) + qy) * sy
        dd = jnp.where(mask, qd, raw(2) + qd)
        vis_p = pl.reciprocal(1.0 + jnp.exp(-raw(3)), approx=True)   # sigmoid (EUP)
        conf = pl.reciprocal(1.0 + jnp.exp(-raw(4)), approx=True)
        vis = jnp.logical_or(vis_p > thr, mask).astype(jnp.float32)

        out_ref[0] = tx
        out_ref[1] = ty
        out_ref[2] = dd
        out_ref[3] = vis
        out_ref[4] = conf
        out_ref[5] = (tx - cx) * dd * inv_fx
        out_ref[6] = (ty - cy) * dd * inv_fy
        out_ref[7] = dd

    return kernel


def pallas_track_and_post(q_pack, tfeat, head_w, *, inv_w, inv_h,
                          sx, sy, fx, fy, cx, cy, thr=VIS_THRESHOLD):
    b, _, n = q_pack.shape
    t = tfeat.shape[1]
    n_pad = ((n + 127) // 128) * 128          # lane-dense, unmasked output stores
    if n_pad != n:
        q_pack = jnp.pad(q_pack, ((0, 0), (0, 0), (0, n_pad - n)))
    kernel = _make_track_kernel(inv_w, inv_h, sx, sy, fx, fy, cx, cy, thr)
    out = pl.pallas_call(
        kernel,
        out_shape=jax.ShapeDtypeStruct((b, 8, t, n_pad), jnp.float32),
        grid=(b,),
        in_specs=[
            pl.BlockSpec((None, 4, n_pad), lambda i: (i, 0, 0)),
            pl.BlockSpec((None, t, 4), lambda i: (i, 0, 0)),
            pl.BlockSpec(memory_space=pltpu.MemorySpace.SMEM),   # (8, 8) head weights
        ],
        out_specs=pl.BlockSpec((None, 8, t, n_pad), lambda i: (i, 0, 0, 0)),
        compiler_params=pltpu.CompilerParams(dimension_semantics=("parallel",)),
    )(q_pack, tfeat, head_w)
    return out if n_pad == n else out[..., :n]


# ----------------------------------------------------------------------------
# Glue helpers (match the reference helpers)
# ----------------------------------------------------------------------------
def get_points_on_a_grid(size, extent):
    h, w = extent
    margin = w / 64.0
    ys = jnp.linspace(margin, h - margin, size)
    xs = jnp.linspace(margin, w - margin, size)
    gy, gx = jnp.meshgrid(ys, xs, indexing="ij")
    return jnp.stack([gx, gy], axis=-1).reshape(1, size * size, 2)


def bilinear_sample_depth(depth_thw, t_idx, x, y):
    hi, wi = depth_thw.shape[-2:]
    x0 = jnp.floor(x)
    y0 = jnp.floor(y)
    wx = x - x0
    wy = y - y0
    x0c = jnp.clip(x0, 0, wi - 1).astype(jnp.int32)
    x1c = jnp.clip(x0 + 1, 0, wi - 1).astype(jnp.int32)
    y0c = jnp.clip(y0, 0, hi - 1).astype(jnp.int32)
    y1c = jnp.clip(y0 + 1, 0, hi - 1).astype(jnp.int32)
    t_idx = t_idx.astype(jnp.int32)
    d00 = depth_thw[t_idx, y0c, x0c]
    d01 = depth_thw[t_idx, y0c, x1c]
    d10 = depth_thw[t_idx, y1c, x0c]
    d11 = depth_thw[t_idx, y1c, x1c]
    return ((1 - wy) * (1 - wx) * d00 + (1 - wy) * wx * d01
            + wy * (1 - wx) * d10 + wy * wx * d11)


# ----------------------------------------------------------------------------
# Predictor3D._compute_sparse_tracks forward (queries path, scale_to_origin=True)
# ----------------------------------------------------------------------------
def predictor3d_forward(video, videodepth, queries, head_w,
                        grid_size=0, grid_query_frame=0):
    b, t, c, h, w = video.shape
    hi, wi = MODEL_RESOLUTION

    # --- F.interpolate: video bilinear(align_corners=True), depth nearest -------
    wh_bil = _bilinear_resize_matrix(h, hi)
    wwt_bil = _bilinear_resize_matrix(w, wi, transposed=True)
    wh_nn = _nearest_resize_matrix(h, hi)
    wwt_nn = _nearest_resize_matrix(w, wi, transposed=True)

    # Video resize with fused per-frame spatial sums (the only thing the
    # synthetic head consumes from the resized video), so video_r is never
    # re-read from HBM.
    # TODO(synk): the resized video would feed self.model (external DenseTrack3D).
    _video_r, video_hsum = pallas_resize(video.reshape(b * t * c, h, w),
                                         wh_bil, wwt_bil, with_sums=True)
    mean_rgb = video_hsum.reshape(b, t, c, wi).sum(axis=-1) / float(hi * wi)  # (B,T,3)

    # Depth nearest-resize.  The reference only ever samples videodepth[0] at
    # the query points, so only batch 0 is resized.
    # TODO(synk): the full-batch resized depth would feed self.model (external net).
    depth0 = pallas_resize(videodepth[0, :, 0], wh_nn, wwt_nn)       # (T, Hi, Wi)

    # --- query handling ----------------------------------------------------------
    if queries is not None:
        _, n_user, dq = queries.shape
        assert dq == 3
        scale = jnp.array([(wi - 1) / (w - 1), (hi - 1) / (h - 1)], jnp.float32)
        queries = jnp.concatenate([queries[..., :1], queries[..., 1:] * scale], axis=-1)
        add_support_grid = (grid_size == 0)
    else:
        grid_pts = get_points_on_a_grid(grid_size, MODEL_RESOLUTION)
        queries = jnp.concatenate(
            [jnp.full_like(grid_pts[..., :1], float(grid_query_frame)), grid_pts], axis=-1)
        queries = jnp.tile(queries, (b, 1, 1))
        n_user = queries.shape[1]
        add_support_grid = False
        # TODO(synk): segm_mask-filtered grid path not implemented.

    if add_support_grid:
        sup = get_points_on_a_grid(SUPPORT_GRID_SIZE, MODEL_RESOLUTION)
        sup = jnp.concatenate([jnp.zeros_like(sup[..., :1]), sup], axis=-1)
        sup = jnp.tile(sup, (b, 1, 1))
        queries = jnp.concatenate([queries, sup], axis=1)

    # --- bilinear_sample2d of depth at query (frame, x, y)
    #     (reference quirk: always samples from batch-0 depth: videodepth[0, ...])
    qd = bilinear_sample_depth(depth0, queries[..., 0], queries[..., 1], queries[..., 2])
    queries = jnp.concatenate([queries, qd[..., None]], axis=-1)     # (B, Ntot, 4)

    n_keep = n_user if add_support_grid else queries.shape[1]

    # --- tiny per-frame summaries feeding the synthetic head ---------------------
    # TODO(synk): self.model (DenseTrack3D) is an external network; replaced by a
    #             deterministic linear head built inside the fused Pallas kernel.
    t_norm = jnp.arange(t, dtype=jnp.float32) / max(t - 1, 1)
    tfeat = jnp.concatenate(
        [jnp.broadcast_to(t_norm[None, :, None], (b, t, 1)), mean_rgb], axis=-1)

    q_pack = jnp.transpose(queries[:, :n_keep], (0, 2, 1))           # (B, 4, Nkeep)

    sx = (w - 1) / float(wi - 1)
    sy = (h - 1) / float(hi - 1)
    # TODO(synk): convert_trajs_uvd_to_trajs_3d uses a repo-specific intrinsics
    #             estimator; approximated here with a fixed pinhole model.
    fx = fy = float(max(h, w))
    cx = w / 2.0
    cy = h / 2.0

    packed = pallas_track_and_post(
        q_pack, tfeat, head_w,
        inv_w=1.0 / (wi - 1), inv_h=1.0 / (hi - 1),
        sx=sx, sy=sy, fx=fx, fy=fy, cx=cx, cy=cy)                    # (B, 8, T, N)
    # TODO(synk): backward_tracking (_compute_backward_tracks) not implemented.

    trajs_uv = jnp.moveaxis(packed[:, 0:2], 1, -1)                   # (B, T, N, 2)
    trajs_depth = jnp.moveaxis(packed[:, 2:3], 1, -1)                # (B, T, N, 1)
    vis_out = packed[:, 3] > 0.5                                     # (B, T, N) bool
    conf = packed[:, 4]                                              # (B, T, N)
    coords_3d = jnp.moveaxis(packed[:, 5:8], 1, -1)                  # (B, T, N, 3)

    return {
        "trajs_uv": trajs_uv,
        "trajs_depth": trajs_depth,
        "vis": vis_out,
        "conf": conf,
        "trajs_3d_dict": {"coords": coords_3d, "vis": vis_out},
    }


# ----------------------------------------------------------------------------
if __name__ == "__main__":
    key = jax.random.PRNGKey(0)
    k1, k2, k3, k4, k5, k6 = jax.random.split(key, 6)

    B, T, C, H, W = 2, 8, 3, 16, 16
    N = 5

    video = jax.random.uniform(k1, (B, T, C, H, W), jnp.float32)
    videodepth = jax.random.uniform(k2, (B, T, 1, H, W), jnp.float32) * 4.0 + 0.5
    qt = jax.random.randint(k3, (B, N), 0, T).astype(jnp.float32)
    qx = jax.random.uniform(k4, (B, N), jnp.float32) * (W - 1)
    qy = jax.random.uniform(k5, (B, N), jnp.float32) * (H - 1)
    queries = jnp.stack([qt, qx, qy], axis=-1)                 # (B, N, 3): (t, x, y)

    head_w = jax.random.normal(k6, (HEAD_DIM, HEAD_DIM), jnp.float32) * 0.1

    fwd = jax.jit(predictor3d_forward)
    out = fwd(video, videodepth, queries, head_w)
    out = jax.tree_util.tree_map(jax.block_until_ready, out)

    assert out["trajs_uv"].shape == (B, T, N, 2)
    assert out["trajs_depth"].shape == (B, T, N, 1)
    assert out["vis"].shape == (B, T, N) and out["vis"].dtype == jnp.bool_
    assert out["conf"].shape == (B, T, N)
    assert out["trajs_3d_dict"]["coords"].shape == (B, T, N, 3)

    print("KERNEL_OK")
</pallas_src>

<mosaic_0001>
module attributes {stable_mosaic.version = 11 : i64} {
  func.func @kernel(%arg0: i32, %arg1: memref<24x16xf32, #tpu.memory_space<vmem>>, %arg2: memref<16x32xf32, #tpu.memory_space<vmem>>, %arg3: memref<8x16x16xf32, #tpu.memory_space<vmem>>, %arg4: memref<8x24x32xf32, #tpu.memory_space<vmem>>) attributes {dimension_semantics = [#tpu.dimension_semantics<parallel>], iteration_bounds = array<i64: 1>, scalar_prefetch = 0 : i64, scratch_operands = 0 : i64, tpu.core_type = #tpu.core_type<tc>, window_params = [{pipeline_mode = #tpu.pipeline_mode<synchronous>, transform_indices = @transform_0, window_bounds = array<i64: 24, 16>}, {pipeline_mode = #tpu.pipeline_mode<synchronous>, transform_indices = @transform_1, window_bounds = array<i64: 16, 32>}, {transform_indices = @transform_2, window_bounds = array<i64: 8, 16, 16>}, {transform_indices = @transform_3, window_bounds = array<i64: 8, 24, 32>}]} {
    %c0 = arith.constant 0 : index
    %c0_0 = arith.constant 0 : index
    %c0_1 = arith.constant 0 : index
    %0 = vector.load %arg3[%c0, %c0_0, %c0_1] : memref<8x16x16xf32, #tpu.memory_space<vmem>>, vector<8x16x16xf32>
    %1 = vector.shape_cast %0 : vector<8x16x16xf32> to vector<128x16xf32>
    %c0_2 = arith.constant 0 : index
    %c0_3 = arith.constant 0 : index
    %2 = vector.load %arg2[%c0_2, %c0_3] : memref<16x32xf32, #tpu.memory_space<vmem>>, vector<16x32xf32>
    %cst = arith.constant dense<0.000000e+00> : vector<128x32xf32>
    %3 = tpu.matmul %1, %2, %cst {dimension_numbers = #tpu.dot_dimension_numbers<[1], [0], [0], [1], [0, 0, 1, 1], [], []>} : vector<128x16xf32>, vector<16x32xf32>, vector<128x32xf32> -> vector<128x32xf32>
    %4 = vector.shape_cast %3 : vector<128x32xf32> to vector<8x16x32xf32>
    %c0_4 = arith.constant 0 : index
    %c0_5 = arith.constant 0 : index
    %5 = vector.load %arg1[%c0_4, %c0_5] : memref<24x16xf32, #tpu.memory_space<vmem>>, vector<24x16xf32>
    %6 = vector.extract_strided_slice %4 {offsets = [0, 0, 0], sizes = [1, 16, 32], strides = [1, 1, 1]} : vector<8x16x32xf32> to vector<1x16x32xf32>
    %7 = vector.shape_cast %6 : vector<1x16x32xf32> to vector<16x32xf32>
    %cst_6 = arith.constant dense<0.000000e+00> : vector<24x32xf32>
    %8 = tpu.matmul %5, %7, %cst_6 {dimension_numbers = #tpu.dot_dimension_numbers<[1], [0], [0], [1], [0, 0, 1, 1], [], []>} : vector<24x16xf32>, vector<16x32xf32>, vector<24x32xf32> -> vector<24x32xf32>
    %c0_7 = arith.constant 0 : index
    %c0_8 = arith.constant 0 : index
    %c0_9 = arith.constant 0 : index
    %9 = vector.load %arg4[%c0_7, %c0_8, %c0_9] : memref<8x24x32xf32, #tpu.memory_space<vmem>>, vector<1x24x32xf32>
    %10 = vector.shape_cast %9 : vector<1x24x32xf32> to vector<24x32xf32>
    %11 = vector.shape_cast %8 : vector<24x32xf32> to vector<1x24x32xf32>
    tpu.vector_store %arg4[%c0_7, %c0_8, %c0_9], %11 {strides = array<i32>} : memref<8x24x32xf32, #tpu.memory_space<vmem>>, vector<1x24x32xf32>,
    %12 = vector.extract_strided_slice %4 {offsets = [1, 0, 0], sizes = [1, 16, 32], strides = [1, 1, 1]} : vector<8x16x32xf32> to vector<1x16x32xf32>
    %13 = vector.shape_cast %12 : vector<1x16x32xf32> to vector<16x32xf32>
    %cst_10 = arith.constant dense<0.000000e+00> : vector<24x32xf32>
    %14 = tpu.matmul %5, %13, %cst_10 {dimension_numbers = #tpu.dot_dimension_numbers<[1], [0], [0], [1], [0, 0, 1, 1], [], []>} : vector<24x16xf32>, vector<16x32xf32>, vector<24x32xf32> -> vector<24x32xf32>
    %c1 = arith.constant 1 : index
    %c0_11 = arith.constant 0 : index
    %c0_12 = arith.constant 0 : index
    %15 = vector.load %arg4[%c1, %c0_11, %c0_12] : memref<8x24x32xf32, #tpu.memory_space<vmem>>, vector<1x24x32xf32>
    %16 = vector.shape_cast %15 : vector<1x24x32xf32> to vector<24x32xf32>
    %17 = vector.shape_cast %14 : vector<24x32xf32> to vector<1x24x32xf32>
    tpu.vector_store %arg4[%c1, %c0_11, %c0_12], %17 {strides = array<i32>} : memref<8x24x32xf32, #tpu.memory_space<vmem>>, vector<1x24x32xf32>,
    %18 = vector.extract_strided_slice %4 {offsets = [2, 0, 0], sizes = [1, 16, 32], strides = [1, 1, 1]} : vector<8x16x32xf32> to vector<1x16x32xf32>
    %19 = vector.shape_cast %18 : vector<1x16x32xf32> to vector<16x32xf32>
    %cst_13 = arith.constant dense<0.000000e+00> : vector<24x32xf32>
    %20 = tpu.matmul %5, %19, %cst_13 {dimension_numbers = #tpu.dot_dimension_numbers<[1], [0], [0], [1], [0, 0, 1, 1], [], []>} : vector<24x16xf32>, vector<16x32xf32>, vector<24x32xf32> -> vector<24x32xf32>
    %c2 = arith.constant 2 : index
    %c0_14 = arith.constant 0 : index
    %c0_15 = arith.constant 0 : index
    %21 = vector.load %arg4[%c2, %c0_14, %c0_15] : memref<8x24x32xf32, #tpu.memory_space<vmem>>, vector<1x24x32xf32>
    %22 = vector.shape_cast %21 : vector<1x24x32xf32> to vector<24x32xf32>
    %23 = vector.shape_cast %20 : vector<24x32xf32> to vector<1x24x32xf32>
    tpu.vector_store %arg4[%c2, %c0_14, %c0_15], %23 {strides = array<i32>} : memref<8x24x32xf32, #tpu.memory_space<vmem>>, vector<1x24x32xf32>,
    %24 = vector.extract_strided_slice %4 {offsets = [3, 0, 0], sizes = [1, 16, 32], strides = [1, 1, 1]} : vector<8x16x32xf32> to vector<1x16x32xf32>
    %25 = vector.shape_cast %24 : vector<1x16x32xf32> to vector<16x32xf32>
    %cst_16 = arith.constant dense<0.000000e+00> : vector<24x32xf32>
    %26 = tpu.matmul %5, %25, %cst_16 {dimension_numbers = #tpu.dot_dimension_numbers<[1], [0], [0], [1], [0, 0, 1, 1], [], []>} : vector<24x16xf32>, vector<16x32xf32>, vector<24x32xf32> -> vector<24x32xf32>
    %c3 = arith.constant 3 : index
    %c0_17 = arith.constant 0 : index
    %c0_18 = arith.constant 0 : index
    %27 = vector.load %arg4[%c3, %c0_17, %c0_18] : memref<8x24x32xf32, #tpu.memory_space<vmem>>, vector<1x24x32xf32>
    %28 = vector.shape_cast %27 : vector<1x24x32xf32> to vector<24x32xf32>
    %29 = vector.shape_cast %26 : vector<24x32xf32> to vector<1x24x32xf32>
    tpu.vector_store %arg4[%c3, %c0_17, %c0_18], %29 {strides = array<i32>} : memref<8x24x32xf32, #tpu.memory_space<vmem>>, vector<1x24x32xf32>,
    %30 = vector.extract_strided_slice %4 {offsets = [4, 0, 0], sizes = [1, 16, 32], strides = [1, 1, 1]} : vector<8x16x32xf32> to vector<1x16x32xf32>
    %31 = vector.shape_cast %30 : vector<1x16x32xf32> to vector<16x32xf32>
    %cst_19 = arith.constant dense<0.000000e+00> : vector<24x32xf32>
    %32 = tpu.matmul %5, %31, %cst_19 {dimension_numbers = #tpu.dot_dimension_numbers<[1], [0], [0], [1], [0, 0, 1, 1], [], []>} : vector<24x16xf32>, vector<16x32xf32>, vector<24x32xf32> -> vector<24x32xf32>
    %c4 = arith.constant 4 : index
    %c0_20 = arith.constant 0 : index
    %c0_21 = arith.constant 0 : index
    %33 = vector.load %arg4[%c4, %c0_20, %c0_21] : memref<8x24x32xf32, #tpu.memory_space<vmem>>, vector<1x24x32xf32>
    %34 = vector.shape_cast %33 : vector<1x24x32xf32> to vector<24x32xf32>
    %35 = vector.shape_cast %32 : vector<24x32xf32> to vector<1x24x32xf32>
    tpu.vector_store %arg4[%c4, %c0_20, %c0_21], %35 {strides = array<i32>} : memref<8x24x32xf32, #tpu.memory_space<vmem>>, vector<1x24x32xf32>,
    %36 = vector.extract_strided_slice %4 {offsets = [5, 0, 0], sizes = [1, 16, 32], strides = [1, 1, 1]} : vector<8x16x32xf32> to vector<1x16x32xf32>
    %37 = vector.shape_cast %36 : vector<1x16x32xf32> to vector<16x32xf32>
    %cst_22 = arith.constant dense<0.000000e+00> : vector<24x32xf32>
    %38 = tpu.matmul %5, %37, %cst_22 {dimension_numbers = #tpu.dot_dimension_numbers<[1], [0], [0], [1], [0, 0, 1, 1], [], []>} : vector<24x16xf32>, vector<16x32xf32>, vector<24x32xf32> -> vector<24x32xf32>
    %c5 = arith.constant 5 : index
    %c0_23 = arith.constant 0 : index
    %c0_24 = arith.constant 0 : index
    %39 = vector.load %arg4[%c5, %c0_23, %c0_24] : memref<8x24x32xf32, #tpu.memory_space<vmem>>, vector<1x24x32xf32>
    %40 = vector.shape_cast %39 : vector<1x24x32xf32> to vector<24x32xf32>
    %41 = vector.shape_cast %38 : vector<24x32xf32> to vector<1x24x32xf32>
    tpu.vector_store %arg4[%c5, %c0_23, %c0_24], %41 {strides = array<i32>} : memref<8x24x32xf32, #tpu.memory_space<vmem>>, vector<1x24x32xf32>,
    %42 = vector.extract_strided_slice %4 {offsets = [6, 0, 0], sizes = [1, 16, 32], strides = [1, 1, 1]} : vector<8x16x32xf32> to vector<1x16x32xf32>
    %43 = vector.shape_cast %42 : vector<1x16x32xf32> to vector<16x32xf32>
    %cst_25 = arith.constant dense<0.000000e+00> : vector<24x32xf32>
    %44 = tpu.matmul %5, %43, %cst_25 {dimension_numbers = #tpu.dot_dimension_numbers<[1], [0], [0], [1], [0, 0, 1, 1], [], []>} : vector<24x16xf32>, vector<16x32xf32>, vector<24x32xf32> -> vector<24x32xf32>
    %c6 = arith.constant 6 : index
    %c0_26 = arith.constant 0 : index
    %c0_27 = arith.constant 0 : index
    %45 = vector.load %arg4[%c6, %c0_26, %c0_27] : memref<8x24x32xf32, #tpu.memory_space<vmem>>, vector<1x24x32xf32>
    %46 = vector.shape_cast %45 : vector<1x24x32xf32> to vector<24x32xf32>
    %47 = vector.shape_cast %44 : vector<24x32xf32> to vector<1x24x32xf32>
    tpu.vector_store %arg4[%c6, %c0_26, %c0_27], %47 {strides = array<i32>} : memref<8x24x32xf32, #tpu.memory_space<vmem>>, vector<1x24x32xf32>,
    %48 = vector.extract_strided_slice %4 {offsets = [7, 0, 0], sizes = [1, 16, 32], strides = [1, 1, 1]} : vector<8x16x32xf32> to vector<1x16x32xf32>
    %49 = vector.shape_cast %48 : vector<1x16x32xf32> to vector<16x32xf32>
    %cst_28 = arith.constant dense<0.000000e+00> : vector<24x32xf32>
    %50 = tpu.matmul %5, %49, %cst_28 {dimension_numbers = #tpu.dot_dimension_numbers<[1], [0], [0], [1], [0, 0, 1, 1], [], []>} : vector<24x16xf32>, vector<16x32xf32>, vector<24x32xf32> -> vector<24x32xf32>
    %c7 = arith.constant 7 : index
    %c0_29 = arith.constant 0 : index
    %c0_30 = arith.constant 0 : index
    %51 = vector.load %arg4[%c7, %c0_29, %c0_30] : memref<8x24x32xf32, #tpu.memory_space<vmem>>, vector<1x24x32xf32>
    %52 = vector.shape_cast %51 : vector<1x24x32xf32> to vector<24x32xf32>
    %53 = vector.shape_cast %50 : vector<24x32xf32> to vector<1x24x32xf32>
    tpu.vector_store %arg4[%c7, %c0_29, %c0_30], %53 {strides = array<i32>} : memref<8x24x32xf32, #tpu.memory_space<vmem>>, vector<1x24x32xf32>,
    return
  }
  func.func @transform_0(%arg0: i32) -> (i32, i32) {
    %c0_i32 = arith.constant 0 : i32
    %c0_i32_0 = arith.constant 0 : i32
    %c0_i32_1 = arith.constant 0 : i32
    return %c0_i32, %c0_i32_0 : i32, i32
  }
  func.func @transform_1(%arg0: i32) -> (i32, i32) {
    %c0_i32 = arith.constant 0 : i32
    %c0_i32_0 = arith.constant 0 : i32
    %c0_i32_1 = arith.constant 0 : i32
    return %c0_i32, %c0_i32_0 : i32, i32
  }
  func.func @transform_2(%arg0: i32) -> (i32, i32, i32) {
    %c0_i32 = arith.constant 0 : i32
    %c0_i32_0 = arith.constant 0 : i32
    %c0_i32_1 = arith.constant 0 : i32
    return %arg0, %c0_i32, %c0_i32_0 : i32, i32, i32
  }
  func.func @transform_3(%arg0: i32) -> (i32, i32, i32) {
    %c0_i32 = arith.constant 0 : i32
    %c0_i32_0 = arith.constant 0 : i32
    %c0_i32_1 = arith.constant 0 : i32
    return %arg0, %c0_i32, %c0_i32_0 : i32, i32, i32
  }
}

module attributes {stable_mosaic.version = 11 : i64} {
  func.func @kernel(%arg0: i32, %arg1: memref<24x16xf32, #tpu.memory_space<vmem>>, %arg2: memref<16x32xf32, #tpu.memory_space<vmem>>, %arg3: memref<48x16x16xf32, #tpu.memory_space<vmem>>, %arg4: memref<48x24x32xf32, #tpu.memory_space<vmem>>, %arg5: memref<48x32xf32, #tpu.memory_space<vmem>>) attributes {dimension_semantics = [#tpu.dimension_semantics<parallel>], iteration_bounds = array<i64: 1>, scalar_prefetch = 0 : i64, scratch_operands = 0 : i64, tpu.core_type = #tpu.core_type<tc>, window_params = [{pipeline_mode = #tpu.pipeline_mode<synchronous>, transform_indices = @transform_0, window_bounds = array<i64: 24, 16>}, {pipeline_mode = #tpu.pipeline_mode<synchronous>, transform_indices = @transform_1, window_bounds = array<i64: 16, 32>}, {transform_indices = @transform_2, window_bounds = array<i64: 48, 16, 16>}, {transform_indices = @transform_3, window_bounds = array<i64: 48, 24, 32>}, {transform_indices = @transform_4, window_bounds = array<i64: 48, 32>}]} {
    %c0 = arith.constant 0 : index
    %c0_0 = arith.constant 0 : index
    %c0_1 = arith.constant 0 : index
    %0 = vector.load %arg3[%c0, %c0_0, %c0_1] : memref<48x16x16xf32, #tpu.memory_space<vmem>>, vector<48x16x16xf32>
    %1 = vector.shape_cast %0 : vector<48x16x16xf32> to vector<768x16xf32>
    %c0_2 = arith.constant 0 : index
    %c0_3 = arith.constant 0 : index
    %2 = vector.load %arg2[%c0_2, %c0_3] : memref<16x32xf32, #tpu.memory_space<vmem>>, vector<16x32xf32>
    %cst = arith.constant dense<0.000000e+00> : vector<768x32xf32>
    %3 = tpu.matmul %1, %2, %cst {dimension_numbers = #tpu.dot_dimension_numbers<[1], [0], [0], [1], [0, 0, 1, 1], [], []>} : vector<768x16xf32>, vector<16x32xf32>, vector<768x32xf32> -> vector<768x32xf32>
    %4 = vector.shape_cast %3 : vector<768x32xf32> to vector<48x16x32xf32>
    %c0_4 = arith.constant 0 : index
    %c0_5 = arith.constant 0 : index
    %5 = vector.load %arg1[%c0_4, %c0_5] : memref<24x16xf32, #tpu.memory_space<vmem>>, vector<24x16xf32>
    %6 = vector.extract_strided_slice %4 {offsets = [0, 0, 0], sizes = [1, 16, 32], strides = [1, 1, 1]} : vector<48x16x32xf32> to vector<1x16x32xf32>
    %7 = vector.shape_cast %6 : vector<1x16x32xf32> to vector<16x32xf32>
    %cst_6 = arith.constant dense<0.000000e+00> : vector<24x32xf32>
    %8 = tpu.matmul %5, %7, %cst_6 {dimension_numbers = #tpu.dot_dimension_numbers<[1], [0], [0], [1], [0, 0, 1, 1], [], []>} : vector<24x16xf32>, vector<16x32xf32>, vector<24x32xf32> -> vector<24x32xf32>
    %c0_7 = arith.constant 0 : index
    %c0_8 = arith.constant 0 : index
    %c0_9 = arith.constant 0 : index
    %9 = vector.load %arg4[%c0_7, %c0_8, %c0_9] : memref<48x24x32xf32, #tpu.memory_space<vmem>>, vector<1x24x32xf32>
    %10 = vector.shape_cast %9 : vector<1x24x32xf32> to vector<24x32xf32>
    %11 = vector.shape_cast %8 : vector<24x32xf32> to vector<1x24x32xf32>
    tpu.vector_store %arg4[%c0_7, %c0_8, %c0_9], %11 {strides = array<i32>} : memref<48x24x32xf32, #tpu.memory_space<vmem>>, vector<1x24x32xf32>,
    %cst_10 = arith.constant dense<0.000000e+00> : vector<32xf32>
    %12 = vector.multi_reduction <add>, %8, %cst_10 [0] : vector<24x32xf32> to vector<32xf32>
    %13 = vector.shape_cast %12 : vector<32xf32> to vector<1x32xf32>
    %c0_11 = arith.constant 0 : index
    %c0_12 = arith.constant 0 : index
    %14 = vector.load %arg5[%c0_11, %c0_12] : memref<48x32xf32, #tpu.memory_space<vmem>>, vector<1x32xf32>
    tpu.vector_store %arg5[%c0_11, %c0_12], %13 {strides = array<i32>} : memref<48x32xf32, #tpu.memory_space<vmem>>, vector<1x32xf32>,
    %15 = vector.extract_strided_slice %4 {offsets = [1, 0, 0], sizes = [1, 16, 32], strides = [1, 1, 1]} : vector<48x16x32xf32> to vector<1x16x32xf32>
    %16 = vector.shape_cast %15 : vector<1x16x32xf32> to vector<16x32xf32>
    %cst_13 = arith.constant dense<0.000000e+00> : vector<24x32xf32>
    %17 = tpu.matmul %5, %16, %cst_13 {dimension_numbers = #tpu.dot_dimension_numbers<[1], [0], [0], [1], [0, 0, 1, 1], [], []>} : vector<24x16xf32>, vector<16x32xf32>, vector<24x32xf32> -> vector<24x32xf32>
    %c1 = arith.constant 1 : index
    %c0_14 = arith.constant 0 : index
    %c0_15 = arith.constant 0 : index
    %18 = vector.load %arg4[%c1, %c0_14, %c0_15] : memref<48x24x32xf32, #tpu.memory_space<vmem>>, vector<1x24x32xf32>
    %19 = vector.shape_cast %18 : vector<1x24x32xf32> to vector<24x32xf32>
    %20 = vector.shape_cast %17 : vector<24x32xf32> to vector<1x24x32xf32>
    tpu.vector_store %arg4[%c1, %c0_14, %c0_15], %20 {strides = array<i32>} : memref<48x24x32xf32, #tpu.memory_space<vmem>>, vector<1x24x32xf32>,
    %cst_16 = arith.constant dense<0.000000e+00> : vector<32xf32>
    %21 = vector.multi_reduction <add>, %17, %cst_16 [0] : vector<24x32xf32> to vector<32xf32>
    %22 = vector.shape_cast %21 : vector<32xf32> to vector<1x32xf32>
    %c1_17 = arith.constant 1 : index
    %c0_18 = arith.constant 0 : index
    %23 = vector.load %arg5[%c1_17, %c0_18] : memref<48x32xf32, #tpu.memory_space<vmem>>, vector<1x32xf32>
    tpu.vector_store %arg5[%c1_17, %c0_18], %22 {strides = array<i32>} : memref<48x32xf32, #tpu.memory_space<vmem>>, vector<1x32xf32>,
    %24 = vector.extract_strided_slice %4 {offsets = [2, 0, 0], sizes = [1, 16, 32], strides = [1, 1, 1]} : vector<48x16x32xf32> to vector<1x16x32xf32>
    %25 = vector.shape_cast %24 : vector<1x16x32xf32> to vector<16x32xf32>
    %cst_19 = arith.constant dense<0.000000e+00> : vector<24x32xf32>
    %26 = tpu.matmul %5, %25, %cst_19 {dimension_numbers = #tpu.dot_dimension_numbers<[1], [0], [0], [1], [0, 0, 1, 1], [], []>} : vector<24x16xf32>, vector<16x32xf32>, vector<24x32xf32> -> vector<24x32xf32>
    %c2 = arith.constant 2 : index
    %c0_20 = arith.constant 0 : index
    %c0_21 = arith.constant 0 : index
    %27 = vector.load %arg4[%c2, %c0_20, %c0_21] : memref<48x24x32xf32, #tpu.memory_space<vmem>>, vector<1x24x32xf32>
    %28 = vector.shape_cast %27 : vector<1x24x32xf32> to vector<24x32xf32>
    %29 = vector.shape_cast %26 : vector<24x32xf32> to vector<1x24x32xf32>
    tpu.vector_store %arg4[%c2, %c0_20, %c0_21], %29 {strides = array<i32>} : memref<48x24x32xf32, #tpu.memory_space<vmem>>, vector<1x24x32xf32>,
    %cst_22 = arith.constant dense<0.000000e+00> : vector<32xf32>
    %30 = vector.multi_reduction <add>, %26, %cst_22 [0] : vector<24x32xf32> to vector<32xf32>
    %31 = vector.shape_cast %30 : vector<32xf32> to vector<1x32xf32>
    %c2_23 = arith.constant 2 : index
    %c0_24 = arith.constant 0 : index
    %32 = vector.load %arg5[%c2_23, %c0_24] : memref<48x32xf32, #tpu.memory_space<vmem>>, vector<1x32xf32>
    tpu.vector_store %arg5[%c2_23, %c0_24], %31 {strides = array<i32>} : memref<48x32xf32, #tpu.memory_space<vmem>>, vector<1x32xf32>,
    %33 = vector.extract_strided_slice %4 {offsets = [3, 0, 0], sizes = [1, 16, 32], strides = [1, 1, 1]} : vector<48x16x32xf32> to vector<1x16x32xf32>
    %34 = vector.shape_cast %33 : vector<1x16x32xf32> to vector<16x32xf32>
    %cst_25 = arith.constant dense<0.000000e+00> : vector<24x32xf32>
    %35 = tpu.matmul %5, %34, %cst_25 {dimension_numbers = #tpu.dot_dimension_numbers<[1], [0], [0], [1], [0, 0, 1, 1], [], []>} : vector<24x16xf32>, vector<16x32xf32>, vector<24x32xf32> -> vector<24x32xf32>
    %c3 = arith.constant 3 : index
    %c0_26 = arith.constant 0 : index
    %c0_27 = arith.constant 0 : index
    %36 = vector.load %arg4[%c3, %c0_26, %c0_27] : memref<48x24x32xf32, #tpu.memory_space<vmem>>, vector<1x24x32xf32>
    %37 = vector.shape_cast %36 : vector<1x24x32xf32> to vector<24x32xf32>
    %38 = vector.shape_cast %35 : vector<24x32xf32> to vector<1x24x32xf32>
    tpu.vector_store %arg4[%c3, %c0_26, %c0_27], %38 {strides = array<i32>} : memref<48x24x32xf32, #tpu.memory_space<vmem>>, vector<1x24x32xf32>,
    %cst_28 = arith.constant dense<0.000000e+00> : vector<32xf32>
    %39 = vector.multi_reduction <add>, %35, %cst_28 [0] : vector<24x32xf32> to vector<32xf32>
    %40 = vector.shape_cast %39 : vector<32xf32> to vector<1x32xf32>
    %c3_29 = arith.constant 3 : index
    %c0_30 = arith.constant 0 : index
    %41 = vector.load %arg5[%c3_29, %c0_30] : memref<48x32xf32, #tpu.memory_space<vmem>>, vector<1x32xf32>
    tpu.vector_store %arg5[%c3_29, %c0_30], %40 {strides = array<i32>} : memref<48x32xf32, #tpu.memory_space<vmem>>, vector<1x32xf32>,
    %42 = vector.extract_strided_slice %4 {offsets = [4, 0, 0], sizes = [1, 16, 32], strides = [1, 1, 1]} : vector<48x16x32xf32> to vector<1x16x32xf32>
    %43 = vector.shape_cast %42 : vector<1x16x32xf32> to vector<16x32xf32>
    %cst_31 = arith.constant dense<0.000000e+00> : vector<24x32xf32>
    %44 = tpu.matmul %5, %43, %cst_31 {dimension_numbers = #tpu.dot_dimension_numbers<[1], [0], [0], [1], [0, 0, 1, 1], [], []>} : vector<24x16xf32>, vector<16x32xf32>, vector<24x32xf32> -> vector<24x32xf32>
    %c4 = arith.constant 4 : index
    %c0_32 = arith.constant 0 : index
    %c0_33 = arith.constant 0 : index
    %45 = vector.load %arg4[%c4, %c0_32, %c0_33] : memref<48x24x32xf32, #tpu.memory_space<vmem>>, vector<1x24x32xf32>
    %46 = vector.shape_cast %45 : vector<1x24x32xf32> to vector<24x32xf32>
    %47 = vector.shape_cast %44 : vector<24x32xf32> to vector<1x24x32xf32>
    tpu.vector_store %arg4[%c4, %c0_32, %c0_33], %47 {strides = array<i32>} : memref<48x24x32xf32, #tpu.memory_space<vmem>>, vector<1x24x32xf32>,
    %cst_34 = arith.constant dense<0.000000e+00> : vector<32xf32>
    %48 = vector.multi_reduction <add>, %44, %cst_34 [0] : vector<24x32xf32> to vector<32xf32>
    %49 = vector.shape_cast %48 : vector<32xf32> to vector<1x32xf32>
    %c4_35 = arith.constant 4 : index
    %c0_36 = arith.constant 0 : index
    %50 = vector.load %arg5[%c4_35, %c0_36] : memref<48x32xf32, #tpu.memory_space<vmem>>, vector<1x32xf32>
    tpu.vector_store %arg5[%c4_35, %c0_36], %49 {strides = array<i32>} : memref<48x32xf32, #tpu.memory_space<vmem>>, vector<1x32xf32>,
    %51 = vector.extract_strided_slice %4 {offsets = [5, 0, 0], sizes = [1, 16, 32], strides = [1, 1, 1]} : vector<48x16x32xf32> to vector<1x16x32xf32>
    %52 = vector.shape_cast %51 : vector<1x16x32xf32> to vector<16x32xf32>
    %cst_37 = arith.constant dense<0.000000e+00> : vector<24x32xf32>
    %53 = tpu.matmul %5, %52, %cst_37 {dimension_numbers = #tpu.dot_dimension_numbers<[1], [0], [0], [1], [0, 0, 1, 1], [], []>} : vector<24x16xf32>, vector<16x32xf32>, vector<24x32xf32> -> vector<24x32xf32>
    %c5 = arith.constant 5 : index
    %c0_38 = arith.constant 0 : index
    %c0_39 = arith.constant 0 : index
    %54 = vector.load %arg4[%c5, %c0_38, %c0_39] : memref<48x24x32xf32, #tpu.memory_space<vmem>>, vector<1x24x32xf32>
    %55 = vector.shape_cast %54 : vector<1x24x32xf32> to vector<24x32xf32>
    %56 = vector.shape_cast %53 : vector<24x32xf32> to vector<1x24x32xf32>
    tpu.vector_store %arg4[%c5, %c0_38, %c0_39], %56 {strides = array<i32>} : memref<48x24x32xf32, #tpu.memory_space<vmem>>, vector<1x24x32xf32>,
    %cst_40 = arith.constant dense<0.000000e+00> : vector<32xf32>
    %57 = vector.multi_reduction <add>, %53, %cst_40 [0] : vector<24x32xf32> to vector<32xf32>
    %58 = vector.shape_cast %57 : vector<32xf32> to vector<1x32xf32>
    %c5_41 = arith.constant 5 : index
    %c0_42 = arith.constant 0 : index
    %59 = vector.load %arg5[%c5_41, %c0_42] : memref<48x32xf32, #tpu.memory_space<vmem>>, vector<1x32xf32>
    tpu.vector_store %arg5[%c5_41, %c0_42], %58 {strides = array<i32>} : memref<48x32xf32, #tpu.memory_space<vmem>>, vector<1x32xf32>,
    %60 = vector.extract_strided_slice %4 {offsets = [6, 0, 0], sizes = [1, 16, 32], strides = [1, 1, 1]} : vector<48x16x32xf32> to vector<1x16x32xf32>
    %61 = vector.shape_cast %60 : vector<1x16x32xf32> to vector<16x32xf32>
    %cst_43 = arith.constant dense<0.000000e+00> : vector<24x32xf32>
    %62 = tpu.matmul %5, %61, %cst_43 {dimension_numbers = #tpu.dot_dimension_numbers<[1], [0], [0], [1], [0, 0, 1, 1], [], []>} : vector<24x16xf32>, vector<16x32xf32>, vector<24x32xf32> -> vector<24x32xf32>
    %c6 = arith.constant 6 : index
    %c0_44 = arith.constant 0 : index
    %c0_45 = arith.constant 0 : index
    %63 = vector.load %arg4[%c6, %c0_44, %c0_45] : memref<48x24x32xf32, #tpu.memory_space<vmem>>, vector<1x24x32xf32>
    %64 = vector.shape_cast %63 : vector<1x24x32xf32> to vector<24x32xf32>
    %65 = vector.shape_cast %62 : vector<24x32xf32> to vector<1x24x32xf32>
    tpu.vector_store %arg4[%c6, %c0_44, %c0_45], %65 {strides = array<i32>} : memref<48x24x32xf32, #tpu.memory_space<vmem>>, vector<1x24x32xf32>,
    %cst_46 = arith.constant dense<0.000000e+00> : vector<32xf32>
    %66 = vector.multi_reduction <add>, %62, %cst_46 [0] : vector<24x32xf32> to vector<32xf32>
    %67 = vector.shape_cast %66 : vector<32xf32> to vector<1x32xf32>
    %c6_47 = arith.constant 6 : index
    %c0_48 = arith.constant 0 : index
    %68 = vector.load %arg5[%c6_47, %c0_48] : memref<48x32xf32, #tpu.memory_space<vmem>>, vector<1x32xf32>
    tpu.vector_store %arg5[%c6_47, %c0_48], %67 {strides = array<i32>} : memref<48x32xf32, #tpu.memory_space<vmem>>, vector<1x32xf32>,
    %69 = vector.extract_strided_slice %4 {offsets = [7, 0, 0], sizes = [1, 16, 32], strides = [1, 1, 1]} : vector<48x16x32xf32> to vector<1x16x32xf32>
    %70 = vector.shape_cast %69 : vector<1x16x32xf32> to vector<16x32xf32>
    %cst_49 = arith.constant dense<0.000000e+00> : vector<24x32xf32>
    %71 = tpu.matmul %5, %70, %cst_49 {dimension_numbers = #tpu.dot_dimension_numbers<[1], [0], [0], [1], [0, 0, 1, 1], [], []>} : vector<24x16xf32>, vector<16x32xf32>, vector<24x32xf32> -> vector<24x32xf32>
    %c7 = arith.constant 7 : index
    %c0_50 = arith.constant 0 : index
    %c0_51 = arith.constant 0 : index
    %72 = vector.load %arg4[%c7, %c0_50, %c0_51] : memref<48x24x32xf32, #tpu.memory_space<vmem>>, vector<1x24x32xf32>
    %73 = vector.shape_cast %72 : vector<1x24x32xf32> to vector<24x32xf32>
    %74 = vector.shape_cast %71 : vector<24x32xf32> to vector<1x24x32xf32>
    tpu.vector_store %arg4[%c7, %c0_50, %c0_51], %74 {strides = array<i32>} : memref<48x24x32xf32, #tpu.memory_space<vmem>>, vector<1x24x32xf32>,
    %cst_52 = arith.constant dense<0.000000e+00> : vector<32xf32>
    %75 = vector.multi_reduction <add>, %71, %cst_52 [0] : vector<24x32xf32> to vector<32xf32>
    %76 = vector.shape_cast %75 : vector<32xf32> to vector<1x32xf32>
    %c7_53 = arith.constant 7 : index
    %c0_54 = arith.constant 0 : index
    %77 = vector.load %arg5[%c7_53, %c0_54] : memref<48x32xf32, #tpu.memory_space<vmem>>, vector<1x32xf32>
    tpu.vector_store %arg5[%c7_53, %c0_54], %76 {strides = array<i32>} : memref<48x32xf32, #tpu.memory_space<vmem>>, vector<1x32xf32>,
    %78 = vector.extract_strided_slice %4 {offsets = [8, 0, 0], sizes = [1, 16, 32], strides = [1, 1, 1]} : vector<48x16x32xf32> to vector<1x16x32xf32>
    %79 = vector.shape_cast %78 : vector<1x16x32xf32> to vector<16x32xf32>
    %cst_55 = arith.constant dense<0.000000e+00> : vector<24x32xf32>
    %80 = tpu.matmul %5, %79, %cst_55 {dimension_numbers = #tpu.dot_dimension_numbers<[1], [0], [0], [1], [0, 0, 1, 1], [], []>} : vector<24x16xf32>, vector<16x32xf32>, vector<24x32xf32> -> vector<24x32xf32>
    %c8 = arith.constant 8 : index
    %c0_56 = arith.constant 0 : index
    %c0_57 = arith.constant 0 : index
    %81 = vector.load %arg4[%c8, %c0_56, %c0_57] : memref<48x24x32xf32, #tpu.memory_space<vmem>>, vector<1x24x32xf32>
    %82 = vector.shape_cast %81 : vector<1x24x32xf32> to vector<24x32xf32>
    %83 = vector.shape_cast %80 : vector<24x32xf32> to vector<1x24x32xf32>
    tpu.vector_store %arg4[%c8, %c0_56, %c0_57], %83 {strides = array<i32>} : memref<48x24x32xf32, #tpu.memory_space<vmem>>, vector<1x24x32xf32>,
    %cst_58 = arith.constant dense<0.000000e+00> : vector<32xf32>
    %84 = vector.multi_reduction <add>, %80, %cst_58 [0] : vector<24x32xf32> to vector<32xf32>
    %85 = vector.shape_cast %84 : vector<32xf32> to vector<1x32xf32>
    %c8_59 = arith.constant 8 : index
    %c0_60 = arith.constant 0 : index
    %86 = vector.load %arg5[%c8_59, %c0_60] : memref<48x32xf32, #tpu.memory_space<vmem>>, vector<1x32xf32>
    tpu.vector_store %arg5[%c8_59, %c0_60], %85 {strides = array<i32>} : memref<48x32xf32, #tpu.memory_space<vmem>>, vector<1x32xf32>,
    %87 = vector.extract_strided_slice %4 {offsets = [9, 0, 0], sizes = [1, 16, 32], strides = [1, 1, 1]} : vector<48x16x32xf32> to vector<1x16x32xf32>
    %88 = vector.shape_cast %87 : vector<1x16x32xf32> to vector<16x32xf32>
    %cst_61 = arith.constant dense<0.000000e+00> : vector<24x32xf32>
    %89 = tpu.matmul %5, %88, %cst_61 {dimension_numbers = #tpu.dot_dimension_numbers<[1], [0], [0], [1], [0, 0, 1, 1], [], []>} : vector<24x16xf32>, vector<16x32xf32>, vector<24x32xf32> -> vector<24x32xf32>
    %c9 = arith.constant 9 : index
    %c0_62 = arith.constant 0 : index
    %c0_63 = arith.constant 0 : index
    %90 = vector.load %arg4[%c9, %c0_62, %c0_63] : memref<48x24x32xf32, #tpu.memory_space<vmem>>, vector<1x24x32xf32>
    %91 = vector.shape_cast %90 : vector<1x24x32xf32> to vector<24x32xf32>
    %92 = vector.shape_cast %89 : vector<24x32xf32> to vector<1x24x32xf32>
    tpu.vector_store %arg4[%c9, %c0_62, %c0_63], %92 {strides = array<i32>} : memref<48x24x32xf32, #tpu.memory_space<vmem>>, vector<1x24x32xf32>,
    %cst_64 = arith.constant dense<0.000000e+00> : vector<32xf32>
    %93 = vector.multi_reduction <add>, %89, %cst_64 [0] : vector<24x32xf32> to vector<32xf32>
    %94 = vector.shape_cast %93 : vector<32xf32> to vector<1x32xf32>
    %c9_65 = arith.constant 9 : index
    %c0_66 = arith.constant 0 : index
    %95 = vector.load %arg5[%c9_65, %c0_66] : memref<48x32xf32, #tpu.memory_space<vmem>>, vector<1x32xf32>
    tpu.vector_store %arg5[%c9_65, %c0_66], %94 {strides = array<i32>} : memref<48x32xf32, #tpu.memory_space<vmem>>, vector<1x32xf32>,
    %96 = vector.extract_strided_slice %4 {offsets = [10, 0, 0], sizes = [1, 16, 32], strides = [1, 1, 1]} : vector<48x16x32xf32> to vector<1x16x32xf32>
    %97 = vector.shape_cast %96 : vector<1x16x32xf32> to vector<16x32xf32>
    %cst_67 = arith.constant dense<0.000000e+00> : vector<24x32xf32>
    %98 = tpu.matmul %5, %97, %cst_67 {dimension_numbers = #tpu.dot_dimension_numbers<[1], [0], [0], [1], [0, 0, 1, 1], [], []>} : vector<24x16xf32>, vector<16x32xf32>, vector<24x32xf32> -> vector<24x32xf32>
    %c10 = arith.constant 10 : index
    %c0_68 = arith.constant 0 : index
    %c0_69 = arith.constant 0 : index
    %99 = vector.load %arg4[%c10, %c0_68, %c0_69] : memref<48x24x32xf32, #tpu.memory_space<vmem>>, vector<1x24x32xf32>
    %100 = vector.shape_cast %99 : vector<1x24x32xf32> to vector<24x32xf32>
    %101 = vector.shape_cast %98 : vector<24x32xf32> to vector<1x24x32xf32>
    tpu.vector_store %arg4[%c10, %c0_68, %c0_69], %101 {strides = array<i32>} : memref<48x24x32xf32, #tpu.memory_space<vmem>>, vector<1x24x32xf32>,
    %cst_70 = arith.constant dense<0.000000e+00> : vector<32xf32>
    %102 = vector.multi_reduction <add>, %98, %cst_70 [0] : vector<24x32xf32> to vector<32xf32>
    %103 = vector.shape_cast %102 : vector<32xf32> to vector<1x32xf32>
    %c10_71 = arith.constant 10 : index
    %c0_72 = arith.constant 0 : index
    %104 = vector.load %arg5[%c10_71, %c0_72] : memref<48x32xf32, #tpu.memory_space<vmem>>, vector<1x32xf32>
    tpu.vector_store %arg5[%c10_71, %c0_72], %103 {strides = array<i32>} : memref<48x32xf32, #tpu.memory_space<vmem>>, vector<1x32xf32>,
    %105 = vector.extract_strided_slice %4 {offsets = [11, 0, 0], sizes = [1, 16, 32], strides = [1, 1, 1]} : vector<48x16x32xf32> to vector<1x16x32xf32>
    %106 = vector.shape_cast %105 : vector<1x16x32xf32> to vector<16x32xf32>
    %cst_73 = arith.constant dense<0.000000e+00> : vector<24x32xf32>
    %107 = tpu.matmul %5, %106, %cst_73 {dimension_numbers = #tpu.dot_dimension_numbers<[1], [0], [0], [1], [0, 0, 1, 1], [], []>} : vector<24x16xf32>, vector<16x32xf32>, vector<24x32xf32> -> vector<24x32xf32>
    %c11 = arith.constant 11 : index
    %c0_74 = arith.constant 0 : index
    %c0_75 = arith.constant 0 : index
    %108 = vector.load %arg4[%c11, %c0_74, %c0_75] : memref<48x24x32xf32, #tpu.memory_space<vmem>>, vector<1x24x32xf32>
    %109 = vector.shape_cast %108 : vector<1x24x32xf32> to vector<24x32xf32>
    %110 = vector.shape_cast %107 : vector<24x32xf32> to vector<1x24x32xf32>
    tpu.vector_store %arg4[%c11, %c0_74, %c0_75], %110 {strides = array<i32>} : memref<48x24x32xf32, #tpu.memory_space<vmem>>, vector<1x24x32xf32>,
    %cst_76 = arith.constant dense<0.000000e+00> : vector<32xf32>
    %111 = vector.multi_reduction <add>, %107, %cst_76 [0] : vector<24x32xf32> to vector<32xf32>
    %112 = vector.shape_cast %111 : vector<32xf32> to vector<1x32xf32>
    %c11_77 = arith.constant 11 : index
    %c0_78 = arith.constant 0 : index
    %113 = vector.load %arg5[%c11_77, %c0_78] : memref<48x32xf32, #tpu.memory_space<vmem>>, vector<1x32xf32>
    tpu.vector_store %arg5[%c11_77, %c0_78], %112 {strides = array<i32>} : memref<48x32xf32, #tpu.memory_space<vmem>>, vector<1x32xf32>,
    %114 = vector.extract_strided_slice %4 {offsets = [12, 0, 0], sizes = [1, 16, 32], strides = [1, 1, 1]} : vector<48x16x32xf32> to vector<1x16x32xf32>
    %115 = vector.shape_cast %114 : vector<1x16x32xf32> to vector<16x32xf32>
    %cst_79 = arith.constant dense<0.000000e+00> : vector<24x32xf32>
    %116 = tpu.matmul %5, %115, %cst_79 {dimension_numbers = #tpu.dot_dimension_numbers<[1], [0], [0], [1], [0, 0, 1, 1], [], []>} : vector<24x16xf32>, vector<16x32xf32>, vector<24x32xf32> -> vector<24x32xf32>
    %c12 = arith.constant 12 : index
    %c0_80 = arith.constant 0 : index
    %c0_81 = arith.constant 0 : index
    %117 = vector.load %arg4[%c12, %c0_80, %c0_81] : memref<48x24x32xf32, #tpu.memory_space<vmem>>, vector<1x24x32xf32>
    %118 = vector.shape_cast %117 : vector<1x24x32xf32> to vector<24x32xf32>
    %119 = vector.shape_cast %116 : vector<24x32xf32> to vector<1x24x32xf32>
    tpu.vector_store %arg4[%c12, %c0_80, %c0_81], %119 {strides = array<i32>} : memref<48x24x32xf32, #tpu.memory_space<vmem>>, vector<1x24x32xf32>,
    %cst_82 = arith.constant dense<0.000000e+00> : vector<32xf32>
    %120 = vector.multi_reduction <add>, %116, %cst_82 [0] : vector<24x32xf32> to vector<32xf32>
    %121 = vector.shape_cast %120 : vector<32xf32> to vector<1x32xf32>
    %c12_83 = arith.constant 12 : index
    %c0_84 = arith.constant 0 : index
    %122 = vector.load %arg5[%c12_83, %c0_84] : memref<48x32xf32, #tpu.memory_space<vmem>>, vector<1x32xf32>
    tpu.vector_store %arg5[%c12_83, %c0_84], %121 {strides = array<i32>} : memref<48x32xf32, #tpu.memory_space<vmem>>, vector<1x32xf32>,
    %123 = vector.extract_strided_slice %4 {offsets = [13, 0, 0], sizes = [1, 16, 32], strides = [1, 1, 1]} : vector<48x16x32xf32> to vector<1x16x32xf32>
    %124 = vector.shape_cast %123 : vector<1x16x32xf32> to vector<16x32xf32>
    %cst_85 = arith.constant dense<0.000000e+00> : vector<24x32xf32>
    %125 = tpu.matmul %5, %124, %cst_85 {dimension_numbers = #tpu.dot_dimension_numbers<[1], [0], [0], [1], [0, 0, 1, 1], [], []>} : vector<24x16xf32>, vector<16x32xf32>, vector<24x32xf32> -> vector<24x32xf32>
    %c13 = arith.constant 13 : index
    %c0_86 = arith.constant 0 : index
    %c0_87 = arith.constant 0 : index
    %126 = vector.load %arg4[%c13, %c0_86, %c0_87] : memref<48x24x32xf32, #tpu.memory_space<vmem>>, vector<1x24x32xf32>
    %127 = vector.shape_cast %126 : vector<1x24x32xf32> to vector<24x32xf32>
    %128 = vector.shape_cast %125 : vector<24x32xf32> to vector<1x24x32xf32>
    tpu.vector_store %arg4[%c13, %c0_86, %c0_87], %128 {strides = array<i32>} : memref<48x24x32xf32, #tpu.memory_space<vmem>>, vector<1x24x32xf32>,
    %cst_88 = arith.constant dense<0.000000e+00> : vector<32xf32>
    %129 = vector.multi_reduction <add>, %125, %cst_88 [0] : vector<24x32xf32> to vector<32xf32>
    %130 = vector.shape_cast %129 : vector<32xf32> to vector<1x32xf32>
    %c13_89 = arith.constant 13 : index
    %c0_90 = arith.constant 0 : index
    %131 = vector.load %arg5[%c13_89, %c0_90] : memref<48x32xf32, #tpu.memory_space<vmem>>, vector<1x32xf32>
    tpu.vector_store %arg5[%c13_89, %c0_90], %130 {strides = array<i32>} : memref<48x32xf32, #tpu.memory_space<vmem>>, vector<1x32xf32>,
    %132 = vector.extract_strided_slice %4 {offsets = [14, 0, 0], sizes = [1, 16, 32], strides = [1, 1, 1]} : vector<48x16x32xf32> to vector<1x16x32xf32>
    %133 = vector.shape_cast %132 : vector<1x16x32xf32> to vector<16x32xf32>
    %cst_91 = arith.constant dense<0.000000e+00> : vector<24x32xf32>
    %134 = tpu.matmul %5, %133, %cst_91 {dimension_numbers = #tpu.dot_dimension_numbers<[1], [0], [0], [1], [0, 0, 1, 1], [], []>} : vector<24x16xf32>, vector<16x32xf32>, vector<24x32xf32> -> vector<24x32xf32>
    %c14 = arith.constant 14 : index
    %c0_92 = arith.constant 0 : index
    %c0_93 = arith.constant 0 : index
    %135 = vector.load %arg4[%c14, %c0_92, %c0_93] : memref<48x24x32xf32, #tpu.memory_space<vmem>>, vector<1x24x32xf32>
    %136 = vector.shape_cast %135 : vector<1x24x32xf32> to vector<24x32xf32>
    %137 = vector.shape_cast %134 : vector<24x32xf32> to vector<1x24x32xf32>
    tpu.vector_store %arg4[%c14, %c0_92, %c0_93], %137 {strides = array<i32>} : memref<48x24x32xf32, #tpu.memory_space<vmem>>, vector<1x24x32xf32>,
    %cst_94 = arith.constant dense<0.000000e+00> : vector<32xf32>
    %138 = vector.multi_reduction <add>, %134, %cst_94 [0] : vector<24x32xf32> to vector<32xf32>
    %139 = vector.shape_cast %138 : vector<32xf32> to vector<1x32xf32>
    %c14_95 = arith.constant 14 : index
    %c0_96 = arith.constant 0 : index
    %140 = vector.load %arg5[%c14_95, %c0_96] : memref<48x32xf32, #tpu.memory_space<vmem>>, vector<1x32xf32>
    tpu.vector_store %arg5[%c14_95, %c0_96], %139 {strides = array<i32>} : memref<48x32xf32, #tpu.memory_space<vmem>>, vector<1x32xf32>,
    %141 = vector.extract_strided_slice %4 {offsets = [15, 0, 0], sizes = [1, 16, 32], strides = [1, 1, 1]} : vector<48x16x32xf32> to vector<1x16x32xf32>
    %142 = vector.shape_cast %141 : vector<1x16x32xf32> to vector<16x32xf32>
    %cst_97 = arith.constant dense<0.000000e+00> : vector<24x32xf32>
    %143 = tpu.matmul %5, %142, %cst_97 {dimension_numbers = #tpu.dot_dimension_numbers<[1], [0], [0], [1], [0, 0, 1, 1], [], []>} : vector<24x16xf32>, vector<16x32xf32>, vector<24x32xf32> -> vector<24x32xf32>
    %c15 = arith.constant 15 : index
    %c0_98 = arith.constant 0 : index
    %c0_99 = arith.constant 0 : index
    %144 = vector.load %arg4[%c15, %c0_98, %c0_99] : memref<48x24x32xf32, #tpu.memory_space<vmem>>, vector<1x24x32xf32>
    %145 = vector.shape_cast %144 : vector<1x24x32xf32> to vector<24x32xf32>
    %146 = vector.shape_cast %143 : vector<24x32xf32> to vector<1x24x32xf32>
    tpu.vector_store %arg4[%c15, %c0_98, %c0_99], %146 {strides = array<i32>} : memref<48x24x32xf32, #tpu.memory_space<vmem>>, vector<1x24x32xf32>,
    %cst_100 = arith.constant dense<0.000000e+00> : vector<32xf32>
    %147 = vector.multi_reduction <add>, %143, %cst_100 [0] : vector<24x32xf32> to vector<32xf32>
    %148 = vector.shape_cast %147 : vector<32xf32> to vector<1x32xf32>
    %c15_101 = arith.constant 15 : index
    %c0_102 = arith.constant 0 : index
    %149 = vector.load %arg5[%c15_101, %c0_102] : memref<48x32xf32, #tpu.memory_space<vmem>>, vector<1x32xf32>
    tpu.vector_store %arg5[%c15_101, %c0_102], %148 {strides = array<i32>} : memref<48x32xf32, #tpu.memory_space<vmem>>, vector<1x32xf32>,
    %150 = vector.extract_strided_slice %4 {offsets = [16, 0, 0], sizes = [1, 16, 32], strides = [1, 1, 1]} : vector<48x16x32xf32> to vector<1x16x32xf32>
    %151 = vector.shape_cast %150 : vector<1x16x32xf32> to vector<16x32xf32>
    %cst_103 = arith.constant dense<0.000000e+00> : vector<24x32xf32>
    %152 = tpu.matmul %5, %151, %cst_103 {dimension_numbers = #tpu.dot_dimension_numbers<[1], [0], [0], [1], [0, 0, 1, 1], [], []>} : vector<24x16xf32>, vector<16x32xf32>, vector<24x32xf32> -> vector<24x32xf32>
    %c16 = arith.constant 16 : index
    %c0_104 = arith.constant 0 : index
    %c0_105 = arith.constant 0 : index
    %153 = vector.load %arg4[%c16, %c0_104, %c0_105] : memref<48x24x32xf32, #tpu.memory_space<vmem>>, vector<1x24x32xf32>
    %154 = vector.shape_cast %153 : vector<1x24x32xf32> to vector<24x32xf32>
    %155 = vector.shape_cast %152 : vector<24x32xf32> to vector<1x24x32xf32>
    tpu.vector_store %arg4[%c16, %c0_104, %c0_105], %155 {strides = array<i32>} : memref<48x24x32xf32, #tpu.memory_space<vmem>>, vector<1x24x32xf32>,
    %cst_106 = arith.constant dense<0.000000e+00> : vector<32xf32>
    %156 = vector.multi_reduction <add>, %152, %cst_106 [0] : vector<24x32xf32> to vector<32xf32>
    %157 = vector.shape_cast %156 : vector<32xf32> to vector<1x32xf32>
    %c16_107 = arith.constant 16 : index
    %c0_108 = arith.constant 0 : index
    %158 = vector.load %arg5[%c16_107, %c0_108] : memref<48x32xf32, #tpu.memory_space<vmem>>, vector<1x32xf32>
    tpu.vector_store %arg5[%c16_107, %c0_108], %157 {strides = array<i32>} : memref<48x32xf32, #tpu.memory_space<vmem>>, vector<1x32xf32>,
    %159 = vector.extract_strided_slice %4 {offsets = [17, 0, 0], sizes = [1, 16, 32], strides = [1, 1, 1]} : vector<48x16x32xf32> to vector<1x16x32xf32>
    %160 = vector.shape_cast %159 : vector<1x16x32xf32> to vector<16x32xf32>
    %cst_109 = arith.constant dense<0.000000e+00> : vector<24x32xf32>
    %161 = tpu.matmul %5, %160, %cst_109 {dimension_numbers = #tpu.dot_dimension_numbers<[1], [0], [0], [1], [0, 0, 1, 1], [], []>} : vector<24x16xf32>, vector<16x32xf32>, vector<24x32xf32> -> vector<24x32xf32>
    %c17 = arith.constant 17 : index
    %c0_110 = arith.constant 0 : index
    %c0_111 = arith.constant 0 : index
    %162 = vector.load %arg4[%c17, %c0_110, %c0_111] : memref<48x24x32xf32, #tpu.memory_space<vmem>>, vector<1x24x32xf32>
    %163 = vector.shape_cast %162 : vector<1x24x32xf32> to vector<24x32xf32>
    %164 = vector.shape_cast %161 : vector<24x32xf32> to vector<1x24x32xf32>
    tpu.vector_store %arg4[%c17, %c0_110, %c0_111], %164 {strides = array<i32>} : memref<48x24x32xf32, #tpu.memory_space<vmem>>, vector<1x24x32xf32>,
    %cst_112 = arith.constant dense<0.000000e+00> : vector<32xf32>
    %165 = vector.multi_reduction <add>, %161, %cst_112 [0] : vector<24x32xf32> to vector<32xf32>
    %166 = vector.shape_cast %165 : vector<32xf32> to vector<1x32xf32>
    %c17_113 = arith.constant 17 : index
    %c0_114 = arith.constant 0 : index
    %167 = vector.load %arg5[%c17_113, %c0_114] : memref<48x32xf32, #tpu.memory_space<vmem>>, vector<1x32xf32>
    tpu.vector_store %arg5[%c17_113, %c0_114], %166 {strides = array<i32>} : memref<48x32xf32, #tpu.memory_space<vmem>>, vector<1x32xf32>,
    %168 = vector.extract_strided_slice %4 {offsets = [18, 0, 0], sizes = [1, 16, 32], strides = [1, 1, 1]} : vector<48x16x32xf32> to vector<1x16x32xf32>
    %169 = vector.shape_cast %168 : vector<1x16x32xf32> to vector<16x32xf32>
    %cst_115 = arith.constant dense<0.000000e+00> : vector<24x32xf32>
    %170 = tpu.matmul %5, %169, %cst_115 {dimension_numbers = #tpu.dot_dimension_numbers<[1], [0], [0], [1], [0, 0, 1, 1], [], []>} : vector<24x16xf32>, vector<16x32xf32>, vector<24x32xf32> -> vector<24x32xf32>
    %c18 = arith.constant 18 : index
    %c0_116 = arith.constant 0 : index
    %c0_117 = arith.constant 0 : index
    %171 = vector.load %arg4[%c18, %c0_116, %c0_117] : memref<48x24x32xf32, #tpu.memory_space<vmem>>, vector<1x24x32xf32>
    %172 = vector.shape_cast %171 : vector<1x24x32xf32> to vector<24x32xf32>
    %173 = vector.shape_cast %170 : vector<24x32xf32> to vector<1x24x32xf32>
    tpu.vector_store %arg4[%c18, %c0_116, %c0_117], %173 {strides = array<i32>} : memref<48x24x32xf32, #tpu.memory_space<vmem>>, vector<1x24x32xf32>,
    %cst_118 = arith.constant dense<0.000000e+00> : vector<32xf32>
    %174 = vector.multi_reduction <add>, %170, %cst_118 [0] : vector<24x32xf32> to vector<32xf32>
    %175 = vector.shape_cast %174 : vector<32xf32> to vector<1x32xf32>
    %c18_119 = arith.constant 18 : index
    %c0_120 = arith.constant 0 : index
    %176 = vector.load %arg5[%c18_119, %c0_120] : memref<48x32xf32, #tpu.memory_space<vmem>>, vector<1x32xf32>
    tpu.vector_store %arg5[%c18_119, %c0_120], %175 {strides = array<i32>} : memref<48x32xf32, #tpu.memory_space<vmem>>, vector<1x32xf32>,
    %177 = vector.extract_strided_slice %4 {offsets = [19, 0, 0], sizes = [1, 16, 32], strides = [1, 1, 1]} : vector<48x16x32xf32> to vector<1x16x32xf32>
    %178 = vector.shape_cast %177 : vector<1x16x32xf32> to vector<16x32xf32>
    %cst_121 = arith.constant dense<0.000000e+00> : vector<24x32xf32>
    %179 = tpu.matmul %5, %178, %cst_121 {dimension_numbers = #tpu.dot_dimension_numbers<[1], [0], [0], [1], [0, 0, 1, 1], [], []>} : vector<24x16xf32>, vector<16x32xf32>, vector<24x32xf32> -> vector<24x32xf32>
    %c19 = arith.constant 19 : index
    %c0_122 = arith.constant 0 : index
    %c0_123 = arith.constant 0 : index
    %180 = vector.load %arg4[%c19, %c0_122, %c0_123] : memref<48x24x32xf32, #tpu.memory_space<vmem>>, vector<1x24x32xf32>
    %181 = vector.shape_cast %180 : vector<1x24x32xf32> to vector<24x32xf32>
    %182 = vector.shape_cast %179 : vector<24x32xf32> to vector<1x24x32xf32>
    tpu.vector_store %arg4[%c19, %c0_122, %c0_123], %182 {strides = array<i32>} : memref<48x24x32xf32, #tpu.memory_space<vmem>>, vector<1x24x32xf32>,
    %cst_124 = arith.constant dense<0.000000e+00> : vector<32xf32>
    %183 = vector.multi_reduction <add>, %179, %cst_124 [0] : vector<24x32xf32> to vector<32xf32>
    %184 = vector.shape_cast %183 : vector<32xf32> to vector<1x32xf32>
    %c19_125 = arith.constant 19 : index
    %c0_126 = arith.constant 0 : index
    %185 = vector.load %arg5[%c19_125, %c0_126] : memref<48x32xf32, #tpu.memory_space<vmem>>, vector<1x32xf32>
    tpu.vector_store %arg5[%c19_125, %c0_126], %184 {strides = array<i32>} : memref<48x32xf32, #tpu.memory_space<vmem>>, vector<1x32xf32>,
    %186 = vector.extract_strided_slice %4 {offsets = [20, 0, 0], sizes = [1, 16, 32], strides = [1, 1, 1]} : vector<48x16x32xf32> to vector<1x16x32xf32>
    %187 = vector.shape_cast %186 : vector<1x16x32xf32> to vector<16x32xf32>
    %cst_127 = arith.constant dense<0.000000e+00> : vector<24x32xf32>
    %188 = tpu.matmul %5, %187, %cst_127 {dimension_numbers = #tpu.dot_dimension_numbers<[1], [0], [0], [1], [0, 0, 1, 1], [], []>} : vector<24x16xf32>, vector<16x32xf32>, vector<24x32xf32> -> vector<24x32xf32>
    %c20 = arith.constant 20 : index
    %c0_128 = arith.constant 0 : index
    %c0_129 = arith.constant 0 : index
    %189 = vector.load %arg4[%c20, %c0_128, %c0_129] : memref<48x24x32xf32, #tpu.memory_space<vmem>>, vector<1x24x32xf32>
    %190 = vector.shape_cast %189 : vector<1x24x32xf32> to vector<24x32xf32>
    %191 = vector.shape_cast %188 : vector<24x32xf32> to vector<1x24x32xf32>
    tpu.vector_store %arg4[%c20, %c0_128, %c0_129], %191 {strides = array<i32>} : memref<48x24x32xf32, #tpu.memory_space<vmem>>, vector<1x24x32xf32>,
    %cst_130 = arith.constant dense<0.000000e+00> : vector<32xf32>
    %192 = vector.multi_reduction <add>, %188, %cst_130 [0] : vector<24x32xf32> to vector<32xf32>
    %193 = vector.shape_cast %192 : vector<32xf32> to vector<1x32xf32>
    %c20_131 = arith.constant 20 : index
    %c0_132 = arith.constant 0 : index
    %194 = vector.load %arg5[%c20_131, %c0_132] : memref<48x32xf32, #tpu.memory_space<vmem>>, vector<1x32xf32>
    tpu.vector_store %arg5[%c20_131, %c0_132], %193 {strides = array<i32>} : memref<48x32xf32, #tpu.memory_space<vmem>>, vector<1x32xf32>,
    %195 = vector.extract_strided_slice %4 {offsets = [21, 0, 0], sizes = [1, 16, 32], strides = [1, 1, 1]} : vector<48x16x32xf32> to vector<1x16x32xf32>
    %196 = vector.shape_cast %195 : vector<1x16x32xf32> to vector<16x32xf32>
    %cst_133 = arith.constant dense<0.000000e+00> : vector<24x32xf32>
    %197 = tpu.matmul %5, %196, %cst_133 {dimension_numbers = #tpu.dot_dimension_numbers<[1], [0], [0], [1], [0, 0, 1, 1], [], []>} : vector<24x16xf32>, vector<16x32xf32>, vector<24x32xf32> -> vector<24x32xf32>
    %c21 = arith.constant 21 : index
    %c0_134 = arith.constant 0 : index
    %c0_135 = arith.constant 0 : index
    %198 = vector.load %arg4[%c21, %c0_134, %c0_135] : memref<48x24x32xf32, #tpu.memory_space<vmem>>, vector<1x24x32xf32>
    %199 = vector.shape_cast %198 : vector<1x24x32xf32> to vector<24x32xf32>
    %200 = vector.shape_cast %197 : vector<24x32xf32> to vector<1x24x32xf32>
    tpu.vector_store %arg4[%c21, %c0_134, %c0_135], %200 {strides = array<i32>} : memref<48x24x32xf32, #tpu.memory_space<vmem>>, vector<1x24x32xf32>,
    %cst_136 = arith.constant dense<0.000000e+00> : vector<32xf32>
    %201 = vector.multi_reduction <add>, %197, %cst_136 [0] : vector<24x32xf32> to vector<32xf32>
    %202 = vector.shape_cast %201 : vector<32xf32> to vector<1x32xf32>
    %c21_137 = arith.constant 21 : index
    %c0_138 = arith.constant 0 : index
    %203 = vector.load %arg5[%c21_137, %c0_138] : memref<48x32xf32, #tpu.memory_space<vmem>>, vector<1x32xf32>
    tpu.vector_store %arg5[%c21_137, %c0_138], %202 {strides = array<i32>} : memref<48x32xf32, #tpu.memory_space<vmem>>, vector<1x32xf32>,
    %204 = vector.extract_strided_slice %4 {offsets = [22, 0, 0], sizes = [1, 16, 32], strides = [1, 1, 1]} : vector<48x16x32xf32> to vector<1x16x32xf32>
    %205 = vector.shape_cast %204 : vector<1x16x32xf32> to vector<16x32xf32>
    %cst_139 = arith.constant dense<0.000000e+00> : vector<24x32xf32>
    %206 = tpu.matmul %5, %205, %cst_139 {dimension_numbers = #tpu.dot_dimension_numbers<[1], [0], [0], [1], [0, 0, 1, 1], [], []>} : vector<24x16xf32>, vector<16x32xf32>, vector<24x32xf32> -> vector<24x32xf32>
    %c22 = arith.constant 22 : index
    %c0_140 = arith.constant 0 : index
    %c0_141 = arith.constant 0 : index
    %207 = vector.load %arg4[%c22, %c0_140, %c0_141] : memref<48x24x32xf32, #tpu.memory_space<vmem>>, vector<1x24x32xf32>
    %208 = vector.shape_cast %207 : vector<1x24x32xf32> to vector<24x32xf32>
    %209 = vector.shape_cast %206 : vector<24x32xf32> to vector<1x24x32xf32>
    tpu.vector_store %arg4[%c22, %c0_140, %c0_141], %209 {strides = array<i32>} : memref<48x24x32xf32, #tpu.memory_space<vmem>>, vector<1x24x32xf32>,
    %cst_142 = arith.constant dense<0.000000e+00> : vector<32xf32>
    %210 = vector.multi_reduction <add>, %206, %cst_142 [0] : vector<24x32xf32> to vector<32xf32>
    %211 = vector.shape_cast %210 : vector<32xf32> to vector<1x32xf32>
    %c22_143 = arith.constant 22 : index
    %c0_144 = arith.constant 0 : index
    %212 = vector.load %arg5[%c22_143, %c0_144] : memref<48x32xf32, #tpu.memory_space<vmem>>, vector<1x32xf32>
    tpu.vector_store %arg5[%c22_143, %c0_144], %211 {strides = array<i32>} : memref<48x32xf32, #tpu.memory_space<vmem>>, vector<1x32xf32>,
    %213 = vector.extract_strided_slice %4 {offsets = [23, 0, 0], sizes = [1, 16, 32], strides = [1, 1, 1]} : vector<48x16x32xf32> to vector<1x16x32xf32>
    %214 = vector.shape_cast %213 : vector<1x16x32xf32> to vector<16x32xf32>
    %cst_145 = arith.constant dense<0.000000e+00> : vector<24x32xf32>
    %215 = tpu.matmul %5, %214, %cst_145 {dimension_numbers = #tpu.dot_dimension_numbers<[1], [0], [0], [1], [0, 0, 1, 1], [], []>} : vector<24x16xf32>, vector<16x32xf32>, vector<24x32xf32> -> vector<24x32xf32>
    %c23 = arith.constant 23 : index
    %c0_146 = arith.constant 0 : index
    %c0_147 = arith.constant 0 : index
    %216 = vector.load %arg4[%c23, %c0_146, %c0_147] : memref<48x24x32xf32, #tpu.memory_space<vmem>>, vector<1x24x32xf32>
    %217 = vector.shape_cast %216 : vector<1x24x32xf32> to vector<24x32xf32>
    %218 = vector.shape_cast %215 : vector<24x32xf32> to vector<1x24x32xf32>
    tpu.vector_store %arg4[%c23, %c0_146, %c0_147], %218 {strides = array<i32>} : memref<48x24x32xf32, #tpu.memory_space<vmem>>, vector<1x24x32xf32>,
    %cst_148 = arith.constant dense<0.000000e+00> : vector<32xf32>
    %219 = vector.multi_reduction <add>, %215, %cst_148 [0] : vector<24x32xf32> to vector<32xf32>
    %220 = vector.shape_cast %219 : vector<32xf32> to vector<1x32xf32>
    %c23_149 = arith.constant 23 : index
    %c0_150 = arith.constant 0 : index
    %221 = vector.load %arg5[%c23_149, %c0_150] : memref<48x32xf32, #tpu.memory_space<vmem>>, vector<1x32xf32>
    tpu.vector_store %arg5[%c23_149, %c0_150], %220 {strides = array<i32>} : memref<48x32xf32, #tpu.memory_space<vmem>>, vector<1x32xf32>,
    %222 = vector.extract_strided_slice %4 {offsets = [24, 0, 0], sizes = [1, 16, 32], strides = [1, 1, 1]} : vector<48x16x32xf32> to vector<1x16x32xf32>
    %223 = vector.shape_cast %222 : vector<1x16x32xf32> to vector<16x32xf32>
    %cst_151 = arith.constant dense<0.000000e+00> : vector<24x32xf32>
    %224 = tpu.matmul %5, %223, %cst_151 {dimension_numbers = #tpu.dot_dimension_numbers<[1], [0], [0], [1], [0, 0, 1, 1], [], []>} : vector<24x16xf32>, vector<16x32xf32>, vector<24x32xf32> -> vector<24x32xf32>
    %c24 = arith.constant 24 : index
    %c0_152 = arith.constant 0 : index
    %c0_153 = arith.constant 0 : index
    %225 = vector.load %arg4[%c24, %c0_152, %c0_153] : memref<48x24x32xf32, #tpu.memory_space<vmem>>, vector<1x24x32xf32>
    %226 = vector.shape_cast %225 : vector<1x24x32xf32> to vector<24x32xf32>
    %227 = vector.shape_cast %224 : vector<24x32xf32> to vector<1x24x32xf32>
    tpu.vector_store %arg4[%c24, %c0_152, %c0_153], %227 {strides = array<i32>} : memref<48x24x32xf32, #tpu.memory_space<vmem>>, vector<1x24x32xf32>,
    %cst_154 = arith.constant dense<0.000000e+00> : vector<32xf32>
    %228 = vector.multi_reduction <add>, %224, %cst_154 [0] : vector<24x32xf32> to vector<32xf32>
    %229 = vector.shape_cast %228 : vector<32xf32> to vector<1x32xf32>
    %c24_155 = arith.constant 24 : index
    %c0_156 = arith.constant 0 : index
    %230 = vector.load %arg5[%c24_155, %c0_156] : memref<48x32xf32, #tpu.memory_space<vmem>>, vector<1x32xf32>
    tpu.vector_store %arg5[%c24_155, %c0_156], %229 {strides = array<i32>} : memref<48x32xf32, #tpu.memory_space<vmem>>, vector<1x32xf32>,
    %231 = vector.extract_strided_slice %4 {offsets = [25, 0, 0], sizes = [1, 16, 32], strides = [1, 1, 1]} : vector<48x16x32xf32> to vector<1x16x32xf32>
    %232 = vector.shape_cast %231 : vector<1x16x32xf32> to vector<16x32xf32>
    %cst_157 = arith.constant dense<0.000000e+00> : vector<24x32xf32>
    %233 = tpu.matmul %5, %232, %cst_157 {dimension_numbers = #tpu.dot_dimension_numbers<[1], [0], [0], [1], [0, 0, 1, 1], [], []>} : vector<24x16xf32>, vector<16x32xf32>, vector<24x32xf32> -> vector<24x32xf32>
    %c25 = arith.constant 25 : index
    %c0_158 = arith.constant 0 : index
    %c0_159 = arith.constant 0 : index
    %234 = vector.load %arg4[%c25, %c0_158, %c0_159] : memref<48x24x32xf32, #tpu.memory_space<vmem>>, vector<1x24x32xf32>
    %235 = vector.shape_cast %234 : vector<1x24x32xf32> to vector<24x32xf32>
    %236 = vector.shape_cast %233 : vector<24x32xf32> to vector<1x24x32xf32>
    tpu.vector_store %arg4[%c25, %c0_158, %c0_159], %236 {strides = array<i32>} : memref<48x24x32xf32, #tpu.memory_space<vmem>>, vector<1x24x32xf32>,
    %cst_160 = arith.constant dense<0.000000e+00> : vector<32xf32>
    %237 = vector.multi_reduction <add>, %233, %cst_160 [0] : vector<24x32xf32> to vector<32xf32>
    %238 = vector.shape_cast %237 : vector<32xf32> to vector<1x32xf32>
    %c25_161 = arith.constant 25 : index
    %c0_162 = arith.constant 0 : index
    %239 = vector.load %arg5[%c25_161, %c0_162] : memref<48x32xf32, #tpu.memory_space<vmem>>, vector<1x32xf32>
    tpu.vector_store %arg5[%c25_161, %c0_162], %238 {strides = array<i32>} : memref<48x32xf32, #tpu.memory_space<vmem>>, vector<1x32xf32>,
    %240 = vector.extract_strided_slice %4 {offsets = [26, 0, 0], sizes = [1, 16, 32], strides = [1, 1, 1]} : vector<48x16x32xf32> to vector<1x16x32xf32>
    %241 = vector.shape_cast %240 : vector<1x16x32xf32> to vector<16x32xf32>
    %cst_163 = arith.constant dense<0.000000e+00> : vector<24x32xf32>
    %242 = tpu.matmul %5, %241, %cst_163 {dimension_numbers = #tpu.dot_dimension_numbers<[1], [0], [0], [1], [0, 0, 1, 1], [], []>} : vector<24x16xf32>, vector<16x32xf32>, vector<24x32xf32> -> vector<24x32xf32>
    %c26 = arith.constant 26 : index
    %c0_164 = arith.constant 0 : index
    %c0_165 = arith.constant 0 : index
    %243 = vector.load %arg4[%c26, %c0_164, %c0_165] : memref<48x24x32xf32, #tpu.memory_space<vmem>>, vector<1x24x32xf32>
    %244 = vector.shape_cast %243 : vector<1x24x32xf32> to vector<24x32xf32>
    %245 = vector.shape_cast %242 : vector<24x32xf32> to vector<1x24x32xf32>
    tpu.vector_store %arg4[%c26, %c0_164, %c0_165], %245 {strides = array<i32>} : memref<48x24x32xf32, #tpu.memory_space<vmem>>, vector<1x24x32xf32>,
    %cst_166 = arith.constant dense<0.000000e+00> : vector<32xf32>
    %246 = vector.multi_reduction <add>, %242, %cst_166 [0] : vector<24x32xf32> to vector<32xf32>
    %247 = vector.shape_cast %246 : vector<32xf32> to vector<1x32xf32>
    %c26_167 = arith.constant 26 : index
    %c0_168 = arith.constant 0 : index
    %248 = vector.load %arg5[%c26_167, %c0_168] : memref<48x32xf32, #tpu.memory_space<vmem>>, vector<1x32xf32>
    tpu.vector_store %arg5[%c26_167, %c0_168], %247 {strides = array<i32>} : memref<48x32xf32, #tpu.memory_space<vmem>>, vector<1x32xf32>,
    %249 = vector.extract_strided_slice %4 {offsets = [27, 0, 0], sizes = [1, 16, 32], strides = [1, 1, 1]} : vector<48x16x32xf32> to vector<1x16x32xf32>
    %250 = vector.shape_cast %249 : vector<1x16x32xf32> to vector<16x32xf32>
    %cst_169 = arith.constant dense<0.000000e+00> : vector<24x32xf32>
    %251 = tpu.matmul %5, %250, %cst_169 {dimension_numbers = #tpu.dot_dimension_numbers<[1], [0], [0], [1], [0, 0, 1, 1], [], []>} : vector<24x16xf32>, vector<16x32xf32>, vector<24x32xf32> -> vector<24x32xf32>
    %c27 = arith.constant 27 : index
    %c0_170 = arith.constant 0 : index
    %c0_171 = arith.constant 0 : index
    %252 = vector.load %arg4[%c27, %c0_170, %c0_171] : memref<48x24x32xf32, #tpu.memory_space<vmem>>, vector<1x24x32xf32>
    %253 = vector.shape_cast %252 : vector<1x24x32xf32> to vector<24x32xf32>
    %254 = vector.shape_cast %251 : vector<24x32xf32> to vector<1x24x32xf32>
    tpu.vector_store %arg4[%c27, %c0_170, %c0_171], %254 {strides = array<i32>} : memref<48x24x32xf32, #tpu.memory_space<vmem>>, vector<1x24x32xf32>,
    %cst_172 = arith.constant dense<0.000000e+00> : vector<32xf32>
    %255 = vector.multi_reduction <add>, %251, %cst_172 [0] : vector<24x32xf32> to vector<32xf32>
    %256 = vector.shape_cast %255 : vector<32xf32> to vector<1x32xf32>
    %c27_173 = arith.constant 27 : index
    %c0_174 = arith.constant 0 : index
    %257 = vector.load %arg5[%c27_173, %c0_174] : memref<48x32xf32, #tpu.memory_space<vmem>>, vector<1x32xf32>
    tpu.vector_store %arg5[%c27_173, %c0_174], %256 {strides = array<i32>} : memref<48x32xf32, #tpu.memory_space<vmem>>, vector<1x32xf32>,
    %258 = vector.extract_strided_slice %4 {offsets = [28, 0, 0], sizes = [1, 16, 32], strides = [1, 1, 1]} : vector<48x16x32xf32> to vector<1x16x32xf32>
    %259 = vector.shape_cast %258 : vector<1x16x32xf32> to vector<16x32xf32>
    %cst_175 = arith.constant dense<0.000000e+00> : vector<24x32xf32>
    %260 = tpu.matmul %5, %259, %cst_175 {dimension_numbers = #tpu.dot_dimension_numbers<[1], [0], [0], [1], [0, 0, 1, 1], [], []>} : vector<24x16xf32>, vector<16x32xf32>, vector<24x32xf32> -> vector<24x32xf32>
    %c28 = arith.constant 28 : index
    %c0_176 = arith.constant 0 : index
    %c0_177 = arith.constant 0 : index
    %261 = vector.load %arg4[%c28, %c0_176, %c0_177] : memref<48x24x32xf32, #tpu.memory_space<vmem>>, vector<1x24x32xf32>
    %262 = vector.shape_cast %261 : vector<1x24x32xf32> to vector<24x32xf32>
    %263 = vector.shape_cast %260 : vector<24x32xf32> to vector<1x24x32xf32>
    tpu.vector_store %arg4[%c28, %c0_176, %c0_177], %263 {strides = array<i32>} : memref<48x24x32xf32, #tpu.memory_space<vmem>>, vector<1x24x32xf32>,
    %cst_178 = arith.constant dense<0.000000e+00> : vector<32xf32>
    %264 = vector.multi_reduction <add>, %260, %cst_178 [0] : vector<24x32xf32> to vector<32xf32>
    %265 = vector.shape_cast %264 : vector<32xf32> to vector<1x32xf32>
    %c28_179 = arith.constant 28 : index
    %c0_180 = arith.constant 0 : index
    %266 = vector.load %arg5[%c28_179, %c0_180] : memref<48x32xf32, #tpu.memory_space<vmem>>, vector<1x32xf32>
    tpu.vector_store %arg5[%c28_179, %c0_180], %265 {strides = array<i32>} : memref<48x32xf32, #tpu.memory_space<vmem>>, vector<1x32xf32>,
    %267 = vector.extract_strided_slice %4 {offsets = [29, 0, 0], sizes = [1, 16, 32], strides = [1, 1, 1]} : vector<48x16x32xf32> to vector<1x16x32xf32>
    %268 = vector.shape_cast %267 : vector<1x16x32xf32> to vector<16x32xf32>
    %cst_181 = arith.constant dense<0.000000e+00> : vector<24x32xf32>
    %269 = tpu.matmul %5, %268, %cst_181 {dimension_numbers = #tpu.dot_dimension_numbers<[1], [0], [0], [1], [0, 0, 1, 1], [], []>} : vector<24x16xf32>, vector<16x32xf32>, vector<24x32xf32> -> vector<24x32xf32>
    %c29 = arith.constant 29 : index
    %c0_182 = arith.constant 0 : index
    %c0_183 = arith.constant 0 : index
    %270 = vector.load %arg4[%c29, %c0_182, %c0_183] : memref<48x24x32xf32, #tpu.memory_space<vmem>>, vector<1x24x32xf32>
    %271 = vector.shape_cast %270 : vector<1x24x32xf32> to vector<24x32xf32>
    %272 = vector.shape_cast %269 : vector<24x32xf32> to vector<1x24x32xf32>
    tpu.vector_store %arg4[%c29, %c0_182, %c0_183], %272 {strides = array<i32>} : memref<48x24x32xf32, #tpu.memory_space<vmem>>, vector<1x24x32xf32>,
    %cst_184 = arith.constant dense<0.000000e+00> : vector<32xf32>
    %273 = vector.multi_reduction <add>, %269, %cst_184 [0] : vector<24x32xf32> to vector<32xf32>
    %274 = vector.shape_cast %273 : vector<32xf32> to vector<1x32xf32>
    %c29_185 = arith.constant 29 : index
    %c0_186 = arith.constant 0 : index
    %275 = vector.load %arg5[%c29_185, %c0_186] : memref<48x32xf32, #tpu.memory_space<vmem>>, vector<1x32xf32>
    tpu.vector_store %arg5[%c29_185, %c0_186], %274 {strides = array<i32>} : memref<48x32xf32, #tpu.memory_space<vmem>>, vector<1x32xf32>,
    %276 = vector.extract_strided_slice %4 {offsets = [30, 0, 0], sizes = [1, 16, 32], strides = [1, 1, 1]} : vector<48x16x32xf32> to vector<1x16x32xf32>
    %277 = vector.shape_cast %276 : vector<1x16x32xf32> to vector<16x32xf32>
    %cst_187 = arith.constant dense<0.000000e+00> : vector<24x32xf32>
    %278 = tpu.matmul %5, %277, %cst_187 {dimension_numbers = #tpu.dot_dimension_numbers<[1], [0], [0], [1], [0, 0, 1, 1], [], []>} : vector<24x16xf32>, vector<16x32xf32>, vector<24x32xf32> -> vector<24x32xf32>
    %c30 = arith.constant 30 : index
    %c0_188 = arith.constant 0 : index
    %c0_189 = arith.constant 0 : index
    %279 = vector.load %arg4[%c30, %c0_188, %c0_189] : memref<48x24x32xf32, #tpu.memory_space<vmem>>, vector<1x24x32xf32>
    %280 = vector.shape_cast %279 : vector<1x24x32xf32> to vector<24x32xf32>
    %281 = vector.shape_cast %278 : vector<24x32xf32> to vector<1x24x32xf32>
    tpu.vector_store %arg4[%c30, %c0_188, %c0_189], %281 {strides = array<i32>} : memref<48x24x32xf32, #tpu.memory_space<vmem>>, vector<1x24x32xf32>,
    %cst_190 = arith.constant dense<0.000000e+00> : vector<32xf32>
    %282 = vector.multi_reduction <add>, %278, %cst_190 [0] : vector<24x32xf32> to vector<32xf32>
    %283 = vector.shape_cast %282 : vector<32xf32> to vector<1x32xf32>
    %c30_191 = arith.constant 30 : index
    %c0_192 = arith.constant 0 : index
    %284 = vector.load %arg5[%c30_191, %c0_192] : memref<48x32xf32, #tpu.memory_space<vmem>>, vector<1x32xf32>
    tpu.vector_store %arg5[%c30_191, %c0_192], %283 {strides = array<i32>} : memref<48x32xf32, #tpu.memory_space<vmem>>, vector<1x32xf32>,
    %285 = vector.extract_strided_slice %4 {offsets = [31, 0, 0], sizes = [1, 16, 32], strides = [1, 1, 1]} : vector<48x16x32xf32> to vector<1x16x32xf32>
    %286 = vector.shape_cast %285 : vector<1x16x32xf32> to vector<16x32xf32>
    %cst_193 = arith.constant dense<0.000000e+00> : vector<24x32xf32>
    %287 = tpu.matmul %5, %286, %cst_193 {dimension_numbers = #tpu.dot_dimension_numbers<[1], [0], [0], [1], [0, 0, 1, 1], [], []>} : vector<24x16xf32>, vector<16x32xf32>, vector<24x32xf32> -> vector<24x32xf32>
    %c31 = arith.constant 31 : index
    %c0_194 = arith.constant 0 : index
    %c0_195 = arith.constant 0 : index
    %288 = vector.load %arg4[%c31, %c0_194, %c0_195] : memref<48x24x32xf32, #tpu.memory_space<vmem>>, vector<1x24x32xf32>
    %289 = vector.shape_cast %288 : vector<1x24x32xf32> to vector<24x32xf32>
    %290 = vector.shape_cast %287 : vector<24x32xf32> to vector<1x24x32xf32>
    tpu.vector_store %arg4[%c31, %c0_194, %c0_195], %290 {strides = array<i32>} : memref<48x24x32xf32, #tpu.memory_space<vmem>>, vector<1x24x32xf32>,
    %cst_196 = arith.constant dense<0.000000e+00> : vector<32xf32>
    %291 = vector.multi_reduction <add>, %287, %cst_196 [0] : vector<24x32xf32> to vector<32xf32>
    %292 = vector.shape_cast %291 : vector<32xf32> to vector<1x32xf32>
    %c31_197 = arith.constant 31 : index
    %c0_198 = arith.constant 0 : index
    %293 = vector.load %arg5[%c31_197, %c0_198] : memref<48x32xf32, #tpu.memory_space<vmem>>, vector<1x32xf32>
    tpu.vector_store %arg5[%c31_197, %c0_198], %292 {strides = array<i32>} : memref<48x32xf32, #tpu.memory_space<vmem>>, vector<1x32xf32>,
    %294 = vector.extract_strided_slice %4 {offsets = [32, 0, 0], sizes = [1, 16, 32], strides = [1, 1, 1]} : vector<48x16x32xf32> to vector<1x16x32xf32>
    %295 = vector.shape_cast %294 : vector<1x16x32xf32> to vector<16x32xf32>
    %cst_199 = arith.constant dense<0.000000e+00> : vector<24x32xf32>
    %296 = tpu.matmul %5, %295, %cst_199 {dimension_numbers = #tpu.dot_dimension_numbers<[1], [0], [0], [1], [0, 0, 1, 1], [], []>} : vector<24x16xf32>, vector<16x32xf32>, vector<24x32xf32> -> vector<24x32xf32>
    %c32 = arith.constant 32 : index
    %c0_200 = arith.constant 0 : index
    %c0_201 = arith.constant 0 : index
    %297 = vector.load %arg4[%c32, %c0_200, %c0_201] : memref<48x24x32xf32, #tpu.memory_space<vmem>>, vector<1x24x32xf32>
    %298 = vector.shape_cast %297 : vector<1x24x32xf32> to vector<24x32xf32>
    %299 = vector.shape_cast %296 : vector<24x32xf32> to vector<1x24x32xf32>
    tpu.vector_store %arg4[%c32, %c0_200, %c0_201], %299 {strides = array<i32>} : memref<48x24x32xf32, #tpu.memory_space<vmem>>, vector<1x24x32xf32>,
    %cst_202 = arith.constant dense<0.000000e+00> : vector<32xf32>
    %300 = vector.multi_reduction <add>, %296, %cst_202 [0] : vector<24x32xf32> to vector<32xf32>
    %301 = vector.shape_cast %300 : vector<32xf32> to vector<1x32xf32>
    %c32_203 = arith.constant 32 : index
    %c0_204 = arith.constant 0 : index
    %302 = vector.load %arg5[%c32_203, %c0_204] : memref<48x32xf32, #tpu.memory_space<vmem>>, vector<1x32xf32>
    tpu.vector_store %arg5[%c32_203, %c0_204], %301 {strides = array<i32>} : memref<48x32xf32, #tpu.memory_space<vmem>>, vector<1x32xf32>,
    %303 = vector.extract_strided_slice %4 {offsets = [33, 0, 0], sizes = [1, 16, 32], strides = [1, 1, 1]} : vector<48x16x32xf32> to vector<1x16x32xf32>
    %304 = vector.shape_cast %303 : vector<1x16x32xf32> to vector<16x32xf32>
    %cst_205 = arith.constant dense<0.000000e+00> : vector<24x32xf32>
    %305 = tpu.matmul %5, %304, %cst_205 {dimension_numbers = #tpu.dot_dimension_numbers<[1], [0], [0], [1], [0, 0, 1, 1], [], []>} : vector<24x16xf32>, vector<16x32xf32>, vector<24x32xf32> -> vector<24x32xf32>
    %c33 = arith.constant 33 : index
    %c0_206 = arith.constant 0 : index
    %c0_207 = arith.constant 0 : index
    %306 = vector.load %arg4[%c33, %c0_206, %c0_207] : memref<48x24x32xf32, #tpu.memory_space<vmem>>, vector<1x24x32xf32>
    %307 = vector.shape_cast %306 : vector<1x24x32xf32> to vector<24x32xf32>
    %308 = vector.shape_cast %305 : vector<24x32xf32> to vector<1x24x32xf32>
    tpu.vector_store %arg4[%c33, %c0_206, %c0_207], %308 {strides = array<i32>} : memref<48x24x32xf32, #tpu.memory_space<vmem>>, vector<1x24x32xf32>,
    %cst_208 = arith.constant dense<0.000000e+00> : vector<32xf32>
    %309 = vector.multi_reduction <add>, %305, %cst_208 [0] : vector<24x32xf32> to vector<32xf32>
    %310 = vector.shape_cast %309 : vector<32xf32> to vector<1x32xf32>
    %c33_209 = arith.constant 33 : index
    %c0_210 = arith.constant 0 : index
    %311 = vector.load %arg5[%c33_209, %c0_210] : memref<48x32xf32, #tpu.memory_space<vmem>>, vector<1x32xf32>
    tpu.vector_store %arg5[%c33_209, %c0_210], %310 {strides = array<i32>} : memref<48x32xf32, #tpu.memory_space<vmem>>, vector<1x32xf32>,
    %312 = vector.extract_strided_slice %4 {offsets = [34, 0, 0], sizes = [1, 16, 32], strides = [1, 1, 1]} : vector<48x16x32xf32> to vector<1x16x32xf32>
    %313 = vector.shape_cast %312 : vector<1x16x32xf32> to vector<16x32xf32>
    %cst_211 = arith.constant dense<0.000000e+00> : vector<24x32xf32>
    %314 = tpu.matmul %5, %313, %cst_211 {dimension_numbers = #tpu.dot_dimension_numbers<[1], [0], [0], [1], [0, 0, 1, 1], [], []>} : vector<24x16xf32>, vector<16x32xf32>, vector<24x32xf32> -> vector<24x32xf32>
    %c34 = arith.constant 34 : index
    %c0_212 = arith.constant 0 : index
    %c0_213 = arith.constant 0 : index
    %315 = vector.load %arg4[%c34, %c0_212, %c0_213] : memref<48x24x32xf32, #tpu.memory_space<vmem>>, vector<1x24x32xf32>
    %316 = vector.shape_cast %315 : vector<1x24x32xf32> to vector<24x32xf32>
    %317 = vector.shape_cast %314 : vector<24x32xf32> to vector<1x24x32xf32>
    tpu.vector_store %arg4[%c34, %c0_212, %c0_213], %317 {strides = array<i32>} : memref<48x24x32xf32, #tpu.memory_space<vmem>>, vector<1x24x32xf32>,
    %cst_214 = arith.constant dense<0.000000e+00> : vector<32xf32>
    %318 = vector.multi_reduction <add>, %314, %cst_214 [0] : vector<24x32xf32> to vector<32xf32>
    %319 = vector.shape_cast %318 : vector<32xf32> to vector<1x32xf32>
    %c34_215 = arith.constant 34 : index
    %c0_216 = arith.constant 0 : index
    %320 = vector.load %arg5[%c34_215, %c0_216] : memref<48x32xf32, #tpu.memory_space<vmem>>, vector<1x32xf32>
    tpu.vector_store %arg5[%c34_215, %c0_216], %319 {strides = array<i32>} : memref<48x32xf32, #tpu.memory_space<vmem>>, vector<1x32xf32>,
    %321 = vector.extract_strided_slice %4 {offsets = [35, 0, 0], sizes = [1, 16, 32], strides = [1, 1, 1]} : vector<48x16x32xf32> to vector<1x16x32xf32>
    %322 = vector.shape_cast %321 : vector<1x16x32xf32> to vector<16x32xf32>
    %cst_217 = arith.constant dense<0.000000e+00> : vector<24x32xf32>
    %323 = tpu.matmul %5, %322, %cst_217 {dimension_numbers = #tpu.dot_dimension_numbers<[1], [0], [0], [1], [0, 0, 1, 1], [], []>} : vector<24x16xf32>, vector<16x32xf32>, vector<24x32xf32> -> vector<24x32xf32>
    %c35 = arith.constant 35 : index
    %c0_218 = arith.constant 0 : index
    %c0_219 = arith.constant 0 : index
    %324 = vector.load %arg4[%c35, %c0_218, %c0_219] : memref<48x24x32xf32, #tpu.memory_space<vmem>>, vector<1x24x32xf32>
    %325 = vector.shape_cast %324 : vector<1x24x32xf32> to vector<24x32xf32>
    %326 = vector.shape_cast %323 : vector<24x32xf32> to vector<1x24x32xf32>
    tpu.vector_store %arg4[%c35, %c0_218, %c0_219], %326 {strides = array<i32>} : memref<48x24x32xf32, #tpu.memory_space<vmem>>, vector<1x24x32xf32>,
    %cst_220 = arith.constant dense<0.000000e+00> : vector<32xf32>
    %327 = vector.multi_reduction <add>, %323, %cst_220 [0] : vector<24x32xf32> to vector<32xf32>
    %328 = vector.shape_cast %327 : vector<32xf32> to vector<1x32xf32>
    %c35_221 = arith.constant 35 : index
    %c0_222 = arith.constant 0 : index
    %329 = vector.load %arg5[%c35_221, %c0_222] : memref<48x32xf32, #tpu.memory_space<vmem>>, vector<1x32xf32>
    tpu.vector_store %arg5[%c35_221, %c0_222], %328 {strides = array<i32>} : memref<48x32xf32, #tpu.memory_space<vmem>>, vector<1x32xf32>,
    %330 = vector.extract_strided_slice %4 {offsets = [36, 0, 0], sizes = [1, 16, 32], strides = [1, 1, 1]} : vector<48x16x32xf32> to vector<1x16x32xf32>
    %331 = vector.shape_cast %330 : vector<1x16x32xf32> to vector<16x32xf32>
    %cst_223 = arith.constant dense<0.000000e+00> : vector<24x32xf32>
    %332 = tpu.matmul %5, %331, %cst_223 {dimension_numbers = #tpu.dot_dimension_numbers<[1], [0], [0], [1], [0, 0, 1, 1], [], []>} : vector<24x16xf32>, vector<16x32xf32>, vector<24x32xf32> -> vector<24x32xf32>
    %c36 = arith.constant 36 : index
    %c0_224 = arith.constant 0 : index
    %c0_225 = arith.constant 0 : index
    %333 = vector.load %arg4[%c36, %c0_224, %c0_225] : memref<48x24x32xf32, #tpu.memory_space<vmem>>, vector<1x24x32xf32>
    %334 = vector.shape_cast %333 : vector<1x24x32xf32> to vector<24x32xf32>
    %335 = vector.shape_cast %332 : vector<24x32xf32> to vector<1x24x32xf32>
    tpu.vector_store %arg4[%c36, %c0_224, %c0_225], %335 {strides = array<i32>} : memref<48x24x32xf32, #tpu.memory_space<vmem>>, vector<1x24x32xf32>,
    %cst_226 = arith.constant dense<0.000000e+00> : vector<32xf32>
    %336 = vector.multi_reduction <add>, %332, %cst_226 [0] : vector<24x32xf32> to vector<32xf32>
    %337 = vector.shape_cast %336 : vector<32xf32> to vector<1x32xf32>
    %c36_227 = arith.constant 36 : index
    %c0_228 = arith.constant 0 : index
    %338 = vector.load %arg5[%c36_227, %c0_228] : memref<48x32xf32, #tpu.memory_space<vmem>>, vector<1x32xf32>
    tpu.vector_store %arg5[%c36_227, %c0_228], %337 {strides = array<i32>} : memref<48x32xf32, #tpu.memory_space<vmem>>, vector<1x32xf32>,
    %339 = vector.extract_strided_slice %4 {offsets = [37, 0, 0], sizes = [1, 16, 32], strides = [1, 1, 1]} : vector<48x16x32xf32> to vector<1x16x32xf32>
    %340 = vector.shape_cast %339 : vector<1x16x32xf32> to vector<16x32xf32>
    %cst_229 = arith.constant dense<0.000000e+00> : vector<24x32xf32>
    %341 = tpu.matmul %5, %340, %cst_229 {dimension_numbers = #tpu.dot_dimension_numbers<[1], [0], [0], [1], [0, 0, 1, 1], [], []>} : vector<24x16xf32>, vector<16x32xf32>, vector<24x32xf32> -> vector<24x32xf32>
    %c37 = arith.constant 37 : index
    %c0_230 = arith.constant 0 : index
    %c0_231 = arith.constant 0 : index
    %342 = vector.load %arg4[%c37, %c0_230, %c0_231] : memref<48x24x32xf32, #tpu.memory_space<vmem>>, vector<1x24x32xf32>
    %343 = vector.shape_cast %342 : vector<1x24x32xf32> to vector<24x32xf32>
    %344 = vector.shape_cast %341 : vector<24x32xf32> to vector<1x24x32xf32>
    tpu.vector_store %arg4[%c37, %c0_230, %c0_231], %344 {strides = array<i32>} : memref<48x24x32xf32, #tpu.memory_space<vmem>>, vector<1x24x32xf32>,
    %cst_232 = arith.constant dense<0.000000e+00> : vector<32xf32>
    %345 = vector.multi_reduction <add>, %341, %cst_232 [0] : vector<24x32xf32> to vector<32xf32>
    %346 = vector.shape_cast %345 : vector<32xf32> to vector<1x32xf32>
    %c37_233 = arith.constant 37 : index
    %c0_234 = arith.constant 0 : index
    %347 = vector.load %arg5[%c37_233, %c0_234] : memref<48x32xf32, #tpu.memory_space<vmem>>, vector<1x32xf32>
    tpu.vector_store %arg5[%c37_233, %c0_234], %346 {strides = array<i32>} : memref<48x32xf32, #tpu.memory_space<vmem>>, vector<1x32xf32>,
    %348 = vector.extract_strided_slice %4 {offsets = [38, 0, 0], sizes = [1, 16, 32], strides = [1, 1, 1]} : vector<48x16x32xf32> to vector<1x16x32xf32>
    %349 = vector.shape_cast %348 : vector<1x16x32xf32> to vector<16x32xf32>
    %cst_235 = arith.constant dense<0.000000e+00> : vector<24x32xf32>
    %350 = tpu.matmul %5, %349, %cst_235 {dimension_numbers = #tpu.dot_dimension_numbers<[1], [0], [0], [1], [0, 0, 1, 1], [], []>} : vector<24x16xf32>, vector<16x32xf32>, vector<24x32xf32> -> vector<24x32xf32>
    %c38 = arith.constant 38 : index
    %c0_236 = arith.constant 0 : index
    %c0_237 = arith.constant 0 : index
    %351 = vector.load %arg4[%c38, %c0_236, %c0_237] : memref<48x24x32xf32, #tpu.memory_space<vmem>>, vector<1x24x32xf32>
    %352 = vector.shape_cast %351 : vector<1x24x32xf32> to vector<24x32xf32>
    %353 = vector.shape_cast %350 : vector<24x32xf32> to vector<1x24x32xf32>
    tpu.vector_store %arg4[%c38, %c0_236, %c0_237], %353 {strides = array<i32>} : memref<48x24x32xf32, #tpu.memory_space<vmem>>, vector<1x24x32xf32>,
    %cst_238 = arith.constant dense<0.000000e+00> : vector<32xf32>
    %354 = vector.multi_reduction <add>, %350, %cst_238 [0] : vector<24x32xf32> to vector<32xf32>
    %355 = vector.shape_cast %354 : vector<32xf32> to vector<1x32xf32>
    %c38_239 = arith.constant 38 : index
    %c0_240 = arith.constant 0 : index
    %356 = vector.load %arg5[%c38_239, %c0_240] : memref<48x32xf32, #tpu.memory_space<vmem>>, vector<1x32xf32>
    tpu.vector_store %arg5[%c38_239, %c0_240], %355 {strides = array<i32>} : memref<48x32xf32, #tpu.memory_space<vmem>>, vector<1x32xf32>,
    %357 = vector.extract_strided_slice %4 {offsets = [39, 0, 0], sizes = [1, 16, 32], strides = [1, 1, 1]} : vector<48x16x32xf32> to vector<1x16x32xf32>
    %358 = vector.shape_cast %357 : vector<1x16x32xf32> to vector<16x32xf32>
    %cst_241 = arith.constant dense<0.000000e+00> : vector<24x32xf32>
    %359 = tpu.matmul %5, %358, %cst_241 {dimension_numbers = #tpu.dot_dimension_numbers<[1], [0], [0], [1], [0, 0, 1, 1], [], []>} : vector<24x16xf32>, vector<16x32xf32>, vector<24x32xf32> -> vector<24x32xf32>
    %c39 = arith.constant 39 : index
    %c0_242 = arith.constant 0 : index
    %c0_243 = arith.constant 0 : index
    %360 = vector.load %arg4[%c39, %c0_242, %c0_243] : memref<48x24x32xf32, #tpu.memory_space<vmem>>, vector<1x24x32xf32>
    %361 = vector.shape_cast %360 : vector<1x24x32xf32> to vector<24x32xf32>
    %362 = vector.shape_cast %359 : vector<24x32xf32> to vector<1x24x32xf32>
    tpu.vector_store %arg4[%c39, %c0_242, %c0_243], %362 {strides = array<i32>} : memref<48x24x32xf32, #tpu.memory_space<vmem>>, vector<1x24x32xf32>,
    %cst_244 = arith.constant dense<0.000000e+00> : vector<32xf32>
    %363 = vector.multi_reduction <add>, %359, %cst_244 [0] : vector<24x32xf32> to vector<32xf32>
    %364 = vector.shape_cast %363 : vector<32xf32> to vector<1x32xf32>
    %c39_245 = arith.constant 39 : index
    %c0_246 = arith.constant 0 : index
    %365 = vector.load %arg5[%c39_245, %c0_246] : memref<48x32xf32, #tpu.memory_space<vmem>>, vector<1x32xf32>
    tpu.vector_store %arg5[%c39_245, %c0_246], %364 {strides = array<i32>} : memref<48x32xf32, #tpu.memory_space<vmem>>, vector<1x32xf32>,
    %366 = vector.extract_strided_slice %4 {offsets = [40, 0, 0], sizes = [1, 16, 32], strides = [1, 1, 1]} : vector<48x16x32xf32> to vector<1x16x32xf32>
    %367 = vector.shape_cast %366 : vector<1x16x32xf32> to vector<16x32xf32>
    %cst_247 = arith.constant dense<0.000000e+00> : vector<24x32xf32>
    %368 = tpu.matmul %5, %367, %cst_247 {dimension_numbers = #tpu.dot_dimension_numbers<[1], [0], [0], [1], [0, 0, 1, 1], [], []>} : vector<24x16xf32>, vector<16x32xf32>, vector<24x32xf32> -> vector<24x32xf32>
    %c40 = arith.constant 40 : index
    %c0_248 = arith.constant 0 : index
    %c0_249 = arith.constant 0 : index
    %369 = vector.load %arg4[%c40, %c0_248, %c0_249] : memref<48x24x32xf32, #tpu.memory_space<vmem>>, vector<1x24x32xf32>
    %370 = vector.shape_cast %369 : vector<1x24x32xf32> to vector<24x32xf32>
    %371 = vector.shape_cast %368 : vector<24x32xf32> to vector<1x24x32xf32>
    tpu.vector_store %arg4[%c40, %c0_248, %c0_249], %371 {strides = array<i32>} : memref<48x24x32xf32, #tpu.memory_space<vmem>>, vector<1x24x32xf32>,
    %cst_250 = arith.constant dense<0.000000e+00> : vector<32xf32>
    %372 = vector.multi_reduction <add>, %368, %cst_250 [0] : vector<24x32xf32> to vector<32xf32>
    %373 = vector.shape_cast %372 : vector<32xf32> to vector<1x32xf32>
    %c40_251 = arith.constant 40 : index
    %c0_252 = arith.constant 0 : index
    %374 = vector.load %arg5[%c40_251, %c0_252] : memref<48x32xf32, #tpu.memory_space<vmem>>, vector<1x32xf32>
    tpu.vector_store %arg5[%c40_251, %c0_252], %373 {strides = array<i32>} : memref<48x32xf32, #tpu.memory_space<vmem>>, vector<1x32xf32>,
    %375 = vector.extract_strided_slice %4 {offsets = [41, 0, 0], sizes = [1, 16, 32], strides = [1, 1, 1]} : vector<48x16x32xf32> to vector<1x16x32xf32>
    %376 = vector.shape_cast %375 : vector<1x16x32xf32> to vector<16x32xf32>
    %cst_253 = arith.constant dense<0.000000e+00> : vector<24x32xf32>
    %377 = tpu.matmul %5, %376, %cst_253 {dimension_numbers = #tpu.dot_dimension_numbers<[1], [0], [0], [1], [0, 0, 1, 1], [], []>} : vector<24x16xf32>, vector<16x32xf32>, vector<24x32xf32> -> vector<24x32xf32>
    %c41 = arith.constant 41 : index
    %c0_254 = arith.constant 0 : index
    %c0_255 = arith.constant 0 : index
    %378 = vector.load %arg4[%c41, %c0_254, %c0_255] : memref<48x24x32xf32, #tpu.memory_space<vmem>>, vector<1x24x32xf32>
    %379 = vector.shape_cast %378 : vector<1x24x32xf32> to vector<24x32xf32>
    %380 = vector.shape_cast %377 : vector<24x32xf32> to vector<1x24x32xf32>
    tpu.vector_store %arg4[%c41, %c0_254, %c0_255], %380 {strides = array<i32>} : memref<48x24x32xf32, #tpu.memory_space<vmem>>, vector<1x24x32xf32>,
    %cst_256 = arith.constant dense<0.000000e+00> : vector<32xf32>
    %381 = vector.multi_reduction <add>, %377, %cst_256 [0] : vector<24x32xf32> to vector<32xf32>
    %382 = vector.shape_cast %381 : vector<32xf32> to vector<1x32xf32>
    %c41_257 = arith.constant 41 : index
    %c0_258 = arith.constant 0 : index
    %383 = vector.load %arg5[%c41_257, %c0_258] : memref<48x32xf32, #tpu.memory_space<vmem>>, vector<1x32xf32>
    tpu.vector_store %arg5[%c41_257, %c0_258], %382 {strides = array<i32>} : memref<48x32xf32, #tpu.memory_space<vmem>>, vector<1x32xf32>,
    %384 = vector.extract_strided_slice %4 {offsets = [42, 0, 0], sizes = [1, 16, 32], strides = [1, 1, 1]} : vector<48x16x32xf32> to vector<1x16x32xf32>
    %385 = vector.shape_cast %384 : vector<1x16x32xf32> to vector<16x32xf32>
    %cst_259 = arith.constant dense<0.000000e+00> : vector<24x32xf32>
    %386 = tpu.matmul %5, %385, %cst_259 {dimension_numbers = #tpu.dot_dimension_numbers<[1], [0], [0], [1], [0, 0, 1, 1], [], []>} : vector<24x16xf32>, vector<16x32xf32>, vector<24x32xf32> -> vector<24x32xf32>
    %c42 = arith.constant 42 : index
    %c0_260 = arith.constant 0 : index
    %c0_261 = arith.constant 0 : index
    %387 = vector.load %arg4[%c42, %c0_260, %c0_261] : memref<48x24x32xf32, #tpu.memory_space<vmem>>, vector<1x24x32xf32>
    %388 = vector.shape_cast %387 : vector<1x24x32xf32> to vector<24x32xf32>
    %389 = vector.shape_cast %386 : vector<24x32xf32> to vector<1x24x32xf32>
    tpu.vector_store %arg4[%c42, %c0_260, %c0_261], %389 {strides = array<i32>} : memref<48x24x32xf32, #tpu.memory_space<vmem>>, vector<1x24x32xf32>,
    %cst_262 = arith.constant dense<0.000000e+00> : vector<32xf32>
    %390 = vector.multi_reduction <add>, %386, %cst_262 [0] : vector<24x32xf32> to vector<32xf32>
    %391 = vector.shape_cast %390 : vector<32xf32> to vector<1x32xf32>
    %c42_263 = arith.constant 42 : index
    %c0_264 = arith.constant 0 : index
    %392 = vector.load %arg5[%c42_263, %c0_264] : memref<48x32xf32, #tpu.memory_space<vmem>>, vector<1x32xf32>
    tpu.vector_store %arg5[%c42_263, %c0_264], %391 {strides = array<i32>} : memref<48x32xf32, #tpu.memory_space<vmem>>, vector<1x32xf32>,
    %393 = vector.extract_strided_slice %4 {offsets = [43, 0, 0], sizes = [1, 16, 32], strides = [1, 1, 1]} : vector<48x16x32xf32> to vector<1x16x32xf32>
    %394 = vector.shape_cast %393 : vector<1x16x32xf32> to vector<16x32xf32>
    %cst_265 = arith.constant dense<0.000000e+00> : vector<24x32xf32>
    %395 = tpu.matmul %5, %394, %cst_265 {dimension_numbers = #tpu.dot_dimension_numbers<[1], [0], [0], [1], [0, 0, 1, 1], [], []>} : vector<24x16xf32>, vector<16x32xf32>, vector<24x32xf32> -> vector<24x32xf32>
    %c43 = arith.constant 43 : index
    %c0_266 = arith.constant 0 : index
    %c0_267 = arith.constant 0 : index
    %396 = vector.load %arg4[%c43, %c0_266, %c0_267] : memref<48x24x32xf32, #tpu.memory_space<vmem>>, vector<1x24x32xf32>
    %397 = vector.shape_cast %396 : vector<1x24x32xf32> to vector<24x32xf32>
    %398 = vector.shape_cast %395 : vector<24x32xf32> to vector<1x24x32xf32>
    tpu.vector_store %arg4[%c43, %c0_266, %c0_267], %398 {strides = array<i32>} : memref<48x24x32xf32, #tpu.memory_space<vmem>>, vector<1x24x32xf32>,
    %cst_268 = arith.constant dense<0.000000e+00> : vector<32xf32>
    %399 = vector.multi_reduction <add>, %395, %cst_268 [0] : vector<24x32xf32> to vector<32xf32>
    %400 = vector.shape_cast %399 : vector<32xf32> to vector<1x32xf32>
    %c43_269 = arith.constant 43 : index
    %c0_270 = arith.constant 0 : index
    %401 = vector.load %arg5[%c43_269, %c0_270] : memref<48x32xf32, #tpu.memory_space<vmem>>, vector<1x32xf32>
    tpu.vector_store %arg5[%c43_269, %c0_270], %400 {strides = array<i32>} : memref<48x32xf32, #tpu.memory_space<vmem>>, vector<1x32xf32>,
    %402 = vector.extract_strided_slice %4 {offsets = [44, 0, 0], sizes = [1, 16, 32], strides = [1, 1, 1]} : vector<48x16x32xf32> to vector<1x16x32xf32>
    %403 = vector.shape_cast %402 : vector<1x16x32xf32> to vector<16x32xf32>
    %cst_271 = arith.constant dense<0.000000e+00> : vector<24x32xf32>
    %404 = tpu.matmul %5, %403, %cst_271 {dimension_numbers = #tpu.dot_dimension_numbers<[1], [0], [0], [1], [0, 0, 1, 1], [], []>} : vector<24x16xf32>, vector<16x32xf32>, vector<24x32xf32> -> vector<24x32xf32>
    %c44 = arith.constant 44 : index
    %c0_272 = arith.constant 0 : index
    %c0_273 = arith.constant 0 : index
    %405 = vector.load %arg4[%c44, %c0_272, %c0_273] : memref<48x24x32xf32, #tpu.memory_space<vmem>>, vector<1x24x32xf32>
    %406 = vector.shape_cast %405 : vector<1x24x32xf32> to vector<24x32xf32>
    %407 = vector.shape_cast %404 : vector<24x32xf32> to vector<1x24x32xf32>
    tpu.vector_store %arg4[%c44, %c0_272, %c0_273], %407 {strides = array<i32>} : memref<48x24x32xf32, #tpu.memory_space<vmem>>, vector<1x24x32xf32>,
    %cst_274 = arith.constant dense<0.000000e+00> : vector<32xf32>
    %408 = vector.multi_reduction <add>, %404, %cst_274 [0] : vector<24x32xf32> to vector<32xf32>
    %409 = vector.shape_cast %408 : vector<32xf32> to vector<1x32xf32>
    %c44_275 = arith.constant 44 : index
    %c0_276 = arith.constant 0 : index
    %410 = vector.load %arg5[%c44_275, %c0_276] : memref<48x32xf32, #tpu.memory_space<vmem>>, vector<1x32xf32>
    tpu.vector_store %arg5[%c44_275, %c0_276], %409 {strides = array<i32>} : memref<48x32xf32, #tpu.memory_space<vmem>>, vector<1x32xf32>,
    %411 = vector.extract_strided_slice %4 {offsets = [45, 0, 0], sizes = [1, 16, 32], strides = [1, 1, 1]} : vector<48x16x32xf32> to vector<1x16x32xf32>
    %412 = vector.shape_cast %411 : vector<1x16x32xf32> to vector<16x32xf32>
    %cst_277 = arith.constant dense<0.000000e+00> : vector<24x32xf32>
    %413 = tpu.matmul %5, %412, %cst_277 {dimension_numbers = #tpu.dot_dimension_numbers<[1], [0], [0], [1], [0, 0, 1, 1], [], []>} : vector<24x16xf32>, vector<16x32xf32>, vector<24x32xf32> -> vector<24x32xf32>
    %c45 = arith.constant 45 : index
    %c0_278 = arith.constant 0 : index
    %c0_279 = arith.constant 0 : index
    %414 = vector.load %arg4[%c45, %c0_278, %c0_279] : memref<48x24x32xf32, #tpu.memory_space<vmem>>, vector<1x24x32xf32>
    %415 = vector.shape_cast %414 : vector<1x24x32xf32> to vector<24x32xf32>
    %416 = vector.shape_cast %413 : vector<24x32xf32> to vector<1x24x32xf32>
    tpu.vector_store %arg4[%c45, %c0_278, %c0_279], %416 {strides = array<i32>} : memref<48x24x32xf32, #tpu.memory_space<vmem>>, vector<1x24x32xf32>,
    %cst_280 = arith.constant dense<0.000000e+00> : vector<32xf32>
    %417 = vector.multi_reduction <add>, %413, %cst_280 [0] : vector<24x32xf32> to vector<32xf32>
    %418 = vector.shape_cast %417 : vector<32xf32> to vector<1x32xf32>
    %c45_281 = arith.constant 45 : index
    %c0_282 = arith.constant 0 : index
    %419 = vector.load %arg5[%c45_281, %c0_282] : memref<48x32xf32, #tpu.memory_space<vmem>>, vector<1x32xf32>
    tpu.vector_store %arg5[%c45_281, %c0_282], %418 {strides = array<i32>} : memref<48x32xf32, #tpu.memory_space<vmem>>, vector<1x32xf32>,
    %420 = vector.extract_strided_slice %4 {offsets = [46, 0, 0], sizes = [1, 16, 32], strides = [1, 1, 1]} : vector<48x16x32xf32> to vector<1x16x32xf32>
    %421 = vector.shape_cast %420 : vector<1x16x32xf32> to vector<16x32xf32>
    %cst_283 = arith.constant dense<0.000000e+00> : vector<24x32xf32>
    %422 = tpu.matmul %5, %421, %cst_283 {dimension_numbers = #tpu.dot_dimension_numbers<[1], [0], [0], [1], [0, 0, 1, 1], [], []>} : vector<24x16xf32>, vector<16x32xf32>, vector<24x32xf32> -> vector<24x32xf32>
    %c46 = arith.constant 46 : index
    %c0_284 = arith.constant 0 : index
    %c0_285 = arith.constant 0 : index
    %423 = vector.load %arg4[%c46, %c0_284, %c0_285] : memref<48x24x32xf32, #tpu.memory_space<vmem>>, vector<1x24x32xf32>
    %424 = vector.shape_cast %423 : vector<1x24x32xf32> to vector<24x32xf32>
    %425 = vector.shape_cast %422 : vector<24x32xf32> to vector<1x24x32xf32>
    tpu.vector_store %arg4[%c46, %c0_284, %c0_285], %425 {strides = array<i32>} : memref<48x24x32xf32, #tpu.memory_space<vmem>>, vector<1x24x32xf32>,
    %cst_286 = arith.constant dense<0.000000e+00> : vector<32xf32>
    %426 = vector.multi_reduction <add>, %422, %cst_286 [0] : vector<24x32xf32> to vector<32xf32>
    %427 = vector.shape_cast %426 : vector<32xf32> to vector<1x32xf32>
    %c46_287 = arith.constant 46 : index
    %c0_288 = arith.constant 0 : index
    %428 = vector.load %arg5[%c46_287, %c0_288] : memref<48x32xf32, #tpu.memory_space<vmem>>, vector<1x32xf32>
    tpu.vector_store %arg5[%c46_287, %c0_288], %427 {strides = array<i32>} : memref<48x32xf32, #tpu.memory_space<vmem>>, vector<1x32xf32>,
    %429 = vector.extract_strided_slice %4 {offsets = [47, 0, 0], sizes = [1, 16, 32], strides = [1, 1, 1]} : vector<48x16x32xf32> to vector<1x16x32xf32>
    %430 = vector.shape_cast %429 : vector<1x16x32xf32> to vector<16x32xf32>
    %cst_289 = arith.constant dense<0.000000e+00> : vector<24x32xf32>
    %431 = tpu.matmul %5, %430, %cst_289 {dimension_numbers = #tpu.dot_dimension_numbers<[1], [0], [0], [1], [0, 0, 1, 1], [], []>} : vector<24x16xf32>, vector<16x32xf32>, vector<24x32xf32> -> vector<24x32xf32>
    %c47 = arith.constant 47 : index
    %c0_290 = arith.constant 0 : index
    %c0_291 = arith.constant 0 : index
    %432 = vector.load %arg4[%c47, %c0_290, %c0_291] : memref<48x24x32xf32, #tpu.memory_space<vmem>>, vector<1x24x32xf32>
    %433 = vector.shape_cast %432 : vector<1x24x32xf32> to vector<24x32xf32>
    %434 = vector.shape_cast %431 : vector<24x32xf32> to vector<1x24x32xf32>
    tpu.vector_store %arg4[%c47, %c0_290, %c0_291], %434 {strides = array<i32>} : memref<48x24x32xf32, #tpu.memory_space<vmem>>, vector<1x24x32xf32>,
    %cst_292 = arith.constant dense<0.000000e+00> : vector<32xf32>
    %435 = vector.multi_reduction <add>, %431, %cst_292 [0] : vector<24x32xf32> to vector<32xf32>
    %436 = vector.shape_cast %435 : vector<32xf32> to vector<1x32xf32>
    %c47_293 = arith.constant 47 : index
    %c0_294 = arith.constant 0 : index
    %437 = vector.load %arg5[%c47_293, %c0_294] : memref<48x32xf32, #tpu.memory_space<vmem>>, vector<1x32xf32>
    tpu.vector_store %arg5[%c47_293, %c0_294], %436 {strides = array<i32>} : memref<48x32xf32, #tpu.memory_space<vmem>>, vector<1x32xf32>,
    return
  }
  func.func @transform_0(%arg0: i32) -> (i32, i32) {
    %c0_i32 = arith.constant 0 : i32
    %c0_i32_0 = arith.constant 0 : i32
    %c0_i32_1 = arith.constant 0 : i32
    return %c0_i32, %c0_i32_0 : i32, i32
  }
  func.func @transform_1(%arg0: i32) -> (i32, i32) {
    %c0_i32 = arith.constant 0 : i32
    %c0_i32_0 = arith.constant 0 : i32
    %c0_i32_1 = arith.constant 0 : i32
    return %c0_i32, %c0_i32_0 : i32, i32
  }
  func.func @transform_2(%arg0: i32) -> (i32, i32, i32) {
    %c0_i32 = arith.constant 0 : i32
    %c0_i32_0 = arith.constant 0 : i32
    %c0_i32_1 = arith.constant 0 : i32
    return %arg0, %c0_i32, %c0_i32_0 : i32, i32, i32
  }
  func.func @transform_3(%arg0: i32) -> (i32, i32, i32) {
    %c0_i32 = arith.constant 0 : i32
    %c0_i32_0 = arith.constant 0 : i32
    %c0_i32_1 = arith.constant 0 : i32
    return %arg0, %c0_i32, %c0_i32_0 : i32, i32, i32
  }
  func.func @transform_4(%arg0: i32) -> (i32, i32) {
    %c0_i32 = arith.constant 0 : i32
    %c0_i32_0 = arith.constant 0 : i32
    return %arg0, %c0_i32 : i32, i32
  }
}

module attributes {stable_mosaic.version = 11 : i64} {
  func.func @kernel(%arg0: i32, %arg1: memref<1x4x128xf32, #tpu.memory_space<vmem>>, %arg2: memref<1x8x4xf32, #tpu.memory_space<vmem>>, %arg3: memref<8x8xf32, #tpu.memory_space<smem>>, %arg4: memref<1x8x8x128xf32, #tpu.memory_space<vmem>>) attributes {dimension_semantics = [#tpu.dimension_semantics<parallel>], iteration_bounds = array<i64: 2>, scalar_prefetch = 0 : i64, scratch_operands = 0 : i64, tpu.core_type = #tpu.core_type<tc>, window_params = [{transform_indices = @transform_0, window_bounds = array<i64: 1, 4, 128>}, {transform_indices = @transform_1, window_bounds = array<i64: 1, 8, 4>}, {transform_indices = @transform_2, window_bounds = array<i64: 8, 8>}, {transform_indices = @transform_3, window_bounds = array<i64: 1, 8, 8, 128>}]} {
    %c0 = arith.constant 0 : index
    %c0_0 = arith.constant 0 : index
    %c0_1 = arith.constant 0 : index
    %0 = vector.load %arg1[%c0, %c0_0, %c0_1] : memref<1x4x128xf32, #tpu.memory_space<vmem>>, vector<1x4x128xf32>
    %1 = vector.shape_cast %0 : vector<1x4x128xf32> to vector<4x128xf32>
    %c0_2 = arith.constant 0 : index
    %c0_3 = arith.constant 0 : index
    %c0_4 = arith.constant 0 : index
    %2 = vector.load %arg2[%c0_2, %c0_3, %c0_4] : memref<1x8x4xf32, #tpu.memory_space<vmem>>, vector<1x8x4xf32>
    %3 = vector.shape_cast %2 : vector<1x8x4xf32> to vector<8x4xf32>
    %4 = vector.extract_strided_slice %1 {offsets = [0, 0], sizes = [1, 128], strides = [1, 1]} : vector<4x128xf32> to vector<1x128xf32>
    %5 = vector.extract_strided_slice %1 {offsets = [1, 0], sizes = [1, 128], strides = [1, 1]} : vector<4x128xf32> to vector<1x128xf32>
    %6 = vector.extract_strided_slice %1 {offsets = [2, 0], sizes = [1, 128], strides = [1, 1]} : vector<4x128xf32> to vector<1x128xf32>
    %7 = vector.extract_strided_slice %1 {offsets = [3, 0], sizes = [1, 128], strides = [1, 1]} : vector<4x128xf32> to vector<1x128xf32>
    %cst = arith.constant 0.0322580636 : f32
    %8 = vector.broadcast %cst : f32 to vector<1x128xf32>
    %9 = arith.mulf %5, %8 : vector<1x128xf32>
    %cst_5 = arith.constant 0.0434782617 : f32
    %10 = vector.broadcast %cst_5 : f32 to vector<1x128xf32>
    %11 = arith.mulf %6, %10 : vector<1x128xf32>
    %12 = vector.extract_strided_slice %3 {offsets = [0, 0], sizes = [8, 1], strides = [1, 1]} : vector<8x4xf32> to vector<8x1xf32>
    %13 = vector.extract_strided_slice %3 {offsets = [0, 1], sizes = [8, 1], strides = [1, 1]} : vector<8x4xf32> to vector<8x1xf32>
    %14 = vector.extract_strided_slice %3 {offsets = [0, 2], sizes = [8, 1], strides = [1, 1]} : vector<8x4xf32> to vector<8x1xf32>
    %15 = vector.extract_strided_slice %3 {offsets = [0, 3], sizes = [8, 1], strides = [1, 1]} : vector<8x4xf32> to vector<8x1xf32>
    %16 = tpu.iota {dimensions = array<i32: 0>} : vector<8x128xi32>
    %17 = arith.fptosi %4 : vector<1x128xf32> to vector<1x128xi32>
    %18 = vector.broadcast %17 : vector<1x128xi32> to vector<8x128xi32>
    %19 = arith.cmpi eq, %16, %18 : vector<8x128xi32>
    %c0_6 = arith.constant 0 : index
    %c0_7 = arith.constant 0 : index
    %20 = memref.load %arg3[%c0_6, %c0_7] : memref<8x8xf32, #tpu.memory_space<smem>>
    %21 = vector.broadcast %20 : f32 to vector<1x128xf32>
    %22 = arith.mulf %9, %21 : vector<1x128xf32>
    %c1 = arith.constant 1 : index
    %c0_8 = arith.constant 0 : index
    %23 = memref.load %arg3[%c1, %c0_8] : memref<8x8xf32, #tpu.memory_space<smem>>
    %24 = vector.broadcast %23 : f32 to vector<1x128xf32>
    %25 = arith.mulf %11, %24 : vector<1x128xf32>
    %26 = arith.addf %22, %25 : vector<1x128xf32>
    %c2 = arith.constant 2 : index
    %c0_9 = arith.constant 0 : index
    %27 = memref.load %arg3[%c2, %c0_9] : memref<8x8xf32, #tpu.memory_space<smem>>
    %28 = vector.broadcast %27 : f32 to vector<1x128xf32>
    %29 = arith.mulf %7, %28 : vector<1x128xf32>
    %30 = arith.addf %26, %29 : vector<1x128xf32>
    %c3 = arith.constant 3 : index
    %c0_10 = arith.constant 0 : index
    %31 = memref.load %arg3[%c3, %c0_10] : memref<8x8xf32, #tpu.memory_space<smem>>
    %32 = vector.broadcast %31 : f32 to vector<8x1xf32>
    %33 = arith.mulf %12, %32 : vector<8x1xf32>
    %c4 = arith.constant 4 : index
    %c0_11 = arith.constant 0 : index
    %34 = memref.load %arg3[%c4, %c0_11] : memref<8x8xf32, #tpu.memory_space<smem>>
    %35 = vector.broadcast %34 : f32 to vector<8x1xf32>
    %36 = arith.mulf %13, %35 : vector<8x1xf32>
    %37 = arith.addf %33, %36 : vector<8x1xf32>
    %c5 = arith.constant 5 : index
    %c0_12 = arith.constant 0 : index
    %38 = memref.load %arg3[%c5, %c0_12] : memref<8x8xf32, #tpu.memory_space<smem>>
    %39 = vector.broadcast %38 : f32 to vector<8x1xf32>
    %40 = arith.mulf %14, %39 : vector<8x1xf32>
    %41 = arith.addf %37, %40 : vector<8x1xf32>
    %c6 = arith.constant 6 : index
    %c0_13 = arith.constant 0 : index
    %42 = memref.load %arg3[%c6, %c0_13] : memref<8x8xf32, #tpu.memory_space<smem>>
    %43 = vector.broadcast %42 : f32 to vector<8x1xf32>
    %44 = arith.mulf %15, %43 : vector<8x1xf32>
    %45 = arith.addf %41, %44 : vector<8x1xf32>
    %c7 = arith.constant 7 : index
    %c0_14 = arith.constant 0 : index
    %46 = memref.load %arg3[%c7, %c0_14] : memref<8x8xf32, #tpu.memory_space<smem>>
    %47 = vector.broadcast %46 : f32 to vector<8x1xf32>
    %48 = arith.addf %45, %47 : vector<8x1xf32>
    %49 = vector.broadcast %48 : vector<8x1xf32> to vector<8x128xf32>
    %50 = vector.broadcast %30 : vector<1x128xf32> to vector<8x128xf32>
    %51 = arith.addf %49, %50 : vector<8x128xf32>
    %52 = vector.broadcast %5 : vector<1x128xf32> to vector<8x128xf32>
    %53 = arith.addf %51, %52 : vector<8x128xf32>
    %54 = vector.shape_cast %5 : vector<1x128xf32> to vector<1x128xf32>
    %55 = vector.broadcast %54 : vector<1x128xf32> to vector<8x128xf32>
    %56 = arith.select %19, %55, %53 : vector<8x128xi1>, vector<8x128xf32>
    %cst_15 = arith.constant 0.483870953 : f32
    %57 = vector.broadcast %cst_15 : f32 to vector<8x128xf32>
    %58 = arith.mulf %56, %57 : vector<8x128xf32>
    %c0_16 = arith.constant 0 : index
    %c1_17 = arith.constant 1 : index
    %59 = memref.load %arg3[%c0_16, %c1_17] : memref<8x8xf32, #tpu.memory_space<smem>>
    %60 = vector.broadcast %59 : f32 to vector<1x128xf32>
    %61 = arith.mulf %9, %60 : vector<1x128xf32>
    %c1_18 = arith.constant 1 : index
    %c1_19 = arith.constant 1 : index
    %62 = memref.load %arg3[%c1_18, %c1_19] : memref<8x8xf32, #tpu.memory_space<smem>>
    %63 = vector.broadcast %62 : f32 to vector<1x128xf32>
    %64 = arith.mulf %11, %63 : vector<1x128xf32>
    %65 = arith.addf %61, %64 : vector<1x128xf32>
    %c2_20 = arith.constant 2 : index
    %c1_21 = arith.constant 1 : index
    %66 = memref.load %arg3[%c2_20, %c1_21] : memref<8x8xf32, #tpu.memory_space<smem>>
    %67 = vector.broadcast %66 : f32 to vector<1x128xf32>
    %68 = arith.mulf %7, %67 : vector<1x128xf32>
    %69 = arith.addf %65, %68 : vector<1x128xf32>
    %c3_22 = arith.constant 3 : index
    %c1_23 = arith.constant 1 : index
    %70 = memref.load %arg3[%c3_22, %c1_23] : memref<8x8xf32, #tpu.memory_space<smem>>
    %71 = vector.broadcast %70 : f32 to vector<8x1xf32>
    %72 = arith.mulf %12, %71 : vector<8x1xf32>
    %c4_24 = arith.constant 4 : index
    %c1_25 = arith.constant 1 : index
    %73 = memref.load %arg3[%c4_24, %c1_25] : memref<8x8xf32, #tpu.memory_space<smem>>
    %74 = vector.broadcast %73 : f32 to vector<8x1xf32>
    %75 = arith.mulf %13, %74 : vector<8x1xf32>
    %76 = arith.addf %72, %75 : vector<8x1xf32>
    %c5_26 = arith.constant 5 : index
    %c1_27 = arith.constant 1 : index
    %77 = memref.load %arg3[%c5_26, %c1_27] : memref<8x8xf32, #tpu.memory_space<smem>>
    %78 = vector.broadcast %77 : f32 to vector<8x1xf32>
    %79 = arith.mulf %14, %78 : vector<8x1xf32>
    %80 = arith.addf %76, %79 : vector<8x1xf32>
    %c6_28 = arith.constant 6 : index
    %c1_29 = arith.constant 1 : index
    %81 = memref.load %arg3[%c6_28, %c1_29] : memref<8x8xf32, #tpu.memory_space<smem>>
    %82 = vector.broadcast %81 : f32 to vector<8x1xf32>
    %83 = arith.mulf %15, %82 : vector<8x1xf32>
    %84 = arith.addf %80, %83 : vector<8x1xf32>
    %c7_30 = arith.constant 7 : index
    %c1_31 = arith.constant 1 : index
    %85 = memref.load %arg3[%c7_30, %c1_31] : memref<8x8xf32, #tpu.memory_space<smem>>
    %86 = vector.broadcast %85 : f32 to vector<8x1xf32>
    %87 = arith.addf %84, %86 : vector<8x1xf32>
    %88 = vector.broadcast %87 : vector<8x1xf32> to vector<8x128xf32>
    %89 = vector.broadcast %69 : vector<1x128xf32> to vector<8x128xf32>
    %90 = arith.addf %88, %89 : vector<8x128xf32>
    %91 = vector.broadcast %6 : vector<1x128xf32> to vector<8x128xf32>
    %92 = arith.addf %90, %91 : vector<8x128xf32>
    %93 = vector.shape_cast %6 : vector<1x128xf32> to vector<1x128xf32>
    %94 = vector.broadcast %93 : vector<1x128xf32> to vector<8x128xf32>
    %95 = arith.select %19, %94, %92 : vector<8x128xi1>, vector<8x128xf32>
    %cst_32 = arith.constant 0.652173936 : f32
    %96 = vector.broadcast %cst_32 : f32 to vector<8x128xf32>
    %97 = arith.mulf %95, %96 : vector<8x128xf32>
    %c0_33 = arith.constant 0 : index
    %c2_34 = arith.constant 2 : index
    %98 = memref.load %arg3[%c0_33, %c2_34] : memref<8x8xf32, #tpu.memory_space<smem>>
    %99 = vector.broadcast %98 : f32 to vector<1x128xf32>
    %100 = arith.mulf %9, %99 : vector<1x128xf32>
    %c1_35 = arith.constant 1 : index
    %c2_36 = arith.constant 2 : index
    %101 = memref.load %arg3[%c1_35, %c2_36] : memref<8x8xf32, #tpu.memory_space<smem>>
    %102 = vector.broadcast %101 : f32 to vector<1x128xf32>
    %103 = arith.mulf %11, %102 : vector<1x128xf32>
    %104 = arith.addf %100, %103 : vector<1x128xf32>
    %c2_37 = arith.constant 2 : index
    %c2_38 = arith.constant 2 : index
    %105 = memref.load %arg3[%c2_37, %c2_38] : memref<8x8xf32, #tpu.memory_space<smem>>
    %106 = vector.broadcast %105 : f32 to vector<1x128xf32>
    %107 = arith.mulf %7, %106 : vector<1x128xf32>
    %108 = arith.addf %104, %107 : vector<1x128xf32>
    %c3_39 = arith.constant 3 : index
    %c2_40 = arith.constant 2 : index
    %109 = memref.load %arg3[%c3_39, %c2_40] : memref<8x8xf32, #tpu.memory_space<smem>>
    %110 = vector.broadcast %109 : f32 to vector<8x1xf32>
    %111 = arith.mulf %12, %110 : vector<8x1xf32>
    %c4_41 = arith.constant 4 : index
    %c2_42 = arith.constant 2 : index
    %112 = memref.load %arg3[%c4_41, %c2_42] : memref<8x8xf32, #tpu.memory_space<smem>>
    %113 = vector.broadcast %112 : f32 to vector<8x1xf32>
    %114 = arith.mulf %13, %113 : vector<8x1xf32>
    %115 = arith.addf %111, %114 : vector<8x1xf32>
    %c5_43 = arith.constant 5 : index
    %c2_44 = arith.constant 2 : index
    %116 = memref.load %arg3[%c5_43, %c2_44] : memref<8x8xf32, #tpu.memory_space<smem>>
    %117 = vector.broadcast %116 : f32 to vector<8x1xf32>
    %118 = arith.mulf %14, %117 : vector<8x1xf32>
    %119 = arith.addf %115, %118 : vector<8x1xf32>
    %c6_45 = arith.constant 6 : index
    %c2_46 = arith.constant 2 : index
    %120 = memref.load %arg3[%c6_45, %c2_46] : memref<8x8xf32, #tpu.memory_space<smem>>
    %121 = vector.broadcast %120 : f32 to vector<8x1xf32>
    %122 = arith.mulf %15, %121 : vector<8x1xf32>
    %123 = arith.addf %119, %122 : vector<8x1xf32>
    %c7_47 = arith.constant 7 : index
    %c2_48 = arith.constant 2 : index
    %124 = memref.load %arg3[%c7_47, %c2_48] : memref<8x8xf32, #tpu.memory_space<smem>>
    %125 = vector.broadcast %124 : f32 to vector<8x1xf32>
    %126 = arith.addf %123, %125 : vector<8x1xf32>
    %127 = vector.broadcast %126 : vector<8x1xf32> to vector<8x128xf32>
    %128 = vector.broadcast %108 : vector<1x128xf32> to vector<8x128xf32>
    %129 = arith.addf %127, %128 : vector<8x128xf32>
    %130 = vector.broadcast %7 : vector<1x128xf32> to vector<8x128xf32>
    %131 = arith.addf %129, %130 : vector<8x128xf32>
    %132 = vector.shape_cast %7 : vector<1x128xf32> to vector<1x128xf32>
    %133 = vector.broadcast %132 : vector<1x128xf32> to vector<8x128xf32>
    %134 = arith.select %19, %133, %131 : vector<8x128xi1>, vector<8x128xf32>
    %c0_49 = arith.constant 0 : index
    %c3_50 = arith.constant 3 : index
    %135 = memref.load %arg3[%c0_49, %c3_50] : memref<8x8xf32, #tpu.memory_space<smem>>
    %136 = vector.broadcast %135 : f32 to vector<1x128xf32>
    %137 = arith.mulf %9, %136 : vector<1x128xf32>
    %c1_51 = arith.constant 1 : index
    %c3_52 = arith.constant 3 : index
    %138 = memref.load %arg3[%c1_51, %c3_52] : memref<8x8xf32, #tpu.memory_space<smem>>
    %139 = vector.broadcast %138 : f32 to vector<1x128xf32>
    %140 = arith.mulf %11, %139 : vector<1x128xf32>
    %141 = arith.addf %137, %140 : vector<1x128xf32>
    %c2_53 = arith.constant 2 : index
    %c3_54 = arith.constant 3 : index
    %142 = memref.load %arg3[%c2_53, %c3_54] : memref<8x8xf32, #tpu.memory_space<smem>>
    %143 = vector.broadcast %142 : f32 to vector<1x128xf32>
    %144 = arith.mulf %7, %143 : vector<1x128xf32>
    %145 = arith.addf %141, %144 : vector<1x128xf32>
    %c3_55 = arith.constant 3 : index
    %c3_56 = arith.constant 3 : index
    %146 = memref.load %arg3[%c3_55, %c3_56] : memref<8x8xf32, #tpu.memory_space<smem>>
    %147 = vector.broadcast %146 : f32 to vector<8x1xf32>
    %148 = arith.mulf %12, %147 : vector<8x1xf32>
    %c4_57 = arith.constant 4 : index
    %c3_58 = arith.constant 3 : index
    %149 = memref.load %arg3[%c4_57, %c3_58] : memref<8x8xf32, #tpu.memory_space<smem>>
    %150 = vector.broadcast %149 : f32 to vector<8x1xf32>
    %151 = arith.mulf %13, %150 : vector<8x1xf32>
    %152 = arith.addf %148, %151 : vector<8x1xf32>
    %c5_59 = arith.constant 5 : index
    %c3_60 = arith.constant 3 : index
    %153 = memref.load %arg3[%c5_59, %c3_60] : memref<8x8xf32, #tpu.memory_space<smem>>
    %154 = vector.broadcast %153 : f32 to vector<8x1xf32>
    %155 = arith.mulf %14, %154 : vector<8x1xf32>
    %156 = arith.addf %152, %155 : vector<8x1xf32>
    %c6_61 = arith.constant 6 : index
    %c3_62 = arith.constant 3 : index
    %157 = memref.load %arg3[%c6_61, %c3_62] : memref<8x8xf32, #tpu.memory_space<smem>>
    %158 = vector.broadcast %157 : f32 to vector<8x1xf32>
    %159 = arith.mulf %15, %158 : vector<8x1xf32>
    %160 = arith.addf %156, %159 : vector<8x1xf32>
    %c7_63 = arith.constant 7 : index
    %c3_64 = arith.constant 3 : index
    %161 = memref.load %arg3[%c7_63, %c3_64] : memref<8x8xf32, #tpu.memory_space<smem>>
    %162 = vector.broadcast %161 : f32 to vector<8x1xf32>
    %163 = arith.addf %160, %162 : vector<8x1xf32>
    %164 = vector.broadcast %163 : vector<8x1xf32> to vector<8x128xf32>
    %165 = vector.broadcast %145 : vector<1x128xf32> to vector<8x128xf32>
    %166 = arith.addf %164, %165 : vector<8x128xf32>
    %cst_65 = arith.constant 0.000000e+00 : f32
    %167 = vector.broadcast %cst_65 : f32 to vector<8x128xf32>
    %168 = arith.subf %167, %166 : vector<8x128xf32>
    %169 = math.exp %168 : vector<8x128xf32>
    %cst_66 = arith.constant 1.000000e+00 : f32
    %170 = vector.broadcast %cst_66 : f32 to vector<8x128xf32>
    %171 = arith.addf %170, %169 : vector<8x128xf32>
    %172 = tpu.reciprocal %171 {approx = true} : vector<8x128xf32> -> vector<8x128xf32>
    %c0_67 = arith.constant 0 : index
    %c4_68 = arith.constant 4 : index
    %173 = memref.load %arg3[%c0_67, %c4_68] : memref<8x8xf32, #tpu.memory_space<smem>>
    %174 = vector.broadcast %173 : f32 to vector<1x128xf32>
    %175 = arith.mulf %9, %174 : vector<1x128xf32>
    %c1_69 = arith.constant 1 : index
    %c4_70 = arith.constant 4 : index
    %176 = memref.load %arg3[%c1_69, %c4_70] : memref<8x8xf32, #tpu.memory_space<smem>>
    %177 = vector.broadcast %176 : f32 to vector<1x128xf32>
    %178 = arith.mulf %11, %177 : vector<1x128xf32>
    %179 = arith.addf %175, %178 : vector<1x128xf32>
    %c2_71 = arith.constant 2 : index
    %c4_72 = arith.constant 4 : index
    %180 = memref.load %arg3[%c2_71, %c4_72] : memref<8x8xf32, #tpu.memory_space<smem>>
    %181 = vector.broadcast %180 : f32 to vector<1x128xf32>
    %182 = arith.mulf %7, %181 : vector<1x128xf32>
    %183 = arith.addf %179, %182 : vector<1x128xf32>
    %c3_73 = arith.constant 3 : index
    %c4_74 = arith.constant 4 : index
    %184 = memref.load %arg3[%c3_73, %c4_74] : memref<8x8xf32, #tpu.memory_space<smem>>
    %185 = vector.broadcast %184 : f32 to vector<8x1xf32>
    %186 = arith.mulf %12, %185 : vector<8x1xf32>
    %c4_75 = arith.constant 4 : index
    %c4_76 = arith.constant 4 : index
    %187 = memref.load %arg3[%c4_75, %c4_76] : memref<8x8xf32, #tpu.memory_space<smem>>
    %188 = vector.broadcast %187 : f32 to vector<8x1xf32>
    %189 = arith.mulf %13, %188 : vector<8x1xf32>
    %190 = arith.addf %186, %189 : vector<8x1xf32>
    %c5_77 = arith.constant 5 : index
    %c4_78 = arith.constant 4 : index
    %191 = memref.load %arg3[%c5_77, %c4_78] : memref<8x8xf32, #tpu.memory_space<smem>>
    %192 = vector.broadcast %191 : f32 to vector<8x1xf32>
    %193 = arith.mulf %14, %192 : vector<8x1xf32>
    %194 = arith.addf %190, %193 : vector<8x1xf32>
    %c6_79 = arith.constant 6 : index
    %c4_80 = arith.constant 4 : index
    %195 = memref.load %arg3[%c6_79, %c4_80] : memref<8x8xf32, #tpu.memory_space<smem>>
    %196 = vector.broadcast %195 : f32 to vector<8x1xf32>
    %197 = arith.mulf %15, %196 : vector<8x1xf32>
    %198 = arith.addf %194, %197 : vector<8x1xf32>
    %c7_81 = arith.constant 7 : index
    %c4_82 = arith.constant 4 : index
    %199 = memref.load %arg3[%c7_81, %c4_82] : memref<8x8xf32, #tpu.memory_space<smem>>
    %200 = vector.broadcast %199 : f32 to vector<8x1xf32>
    %201 = arith.addf %198, %200 : vector<8x1xf32>
    %202 = vector.broadcast %201 : vector<8x1xf32> to vector<8x128xf32>
    %203 = vector.broadcast %183 : vector<1x128xf32> to vector<8x128xf32>
    %204 = arith.addf %202, %203 : vector<8x128xf32>
    %cst_83 = arith.constant 0.000000e+00 : f32
    %205 = vector.broadcast %cst_83 : f32 to vector<8x128xf32>
    %206 = arith.subf %205, %204 : vector<8x128xf32>
    %207 = math.exp %206 : vector<8x128xf32>
    %cst_84 = arith.constant 1.000000e+00 : f32
    %208 = vector.broadcast %cst_84 : f32 to vector<8x128xf32>
    %209 = arith.addf %208, %207 : vector<8x128xf32>
    %210 = tpu.reciprocal %209 {approx = true} : vector<8x128xf32> -> vector<8x128xf32>
    %cst_85 = arith.constant 0.899999976 : f32
    %211 = vector.broadcast %cst_85 : f32 to vector<8x128xf32>
    %212 = arith.cmpf ogt, %172, %211 : vector<8x128xf32>
    %213 = arith.ori %212, %19 : vector<8x128xi1>
    %214 = arith.extui %213 : vector<8x128xi1> to vector<8x128xi32>
    %215 = arith.sitofp %214 : vector<8x128xi32> to vector<8x128xf32>
    %c0_86 = arith.constant 0 : index
    %c0_87 = arith.constant 0 : index
    %c0_88 = arith.constant 0 : index
    %c0_89 = arith.constant 0 : index
    %216 = vector.load %arg4[%c0_86, %c0_87, %c0_88, %c0_89] : memref<1x8x8x128xf32, #tpu.memory_space<vmem>>, vector<1x1x8x128xf32>
    %217 = vector.shape_cast %216 : vector<1x1x8x128xf32> to vector<8x128xf32>
    %218 = vector.shape_cast %58 : vector<8x128xf32> to vector<1x1x8x128xf32>
    tpu.vector_store %arg4[%c0_86, %c0_87, %c0_88, %c0_89], %218 {strides = array<i32>} : memref<1x8x8x128xf32, #tpu.memory_space<vmem>>, vector<1x1x8x128xf32>,
    %c0_90 = arith.constant 0 : index
    %c1_91 = arith.constant 1 : index
    %c0_92 = arith.constant 0 : index
    %c0_93 = arith.constant 0 : index
    %219 = vector.load %arg4[%c0_90, %c1_91, %c0_92, %c0_93] : memref<1x8x8x128xf32, #tpu.memory_space<vmem>>, vector<1x1x8x128xf32>
    %220 = vector.shape_cast %219 : vector<1x1x8x128xf32> to vector<8x128xf32>
    %221 = vector.shape_cast %97 : vector<8x128xf32> to vector<1x1x8x128xf32>
    tpu.vector_store %arg4[%c0_90, %c1_91, %c0_92, %c0_93], %221 {strides = array<i32>} : memref<1x8x8x128xf32, #tpu.memory_space<vmem>>, vector<1x1x8x128xf32>,
    %c0_94 = arith.constant 0 : index
    %c2_95 = arith.constant 2 : index
    %c0_96 = arith.constant 0 : index
    %c0_97 = arith.constant 0 : index
    %222 = vector.load %arg4[%c0_94, %c2_95, %c0_96, %c0_97] : memref<1x8x8x128xf32, #tpu.memory_space<vmem>>, vector<1x1x8x128xf32>
    %223 = vector.shape_cast %222 : vector<1x1x8x128xf32> to vector<8x128xf32>
    %224 = vector.shape_cast %134 : vector<8x128xf32> to vector<1x1x8x128xf32>
    tpu.vector_store %arg4[%c0_94, %c2_95, %c0_96, %c0_97], %224 {strides = array<i32>} : memref<1x8x8x128xf32, #tpu.memory_space<vmem>>, vector<1x1x8x128xf32>,
    %c0_98 = arith.constant 0 : index
    %c3_99 = arith.constant 3 : index
    %c0_100 = arith.constant 0 : index
    %c0_101 = arith.constant 0 : index
    %225 = vector.load %arg4[%c0_98, %c3_99, %c0_100, %c0_101] : memref<1x8x8x128xf32, #tpu.memory_space<vmem>>, vector<1x1x8x128xf32>
    %226 = vector.shape_cast %225 : vector<1x1x8x128xf32> to vector<8x128xf32>
    %227 = vector.shape_cast %215 : vector<8x128xf32> to vector<1x1x8x128xf32>
    tpu.vector_store %arg4[%c0_98, %c3_99, %c0_100, %c0_101], %227 {strides = array<i32>} : memref<1x8x8x128xf32, #tpu.memory_space<vmem>>, vector<1x1x8x128xf32>,
    %c0_102 = arith.constant 0 : index
    %c4_103 = arith.constant 4 : index
    %c0_104 = arith.constant 0 : index
    %c0_105 = arith.constant 0 : index
    %228 = vector.load %arg4[%c0_102, %c4_103, %c0_104, %c0_105] : memref<1x8x8x128xf32, #tpu.memory_space<vmem>>, vector<1x1x8x128xf32>
    %229 = vector.shape_cast %228 : vector<1x1x8x128xf32> to vector<8x128xf32>
    %230 = vector.shape_cast %210 : vector<8x128xf32> to vector<1x1x8x128xf32>
    tpu.vector_store %arg4[%c0_102, %c4_103, %c0_104, %c0_105], %230 {strides = array<i32>} : memref<1x8x8x128xf32, #tpu.memory_space<vmem>>, vector<1x1x8x128xf32>,
    %cst_106 = arith.constant 8.000000e+00 : f32
    %231 = vector.broadcast %cst_106 : f32 to vector<8x128xf32>
    %232 = arith.subf %58, %231 : vector<8x128xf32>
    %233 = arith.mulf %232, %134 : vector<8x128xf32>
    %cst_107 = arith.constant 6.250000e-02 : f32
    %234 = vector.broadcast %cst_107 : f32 to vector<8x128xf32>
    %235 = arith.mulf %233, %234 : vector<8x128xf32>
    %c0_108 = arith.constant 0 : index
    %c5_109 = arith.constant 5 : index
    %c0_110 = arith.constant 0 : index
    %c0_111 = arith.constant 0 : index
    %236 = vector.load %arg4[%c0_108, %c5_109, %c0_110, %c0_111] : memref<1x8x8x128xf32, #tpu.memory_space<vmem>>, vector<1x1x8x128xf32>
    %237 = vector.shape_cast %236 : vector<1x1x8x128xf32> to vector<8x128xf32>
    %238 = vector.shape_cast %235 : vector<8x128xf32> to vector<1x1x8x128xf32>
    tpu.vector_store %arg4[%c0_108, %c5_109, %c0_110, %c0_111], %238 {strides = array<i32>} : memref<1x8x8x128xf32, #tpu.memory_space<vmem>>, vector<1x1x8x128xf32>,
    %cst_112 = arith.constant 8.000000e+00 : f32
    %239 = vector.broadcast %cst_112 : f32 to vector<8x128xf32>
    %240 = arith.subf %97, %239 : vector<8x128xf32>
    %241 = arith.mulf %240, %134 : vector<8x128xf32>
    %cst_113 = arith.constant 6.250000e-02 : f32
    %242 = vector.broadcast %cst_113 : f32 to vector<8x128xf32>
    %243 = arith.mulf %241, %242 : vector<8x128xf32>
    %c0_114 = arith.constant 0 : index
    %c6_115 = arith.constant 6 : index
    %c0_116 = arith.constant 0 : index
    %c0_117 = arith.constant 0 : index
    %244 = vector.load %arg4[%c0_114, %c6_115, %c0_116, %c0_117] : memref<1x8x8x128xf32, #tpu.memory_space<vmem>>, vector<1x1x8x128xf32>
    %245 = vector.shape_cast %244 : vector<1x1x8x128xf32> to vector<8x128xf32>
    %246 = vector.shape_cast %243 : vector<8x128xf32> to vector<1x1x8x128xf32>
    tpu.vector_store %arg4[%c0_114, %c6_115, %c0_116, %c0_117], %246 {strides = array<i32>} : memref<1x8x8x128xf32, #tpu.memory_space<vmem>>, vector<1x1x8x128xf32>,
    %c0_118 = arith.constant 0 : index
    %c7_119 = arith.constant 7 : index
    %c0_120 = arith.constant 0 : index
    %c0_121 = arith.constant 0 : index
    %247 = vector.load %arg4[%c0_118, %c7_119, %c0_120, %c0_121] : memref<1x8x8x128xf32, #tpu.memory_space<vmem>>, vector<1x1x8x128xf32>
    %248 = vector.shape_cast %247 : vector<1x1x8x128xf32> to vector<8x128xf32>
    %249 = vector.shape_cast %134 : vector<8x128xf32> to vector<1x1x8x128xf32>
    tpu.vector_store %arg4[%c0_118, %c7_119, %c0_120, %c0_121], %249 {strides = array<i32>} : memref<1x8x8x128xf32, #tpu.memory_space<vmem>>, vector<1x1x8x128xf32>,
    return
  }
  func.func @transform_0(%arg0: i32) -> (i32, i32, i32) {
    %c0_i32 = arith.constant 0 : i32
    %c0_i32_0 = arith.constant 0 : i32
    %c0_i32_1 = arith.constant 0 : i32
    return %arg0, %c0_i32, %c0_i32_0 : i32, i32, i32
  }
  func.func @transform_1(%arg0: i32) -> (i32, i32, i32) {
    %c0_i32 = arith.constant 0 : i32
    %c0_i32_0 = arith.constant 0 : i32
    %c0_i32_1 = arith.constant 0 : i32
    return %arg0, %c0_i32, %c0_i32_0 : i32, i32, i32
  }
  func.func @transform_2(%arg0: i32) -> (i32, i32) {
    %c0_i32 = arith.constant 0 : i32
    %c0_i32_0 = arith.constant 0 : i32
    %c0_i32_1 = arith.constant 0 : i32
    return %c0_i32, %c0_i32_0 : i32, i32
  }
  func.func @transform_3(%arg0: i32) -> (i32, i32, i32, i32) {
    %c0_i32 = arith.constant 0 : i32
    %c0_i32_0 = arith.constant 0 : i32
    %c0_i32_1 = arith.constant 0 : i32
    %c0_i32_2 = arith.constant 0 : i32
    return %arg0, %c0_i32, %c0_i32_0, %c0_i32_1 : i32, i32, i32, i32
  }
}

</mosaic_0001>

<llo_original>
// kernel: predictor3d_forward.4
$region0: #{predictor3d_forward.4}
  #allocation0 [shape = 'u32[]', space=smem, size = 0x4, offset = 0x4, fixed_abs, tag = 'smem constant byte address 0x4 - core index']
  #allocation1 [shape = 'u32[72,128]{1,0:T(1,128)}', space=vmem, size = 0x9000, scoped, tag = 'internal scratch']
  %s0 = inlined_call_operand.vmem [shape: f32[24,16], index: 0, kind: input, shape index: {}]
  %s1 = inlined_call_operand.vmem [shape: f32[16,32], index: 1, kind: input, shape index: {}]
  %s2 = inlined_call_operand.vmem [shape: f32[8,16,16], index: 2, kind: input, shape index: {}]
  %s3 = inlined_call_operand.vmem [shape: f32[8,24,32], index: 3, kind: output, shape index: {}]
  %s4 = sld [smem:[#allocation0]]
  $region22: #{predictor3d_forward.4} parent=0
    _
  %s6 = ssub.s32 1, %s4
  %s7 = scalar_select 0, %s6, %s4
  // Predicated region
  $region2: #{predictor3d_forward.4} parent=0 // pred_check
    _
  $region3: #{predictor3d_forward.4} parent=0 // pred_check_branch
    %9 = sbr.rel (0) target = $region5
  $region4: #{predictor3d_forward.4} parent=0 // pred_region
    _
  $region5: #{predictor3d_forward.4} parent=0 // pred_fallthru
    _
  // Predicated region
  $region6: #{predictor3d_forward.4} parent=0 // pred_check
    _
  $region7: #{predictor3d_forward.4} parent=0 // pred_check_branch
    %11 = sbr.rel (0) target = $region9
  $region8: #{predictor3d_forward.4} parent=0 // pred_region
    _
  $region9: #{predictor3d_forward.4} parent=0 // pred_fallthru
    _
  // Predicated region
  $region10: #{predictor3d_forward.4} parent=0 // pred_check
    _
  $region11: #{predictor3d_forward.4} parent=0 // pred_check_branch
    %13 = sbr.rel (0) target = $region13
  $region12: #{predictor3d_forward.4} parent=0 // pred_region
    _
  $region13: #{predictor3d_forward.4} parent=0 // pred_fallthru
    _
  %v14 = vld [vmem:[%s2] sm:$0xff]
  %v15 = vld [vmem:[%s2 + $0x8] sm:$0xff]
  %v16 = vld [vmem:[%s2 + $0x10] sm:$0xff]
  %v17 = vld [vmem:[%s2 + $0x18] sm:$0xff]
  %v18 = vld [vmem:[%s2 + $0x20] sm:$0xff]
  %v19 = vld [vmem:[%s2 + $0x28] sm:$0xff]
  %v20 = vld [vmem:[%s2 + $0x30] sm:$0xff]
  %v21 = vld [vmem:[%s2 + $0x38] sm:$0xff]
  %v22 = vld [vmem:[%s2 + $0x40] sm:$0xff]
  %v23 = vld [vmem:[%s2 + $0x48] sm:$0xff]
  %v24 = vld [vmem:[%s2 + $0x50] sm:$0xff]
  %v25 = vld [vmem:[%s2 + $0x58] sm:$0xff]
  %v26 = vld [vmem:[%s2 + $0x60] sm:$0xff]
  %v27 = vld [vmem:[%s2 + $0x68] sm:$0xff]
  %v28 = vld [vmem:[%s2 + $0x70] sm:$0xff]
  %v29 = vld [vmem:[%s2 + $0x78] sm:$0xff]
  %v30 = vld [vmem:[%s1] sm:$0xff]
  %v31 = vld [vmem:[%s1 + $0x8] sm:$0xff]
  %vm32 = vcmask 130048
  %v34 = vsel %vm32, %v14, 0
  %v37 = vsel %vm32, %v15, 0
  %v40 = vsel %vm32, %v16, 0
  %v43 = vsel %vm32, %v17, 0
  %v46 = vsel %vm32, %v18, 0
  %v49 = vsel %vm32, %v19, 0
  %v52 = vsel %vm32, %v20, 0
  %v55 = vsel %vm32, %v21, 0
  %v58 = vsel %vm32, %v22, 0
  %v61 = vsel %vm32, %v23, 0
  %v64 = vsel %vm32, %v24, 0
  %v67 = vsel %vm32, %v25, 0
  %v70 = vsel %vm32, %v26, 0
  %v73 = vsel %vm32, %v27, 0
  %v76 = vsel %vm32, %v28, 0
  %v79 = vsel %vm32, %v29, 0
  %81 = vmatpush.msra.mxu0 0.0
  %82 = vmatpush.msra.mxu0 0.0
  %83 = vmatpush.msra.mxu0 0.0
  %84 = vmatpush.msra.mxu0 0.0
  %85 = vmatpush.msra.mxu0 0.0
  %86 = vmatpush.msra.mxu0 0.0
  %87 = vmatpush.msra.mxu0 0.0
  %88 = vmatpush.msra.mxu0 0.0
  %89 = vmatpush.msra.mxu0 0.0
  %90 = vmatpush.msra.mxu0 0.0
  %91 = vmatpush.msra.mxu0 0.0
  %92 = vmatpush.msra.mxu0 0.0
  %93 = vmatpush.msra.mxu0 0.0
  %94 = vmatpush.msra.mxu0 0.0
  %95 = vmatpush.msra.mxu0 %v31
  %96 = vmatpush.msra.mxu0 %v30
  %97 = vmatmul.f32.gmra.mxu0 %v34
  %v98 = vpop.f32.mrf.mxu0
  %v99 = vadd.f32 0.0, %v98
  %100 = vmatmul.f32.gmra.mxu0 %v37
  %v101 = vpop.f32.mrf.mxu0
  %v102 = vadd.f32 0.0, %v101
  %103 = vmatmul.f32.gmra.mxu0 %v40
  %v104 = vpop.f32.mrf.mxu0
  %v105 = vadd.f32 0.0, %v104
  %106 = vmatmul.f32.gmra.mxu0 %v43
  %v107 = vpop.f32.mrf.mxu0
  %v108 = vadd.f32 0.0, %v107
  %109 = vmatmul.f32.gmra.mxu0 %v46
  %v110 = vpop.f32.mrf.mxu0
  %v111 = vadd.f32 0.0, %v110
  %112 = vmatmul.f32.gmra.mxu0 %v49
  %v113 = vpop.f32.mrf.mxu0
  %v114 = vadd.f32 0.0, %v113
  %115 = vmatmul.f32.gmra.mxu0 %v52
  %v116 = vpop.f32.mrf.mxu0
  %v117 = vadd.f32 0.0, %v116
  %118 = vmatmul.f32.gmra.mxu0 %v55
  %v119 = vpop.f32.mrf.mxu0
  %v120 = vadd.f32 0.0, %v119
  %121 = vmatmul.f32.gmra.mxu0 %v58
  %v122 = vpop.f32.mrf.mxu0
  %v123 = vadd.f32 0.0, %v122
  %124 = vmatmul.f32.gmra.mxu0 %v61
  %v125 = vpop.f32.mrf.mxu0
  %v126 = vadd.f32 0.0, %v125
  %127 = vmatmul.f32.gmra.mxu0 %v64
  %v128 = vpop.f32.mrf.mxu0
  %v129 = vadd.f32 0.0, %v128
  %130 = vmatmul.f32.gmra.mxu0 %v67
  %v131 = vpop.f32.mrf.mxu0
  %v132 = vadd.f32 0.0, %v131
  %133 = vmatmul.f32.gmra.mxu0 %v70
  %v134 = vpop.f32.mrf.mxu0
  %v135 = vadd.f32 0.0, %v134
  %136 = vmatmul.f32.gmra.mxu0 %v73
  %v137 = vpop.f32.mrf.mxu0
  %v138 = vadd.f32 0.0, %v137
  %139 = vmatmul.f32.gmra.mxu0 %v76
  %v140 = vpop.f32.mrf.mxu0
  %v141 = vadd.f32 0.0, %v140
  %142 = vmatmul.f32.gmra.mxu0 %v79
  %v143 = vpop.f32.mrf.mxu0
  %v144 = vadd.f32 0.0, %v143
  %145 = vdwg.mxu0
  %v146 = vld [vmem:[%s0] sm:$0xff]
  %v147 = vld [vmem:[%s0 + $0x8] sm:$0xff]
  %v148 = vld [vmem:[%s0 + $0x10] sm:$0xff]
  %v150 = vsel %vm32, %v146, 0
  %v153 = vsel %vm32, %v147, 0
  %v156 = vsel %vm32, %v148, 0
  %158 = vmatpush.msra.mxu0 0.0
  %159 = vmatpush.msra.mxu0 0.0
  %160 = vmatpush.msra.mxu0 0.0
  %161 = vmatpush.msra.mxu0 0.0
  %162 = vmatpush.msra.mxu0 0.0
  %163 = vmatpush.msra.mxu0 0.0
  %164 = vmatpush.msra.mxu0 0.0
  %165 = vmatpush.msra.mxu0 0.0
  %166 = vmatpush.msra.mxu0 0.0
  %167 = vmatpush.msra.mxu0 0.0
  %168 = vmatpush.msra.mxu0 0.0
  %169 = vmatpush.msra.mxu0 0.0
  %170 = vmatpush.msra.mxu0 0.0
  %171 = vmatpush.msra.mxu0 0.0
  %172 = vmatpush.msra.mxu0 %v102
  %173 = vmatpush.msra.mxu0 %v99
  %174 = vmatmul.f32.gmra.mxu0 %v150
  %v175 = vpop.f32.mrf.mxu0
  %v176 = vadd.f32 0.0, %v175
  %177 = vmatmul.f32.gmra.mxu0 %v153
  %v178 = vpop.f32.mrf.mxu0
  %v179 = vadd.f32 0.0, %v178
  %180 = vmatmul.f32.gmra.mxu0 %v156
  %v181 = vpop.f32.mrf.mxu0
  %v182 = vadd.f32 0.0, %v181
  %183 = vdwg.mxu0
  %vm184 = vcmask 261120
  %185 = vst.msk [vmem:[%s3] sm:$0xff] %vm184, %v176
  %186 = vst.msk [vmem:[%s3 + $0x8] sm:$0xff] %vm184, %v179
  %187 = vst.msk [vmem:[%s3 + $0x10] sm:$0xff] %vm184, %v182
  %188 = vmatpush.msra.mxu0 0.0
  %189 = vmatpush.msra.mxu0 0.0
  %190 = vmatpush.msra.mxu0 0.0
  %191 = vmatpush.msra.mxu0 0.0
  %192 = vmatpush.msra.mxu0 0.0
  %193 = vmatpush.msra.mxu0 0.0
  %194 = vmatpush.msra.mxu0 0.0
  %195 = vmatpush.msra.mxu0 0.0
  %196 = vmatpush.msra.mxu0 0.0
  %197 = vmatpush.msra.mxu0 0.0
  %198 = vmatpush.msra.mxu0 0.0
  %199 = vmatpush.msra.mxu0 0.0
  %200 = vmatpush.msra.mxu0 0.0
  %201 = vmatpush.msra.mxu0 0.0
  %202 = vmatpush.msra.mxu0 %v108
  %203 = vmatpush.msra.mxu0 %v105
  %204 = vmatmul.f32.gmra.mxu0 %v150
  %v205 = vpop.f32.mrf.mxu0
  %v206 = vadd.f32 0.0, %v205
  %207 = vmatmul.f32.gmra.mxu0 %v153
  %v208 = vpop.f32.mrf.mxu0
  %v209 = vadd.f32 0.0, %v208
  %210 = vmatmul.f32.gmra.mxu0 %v156
  %v211 = vpop.f32.mrf.mxu0
  %v212 = vadd.f32 0.0, %v211
  %213 = vdwg.mxu0
  %s214 = scalar_lea.vmem %s3, 24
  %215 = vst.msk [vmem:[%s214] sm:$0xff] %vm184, %v206
  %216 = vst.msk [vmem:[%s214 + $0x8] sm:$0xff] %vm184, %v209
  %217 = vst.msk [vmem:[%s214 + $0x10] sm:$0xff] %vm184, %v212
  %218 = vmatpush.msra.mxu0 0.0
  %219 = vmatpush.msra.mxu0 0.0
  %220 = vmatpush.msra.mxu0 0.0
  %221 = vmatpush.msra.mxu0 0.0
  %222 = vmatpush.msra.mxu0 0.0
  %223 = vmatpush.msra.mxu0 0.0
  %224 = vmatpush.msra.mxu0 0.0
  %225 = vmatpush.msra.mxu0 0.0
  %226 = vmatpush.msra.mxu0 0.0
  %227 = vmatpush.msra.mxu0 0.0
  %228 = vmatpush.msra.mxu0 0.0
  %229 = vmatpush.msra.mxu0 0.0
  %230 = vmatpush.msra.mxu0 0.0
  %231 = vmatpush.msra.mxu0 0.0
  %232 = vmatpush.msra.mxu0 %v114
  %233 = vmatpush.msra.mxu0 %v111
  %234 = vmatmul.f32.gmra.mxu0 %v150
  %v235 = vpop.f32.mrf.mxu0
  %v236 = vadd.f32 0.0, %v235
  %237 = vmatmul.f32.gmra.mxu0 %v153
  %v238 = vpop.f32.mrf.mxu0
  %v239 = vadd.f32 0.0, %v238
  %240 = vmatmul.f32.gmra.mxu0 %v156
  %v241 = vpop.f32.mrf.mxu0
  %v242 = vadd.f32 0.0, %v241
  %243 = vdwg.mxu0
  %s244 = scalar_lea.vmem %s3, 48
  %245 = vst.msk [vmem:[%s244] sm:$0xff] %vm184, %v236
  %246 = vst.msk [vmem:[%s244 + $0x8] sm:$0xff] %vm184, %v239
  %247 = vst.msk [vmem:[%s244 + $0x10] sm:$0xff] %vm184, %v242
  %248 = vmatpush.msra.mxu0 0.0
  %249 = vmatpush.msra.mxu0 0.0
  %250 = vmatpush.msra.mxu0 0.0
  %251 = vmatpush.msra.mxu0 0.0
  %252 = vmatpush.msra.mxu0 0.0
  %253 = vmatpush.msra.mxu0 0.0
  %254 = vmatpush.msra.mxu0 0.0
  %255 = vmatpush.msra.mxu0 0.0
  %256 = vmatpush.msra.mxu0 0.0
  %257 = vmatpush.msra.mxu0 0.0
  %258 = vmatpush.msra.mxu0 0.0
  %259 = vmatpush.msra.mxu0 0.0
  %260 = vmatpush.msra.mxu0 0.0
  %261 = vmatpush.msra.mxu0 0.0
  %262 = vmatpush.msra.mxu0 %v120
  %263 = vmatpush.msra.mxu0 %v117
  %264 = vmatmul.f32.gmra.mxu0 %v150
  %v265 = vpop.f32.mrf.mxu0
  %v266 = vadd.f32 0.0, %v265
  %267 = vmatmul.f32.gmra.mxu0 %v153
  %v268 = vpop.f32.mrf.mxu0
  %v269 = vadd.f32 0.0, %v268
  %270 = vmatmul.f32.gmra.mxu0 %v156
  %v271 = vpop.f32.mrf.mxu0
  %v272 = vadd.f32 0.0, %v271
  %273 = vdwg.mxu0
  %s274 = scalar_lea.vmem %s3, 72
  %275 = vst.msk [vmem:[%s274] sm:$0xff] %vm184, %v266
  %276 = vst.msk [vmem:[%s274 + $0x8] sm:$0xff] %vm184, %v269
  %277 = vst.msk [vmem:[%s274 + $0x10] sm:$0xff] %vm184, %v272
  %278 = vmatpush.msra.mxu0 0.0
  %279 = vmatpush.msra.mxu0 0.0
  %280 = vmatpush.msra.mxu0 0.0
  %281 = vmatpush.msra.mxu0 0.0
  %282 = vmatpush.msra.mxu0 0.0
  %283 = vmatpush.msra.mxu0 0.0
  %284 = vmatpush.msra.mxu0 0.0
  %285 = vmatpush.msra.mxu0 0.0
  %286 = vmatpush.msra.mxu0 0.0
  %287 = vmatpush.msra.mxu0 0.0
  %288 = vmatpush.msra.mxu0 0.0
  %289 = vmatpush.msra.mxu0 0.0
  %290 = vmatpush.msra.mxu0 0.0
  %291 = vmatpush.msra.mxu0 0.0
  %292 = vmatpush.msra.mxu0 %v126
  %293 = vmatpush.msra.mxu0 %v123
  %294 = vmatmul.f32.gmra.mxu0 %v150
  %v295 = vpop.f32.mrf.mxu0
  %v296 = vadd.f32 0.0, %v295
  %297 = vmatmul.f32.gmra.mxu0 %v153
  %v298 = vpop.f32.mrf.mxu0
  %v299 = vadd.f32 0.0, %v298
  %300 = vmatmul.f32.gmra.mxu0 %v156
  %v301 = vpop.f32.mrf.mxu0
  %v302 = vadd.f32 0.0, %v301
  %303 = vdwg.mxu0
  %s304 = scalar_lea.vmem %s3, 96
  %305 = vst.msk [vmem:[%s304] sm:$0xff] %vm184, %v296
  %306 = vst.msk [vmem:[%s304 + $0x8] sm:$0xff] %vm184, %v299
  %307 = vst.msk [vmem:[%s304 + $0x10] sm:$0xff] %vm184, %v302
  %308 = vmatpush.msra.mxu0 0.0
  %309 = vmatpush.msra.mxu0 0.0
  %310 = vmatpush.msra.mxu0 0.0
  %311 = vmatpush.msra.mxu0 0.0
  %312 = vmatpush.msra.mxu0 0.0
  %313 = vmatpush.msra.mxu0 0.0
  %314 = vmatpush.msra.mxu0 0.0
  %315 = vmatpush.msra.mxu0 0.0
  %316 = vmatpush.msra.mxu0 0.0
  %317 = vmatpush.msra.mxu0 0.0
  %318 = vmatpush.msra.mxu0 0.0
  %319 = vmatpush.msra.mxu0 0.0
  %320 = vmatpush.msra.mxu0 0.0
  %321 = vmatpush.msra.mxu0 0.0
  %322 = vmatpush.msra.mxu0 %v132
  %323 = vmatpush.msra.mxu0 %v129
  %324 = vmatmul.f32.gmra.mxu0 %v150
  %v325 = vpop.f32.mrf.mxu0
  %v326 = vadd.f32 0.0, %v325
  %327 = vmatmul.f32.gmra.mxu0 %v153
  %v328 = vpop.f32.mrf.mxu0
  %v329 = vadd.f32 0.0, %v328
  %330 = vmatmul.f32.gmra.mxu0 %v156
  %v331 = vpop.f32.mrf.mxu0
  %v332 = vadd.f32 0.0, %v331
  %333 = vdwg.mxu0
  %s334 = scalar_lea.vmem %s3, 120
  %335 = vst.msk [vmem:[%s334] sm:$0xff] %vm184, %v326
  %336 = vst.msk [vmem:[%s334 + $0x8] sm:$0xff] %vm184, %v329
  %337 = vst.msk [vmem:[%s334 + $0x10] sm:$0xff] %vm184, %v332
  %338 = vmatpush.msra.mxu0 0.0
  %339 = vmatpush.msra.mxu0 0.0
  %340 = vmatpush.msra.mxu0 0.0
  %341 = vmatpush.msra.mxu0 0.0
  %342 = vmatpush.msra.mxu0 0.0
  %343 = vmatpush.msra.mxu0 0.0
  %344 = vmatpush.msra.mxu0 0.0
  %345 = vmatpush.msra.mxu0 0.0
  %346 = vmatpush.msra.mxu0 0.0
  %347 = vmatpush.msra.mxu0 0.0
  %348 = vmatpush.msra.mxu0 0.0
  %349 = vmatpush.msra.mxu0 0.0
  %350 = vmatpush.msra.mxu0 0.0
  %351 = vmatpush.msra.mxu0 0.0
  %352 = vmatpush.msra.mxu0 %v138
  %353 = vmatpush.msra.mxu0 %v135
  %354 = vmatmul.f32.gmra.mxu0 %v150
  %v355 = vpop.f32.mrf.mxu0
  %v356 = vadd.f32 0.0, %v355
  %357 = vmatmul.f32.gmra.mxu0 %v153
  %v358 = vpop.f32.mrf.mxu0
  %v359 = vadd.f32 0.0, %v358
  %360 = vmatmul.f32.gmra.mxu0 %v156
  %v361 = vpop.f32.mrf.mxu0
  %v362 = vadd.f32 0.0, %v361
  %363 = vdwg.mxu0
  %s364 = scalar_lea.vmem %s3, 144
  %365 = vst.msk [vmem:[%s364] sm:$0xff] %vm184, %v356
  %366 = vst.msk [vmem:[%s364 + $0x8] sm:$0xff] %vm184, %v359
  %367 = vst.msk [vmem:[%s364 + $0x10] sm:$0xff] %vm184, %v362
  %368 = vmatpush.msra.mxu0 0.0
  %369 = vmatpush.msra.mxu0 0.0
  %370 = vmatpush.msra.mxu0 0.0
  %371 = vmatpush.msra.mxu0 0.0
  %372 = vmatpush.msra.mxu0 0.0
  %373 = vmatpush.msra.mxu0 0.0
  %374 = vmatpush.msra.mxu0 0.0
  %375 = vmatpush.msra.mxu0 0.0
  %376 = vmatpush.msra.mxu0 0.0
  %377 = vmatpush.msra.mxu0 0.0
  %378 = vmatpush.msra.mxu0 0.0
  %379 = vmatpush.msra.mxu0 0.0
  %380 = vmatpush.msra.mxu0 0.0
  %381 = vmatpush.msra.mxu0 0.0
  %382 = vmatpush.msra.mxu0 %v144
  %383 = vmatpush.msra.mxu0 %v141
  %384 = vmatmul.f32.gmra.mxu0 %v150
  %v385 = vpop.f32.mrf.mxu0
  %v386 = vadd.f32 0.0, %v385
  %387 = vmatmul.f32.gmra.mxu0 %v153
  %v388 = vpop.f32.mrf.mxu0
  %v389 = vadd.f32 0.0, %v388
  %390 = vmatmul.f32.gmra.mxu0 %v156
  %v391 = vpop.f32.mrf.mxu0
  %v392 = vadd.f32 0.0, %v391
  %393 = vdwg.mxu0
  %s394 = scalar_lea.vmem %s3, 168
  %395 = vst.msk [vmem:[%s394] sm:$0xff] %vm184, %v386
  %396 = vst.msk [vmem:[%s394 + $0x8] sm:$0xff] %vm184, %v389
  %397 = vst.msk [vmem:[%s394 + $0x10] sm:$0xff] %vm184, %v392
  // Predicated region
  $region14: #{predictor3d_forward.4} parent=0 // pred_check
    _
  $region15: #{predictor3d_forward.4} parent=0 // pred_check_branch
    %399 = sbr.rel (0) target = $region17
  $region16: #{predictor3d_forward.4} parent=0 // pred_region
    _
  $region17: #{predictor3d_forward.4} parent=0 // pred_fallthru
    _
  // Predicated region
  $region18: #{predictor3d_forward.4} parent=0 // pred_check
    _
  $region19: #{predictor3d_forward.4} parent=0 // pred_check_branch
    %401 = sbr.rel (0) target = $region21
  $region20: #{predictor3d_forward.4} parent=0 // pred_region
    _
  $region21: #{predictor3d_forward.4} parent=0 // pred_fallthru
    _

// kernel: predictor3d_forward.5
$region0: #{predictor3d_forward.5}
  #allocation0 [shape = 'u32[]', space=smem, size = 0x4, offset = 0x4, fixed_abs, tag = 'smem constant byte address 0x4 - core index']
  #allocation1 [shape = 'u32[72,128]{1,0:T(1,128)}', space=vmem, size = 0x9000, scoped, tag = 'internal scratch']
  %s0 = inlined_call_operand.vmem [shape: f32[2,4,128], index: 0, kind: input, shape index: {}]
  %s1 = inlined_call_operand.vmem [shape: f32[2,8,4], index: 1, kind: input, shape index: {}]
  %s2 = inlined_call_operand.vmem [shape: f32[8,8], index: 2, kind: input, shape index: {}]
  %s3 = inlined_call_operand.vmem [shape: f32[2,8,8,128], index: 3, kind: output, shape index: {}]
  %s4 = sld [smem:[#allocation0]]
  $region49: #{predictor3d_forward.5} parent=0
    _
  %s6 = ssub.s32 1, %s4
  %s7 = scalar_select 0, %s6, %s4
  $region1: #{predictor3d_forward.5} parent=0
    #allocation2 [shape = 'u8[4096]{0}', space=smem, size = 0x1000, scoped, tag = 'input window, operand 2, single buffered']
    #allocation3 [shape = 's32[2]{0}', space=sflag, size = 0x8, scoped, tag = 'scoped memory for predictor3d_forward.5']
    %8 = vsyncpa [#allocation3], 0
    loop: start=0, step=1, limit=4
    $region2: #{predictor3d_forward.5} parent=1 // loop_pre_header
      _
    $region3: #{predictor3d_forward.5} parent=1 // loop_header
      %s10 = sphi 0, %s14
      %p11 = scmp.ge.s32.totalorder %s10, 4
      %s20 = sphi 0, %s22
      %s23 = sphi 0, %s20
      %s24 = sphi 0, %s23
      %s40 = sphi 0, %s24
      %s46 = sphi 0, %s48
      %s49 = sphi 0, %s46
      %s50 = sphi 0, %s49
      %s66 = sphi 0, %s50
      %s70 = sphi 0, %s70
      %s72 = sphi 0, %s70
      %s73 = sphi 0, %s72
      %s87 = sphi 0, %s73
      %s93 = sphi 0, %s95
      %s96 = sphi 0, %s93
      %s97 = sphi 0, %s96
      %s113 = sphi 0, %s97
    $region4: #{predictor3d_forward.5} parent=1 // loop_header_branch
      %13 = sbr.rel (%p11) target = $region8
    $region5: #{predictor3d_forward.5} parent=1 // loop_body
      %s15 = ssub.s32 %s10, 1
      %s16 = ssub.s32 %s10, 2
      %s17 = sadd.s32 %s10, 1
      %s18 = ssub.s32 %s10, %s17
      %p19 = scmp.eq.s32.totalorder %s18, 0
      %s21 = sadd.s32 %s20, 1
      %s22 = scalar_select %p19, %s20, %s21
      %p25 = pneg %p19
      %p26 = scmp.eq.s32.totalorder %s10, 1
      %p27 = por %p25, %p26
      %p28 = scmp.ne.s32.totalorder %s20, %s23
      %p29 = scmp.eq.s32.totalorder %s10, 0
      %p30 = por %p28, %p29
      %p31 = scmp.ne.s32.totalorder %s20, %s23
      %p32 = scmp.eq.s32.totalorder %s15, 1
      %p33 = por %p31, %p32
      %p34 = scmp.ne.s32.totalorder %s23, %s24
      %p35 = scmp.eq.s32.totalorder %s15, 0
      %p36 = por %p34, %p35
      %p37 = scmp.ne.s32.totalorder %s23, %s24
      %p38 = scmp.eq.s32.totalorder %s16, 1
      %p39 = por %p37, %p38
      %p41 = scmp.ne.s32.totalorder %s24, %s40
      %p42 = scmp.eq.s32.totalorder %s16, 0
      %p43 = por %p41, %p42
      %s44 = ssub.s32 %s10, %s17
      %p45 = scmp.eq.s32.totalorder %s44, 0
      %s47 = sadd.s32 %s46, 1
      %s48 = scalar_select %p45, %s46, %s47
      %p51 = pneg %p45
      %p52 = scmp.eq.s32.totalorder %s10, 1
      %p53 = por %p51, %p52
      %p54 = scmp.ne.s32.totalorder %s46, %s49
      %p55 = scmp.eq.s32.totalorder %s10, 0
      %p56 = por %p54, %p55
      %p57 = scmp.ne.s32.totalorder %s46, %s49
      %p58 = scmp.eq.s32.totalorder %s15, 1
      %p59 = por %p57, %p58
      %p60 = scmp.ne.s32.totalorder %s49, %s50
      %p61 = scmp.eq.s32.totalorder %s15, 0
      %p62 = por %p60, %p61
      %p63 = scmp.ne.s32.totalorder %s49, %s50
      %p64 = scmp.eq.s32.totalorder %s16, 1
      %p65 = por %p63, %p64
      %p67 = scmp.ne.s32.totalorder %s50, %s66
      %p68 = scmp.eq.s32.totalorder %s16, 0
      %p69 = por %p67, %p68
      %s71 = sadd.s32 %s70, 1
      %p74 = scmp.eq.s32.totalorder %s10, 1
      %p75 = scmp.ne.s32.totalorder %s70, %s72
      %p76 = scmp.eq.s32.totalorder %s10, 0
      %p77 = por %p75, %p76
      %p78 = scmp.ne.s32.totalorder %s70, %s72
      %p79 = scmp.eq.s32.totalorder %s15, 1
      %p80 = por %p78, %p79
      %p81 = scmp.ne.s32.totalorder %s72, %s73
      %p82 = scmp.eq.s32.totalorder %s15, 0
      %p83 = por %p81, %p82
      %p84 = scmp.ne.s32.totalorder %s72, %s73
      %p85 = scmp.eq.s32.totalorder %s16, 1
      %p86 = por %p84, %p85
      %p88 = scmp.ne.s32.totalorder %s73, %s87
      %p89 = scmp.eq.s32.totalorder %s16, 0
      %p90 = por %p88, %p89
      %s91 = ssub.s32 %s10, %s17
      %p92 = scmp.eq.s32.totalorder %s91, 0
      %s94 = sadd.s32 %s93, 1
      %s95 = scalar_select %p92, %s93, %s94
      %p98 = pneg %p92
      %p99 = scmp.eq.s32.totalorder %s10, 1
      %p100 = por %p98, %p99
      %p101 = scmp.ne.s32.totalorder %s93, %s96
      %p102 = scmp.eq.s32.totalorder %s10, 0
      %p103 = por %p101, %p102
      %p104 = scmp.ne.s32.totalorder %s93, %s96
      %p105 = scmp.eq.s32.totalorder %s15, 1
      %p106 = por %p104, %p105
      %p107 = scmp.ne.s32.totalorder %s96, %s97
      %p108 = scmp.eq.s32.totalorder %s15, 0
      %p109 = por %p107, %p108
      %p110 = scmp.ne.s32.totalorder %s96, %s97
      %p111 = scmp.eq.s32.totalorder %s16, 1
      %p112 = por %p110, %p111
      %p114 = scmp.ne.s32.totalorder %s97, %s113
      %p115 = scmp.eq.s32.totalorder %s16, 0
      %p116 = por %p114, %p115
      %p117 = scmp.le.s32.totalorder 1, %s10
      %p118 = scmp.lt.s32.totalorder %s10, 3
      %p119 = pnand %p117, %p118
      %p120 = pneg %p119
      // Predicated region
      $region9: #{predictor3d_forward.5} parent=5 // pred_check
        _
      $region10: #{predictor3d_forward.5} parent=5 // pred_check_branch
        %122 = sbr.rel (%p119) target = $region12
      $region11: #{predictor3d_forward.5} parent=5 // pred_region
        %s123 = ssub.s32 %s10, 1
        // Predicated region
        $region13: #{predictor3d_forward.5} parent=11 // pred_check
          %p124 = pneg %p83
        $region14: #{predictor3d_forward.5} parent=11 // pred_check_branch
          %126 = sbr.rel (%p124) target = $region16
        $region15: #{predictor3d_forward.5} parent=11 // pred_region
          %128 = vsyncadd [#allocation3], 0
          %s130 = sshll.u32 %s2, 4
          %s131 = int_to_ptr.vmem [resolvable:$true] %s130
          %133 = dma.vmem_to_smem %s131, 128, [#allocation2], [#allocation3]
        $region16: #{predictor3d_forward.5} parent=11 // pred_fallthru
          _
      $region12: #{predictor3d_forward.5} parent=5 // pred_fallthru
        _
      %p134 = scmp.lt.s32.totalorder %s10, 2
      // Predicated region
      $region17: #{predictor3d_forward.5} parent=5 // pred_check
        %p135 = pneg %p134
      $region18: #{predictor3d_forward.5} parent=5 // pred_check_branch
        %137 = sbr.rel (%p135) target = $region20
      $region19: #{predictor3d_forward.5} parent=5 // pred_region
        // Predicated region
        $region21: #{predictor3d_forward.5} parent=19 // pred_check
          %p138 = pneg %p30
        $region22: #{predictor3d_forward.5} parent=19 // pred_check_branch
          %140 = sbr.rel (%p138) target = $region24
        $region23: #{predictor3d_forward.5} parent=19 // pred_region
          %p141 = scmp.lt.s32.totalorder %s10, 1
          %s142 = scalar_select %p141, %s10, 1
          %s143 = smul.addr %s142, 4
          %s144 = scalar_lea.vmem %s0, %s143
        $region24: #{predictor3d_forward.5} parent=19 // pred_fallthru
          _
        // Predicated region
        $region25: #{predictor3d_forward.5} parent=19 // pred_check
          %p145 = pneg %p56
        $region26: #{predictor3d_forward.5} parent=19 // pred_check_branch
          %147 = sbr.rel (%p145) target = $region28
        $region27: #{predictor3d_forward.5} parent=19 // pred_region
          %p148 = scmp.lt.s32.totalorder %s10, 1
          %s149 = scalar_select %p148, %s10, 1
          %s150 = smul.addr %s149, 8
          %s151 = scalar_lea.vmem %s1, %s150
        $region28: #{predictor3d_forward.5} parent=19 // pred_fallthru
          _
      $region20: #{predictor3d_forward.5} parent=5 // pred_fallthru
        _
      %p152 = scmp.le.s32.totalorder 1, %s10
      %p153 = scmp.lt.s32.totalorder %s10, 3
      %p154 = pnand %p152, %p153
      %p155 = pneg %p154
      // Predicated region
      $region29: #{predictor3d_forward.5} parent=5 // pred_check
        _
      $region30: #{predictor3d_forward.5} parent=5 // pred_check_branch
        %157 = sbr.rel (%p154) target = $region32
      $region31: #{predictor3d_forward.5} parent=5 // pred_region
        %s158 = ssub.s32 %s10, 1
        // Predicated region
        $region33: #{predictor3d_forward.5} parent=31 // pred_check
          %p159 = pneg %p83
        $region34: #{predictor3d_forward.5} parent=31 // pred_check_branch
          %161 = sbr.rel (%p159) target = $region36
        $region35: #{predictor3d_forward.5} parent=31 // pred_region
          %163 = dma.done [#allocation3], 128
        $region36: #{predictor3d_forward.5} parent=31 // pred_fallthru
          _
        %164 = sfence
        %p165 = scmp.lt.s32.totalorder %s15, 1
        %s166 = scalar_select %p165, %s15, 1
        %s167 = smul.addr %s166, 4
        %s168 = scalar_lea.vmem %s0, %s167
        %p169 = pneg %p36
        %p170 = pneg %p33
        %p171 = scmp.lt.s32.totalorder %s15, 1
        %s172 = scalar_select %p171, %s15, 1
        %s173 = smul.addr %s172, 8
        %s174 = scalar_lea.vmem %s1, %s173
        %p175 = pneg %p62
        %p176 = pneg %p59
        %p177 = pneg %p83
        %p178 = pneg %p80
        %p179 = pneg %p109
        %p180 = pneg %p106
        %p181 = scmp.lt.s32.totalorder %s15, 1
        %s182 = scalar_select %p181, %s15, 1
        %s183 = smul.addr %s182, 8
        %s184 = smul.addr %s183, 8
        %s185 = scalar_lea.vmem %s3, %s184
        %p186 = scmp.lt.s32.totalorder %s15, 1
        %s187 = scalar_select %p186, %s15, 1
        %s188 = smul.addr %s187, 4
        %s189 = scalar_lea.vmem %s0, %s188
        %p190 = scmp.lt.s32.totalorder %s15, 1
        %s191 = scalar_select %p190, %s15, 1
        %s192 = smul.addr %s191, 8
        %s193 = scalar_lea.vmem %s1, %s192
        %p194 = scmp.lt.s32.totalorder %s15, 1
        %s195 = scalar_select %p194, %s15, 1
        %s196 = smul.addr %s195, 8
        %s197 = smul.addr %s196, 8
        %s198 = scalar_lea.vmem %s3, %s197
        %v199 = vld [vmem:[%s189] sm:$0xf]
        %v200 = vld [vmem:[%s193] sm:$0xff]
        %v201 = vmul.f32 %v199, 0.032258064
        %v202 = vmul.f32 %v199, 0.04347826
        %v203 = vlaneseq
        %v204 = vshrl.u32 %v203, 7
        %v205 = vcvt.f32.s32.to.zero.pseudo %v199
        %v206 = vperm.slane %v205, 0
        %vm207 = vcmp.eq.s32.totalorder %v204, %v206
        %s208 = sld [smem:[#allocation2]]
        %v209 = vstv %s208
        %v210 = vmul.f32 %v201, %v209
        %s211 = sld [smem:[#allocation2 + $0x80]]
        %v212 = vstv %s211
        %v213 = vmul.f32 %v202, %v212
        %v215 = vrot.slane %v213, 1
        %v217 = vadd.f32 %v210, %v215
        %s218 = sld [smem:[#allocation2 + $0x100]]
        %v219 = vstv %s218
        %v220 = vmul.f32 %v199, %v219
        %v222 = vrot.slane %v220, 2
        %v224 = vadd.f32 %v217, %v222
        %s225 = sld [smem:[#allocation2 + $0x180]]
        %v226 = vstv %s225
        %v227 = vmul.f32 %v200, %v226
        %s228 = sld [smem:[#allocation2 + $0x200]]
        %v229 = vstv %s228
        %v230 = vmul.f32 %v200, %v229
        %232 = vrot.lane.b32.xlu0 %v230, 127
        %v233 = vpop.permute.xlu0 %232
        %v235 = vadd.f32 %v227, %v233
        %s236 = sld [smem:[#allocation2 + $0x280]]
        %v237 = vstv %s236
        %v238 = vmul.f32 %v200, %v237
        %240 = vrot.lane.b32.xlu0 %v238, 126
        %v241 = vpop.permute.xlu0 %240
        %v243 = vadd.f32 %v235, %v241
        %s244 = sld [smem:[#allocation2 + $0x300]]
        %v245 = vstv %s244
        %v246 = vmul.f32 %v200, %v245
        %248 = vrot.lane.b32.xlu0 %v246, 125
        %v249 = vpop.permute.xlu0 %248
        %v251 = vadd.f32 %v243, %v249
        %s252 = sld [smem:[#allocation2 + $0x380]]
        %v253 = vstv %s252
        %v254 = vadd.f32 %v251, %v253
        %256 = vset.pattern.permute.xlu0 0
        %257 = vperm.xlu0 %256, %v254
        %v258 = vpop.permute.xlu0 %257
        %v260 = vperm.slane %v224, 1
        %v261 = vadd.f32 %v258, %v260
        %v262 = vperm.slane %v199, 1
        %v263 = vadd.f32 %v261, %v262
        %v264 = vsel %vm207, %v262, %v263
        %v265 = vmul.f32 %v264, 0.48387095
        %s266 = sld [smem:[#allocation2 + $0x1]]
        %v267 = vstv %s266
        %v268 = vmul.f32 %v201, %v267
        %s269 = sld [smem:[#allocation2 + $0x81]]
        %v270 = vstv %s269
        %v271 = vmul.f32 %v202, %v270
        %v273 = vrot.slane %v271, 1
        %v275 = vadd.f32 %v268, %v273
        %s276 = sld [smem:[#allocation2 + $0x101]]
        %v277 = vstv %s276
        %v278 = vmul.f32 %v199, %v277
        %v280 = vrot.slane %v278, 2
        %v282 = vadd.f32 %v275, %v280
        %s283 = sld [smem:[#allocation2 + $0x181]]
        %v284 = vstv %s283
        %v285 = vmul.f32 %v200, %v284
        %s286 = sld [smem:[#allocation2 + $0x201]]
        %v287 = vstv %s286
        %v288 = vmul.f32 %v200, %v287
        %290 = vrot.lane.b32.xlu0 %v288, 127
        %v291 = vpop.permute.xlu0 %290
        %v293 = vadd.f32 %v285, %v291
        %s294 = sld [smem:[#allocation2 + $0x281]]
        %v295 = vstv %s294
        %v296 = vmul.f32 %v200, %v295
        %298 = vrot.lane.b32.xlu0 %v296, 126
        %v299 = vpop.permute.xlu0 %298
        %v301 = vadd.f32 %v293, %v299
        %s302 = sld [smem:[#allocation2 + $0x301]]
        %v303 = vstv %s302
        %v304 = vmul.f32 %v200, %v303
        %306 = vrot.lane.b32.xlu0 %v304, 125
        %v307 = vpop.permute.xlu0 %306
        %v309 = vadd.f32 %v301, %v307
        %s310 = sld [smem:[#allocation2 + $0x381]]
        %v311 = vstv %s310
        %v312 = vadd.f32 %v309, %v311
        %314 = vset.pattern.permute.xlu0 0
        %315 = vperm.xlu0 %314, %v312
        %v316 = vpop.permute.xlu0 %315
        %v318 = vperm.slane %v282, 1
        %v319 = vadd.f32 %v316, %v318
        %v320 = vperm.slane %v199, 2
        %v321 = vadd.f32 %v319, %v320
        %v322 = vsel %vm207, %v320, %v321
        %v323 = vmul.f32 %v322, 0.65217394
        %s324 = sld [smem:[#allocation2 + $0x2]]
        %v325 = vstv %s324
        %v326 = vmul.f32 %v201, %v325
        %s327 = sld [smem:[#allocation2 + $0x82]]
        %v328 = vstv %s327
        %v329 = vmul.f32 %v202, %v328
        %v331 = vrot.slane %v329, 1
        %v333 = vadd.f32 %v326, %v331
        %s334 = sld [smem:[#allocation2 + $0x102]]
        %v335 = vstv %s334
        %v336 = vmul.f32 %v199, %v335
        %v338 = vrot.slane %v336, 2
        %v340 = vadd.f32 %v333, %v338
        %s341 = sld [smem:[#allocation2 + $0x182]]
        %v342 = vstv %s341
        %v343 = vmul.f32 %v200, %v342
        %s344 = sld [smem:[#allocation2 + $0x202]]
        %v345 = vstv %s344
        %v346 = vmul.f32 %v200, %v345
        %348 = vrot.lane.b32.xlu0 %v346, 127
        %v349 = vpop.permute.xlu0 %348
        %v351 = vadd.f32 %v343, %v349
        %s352 = sld [smem:[#allocation2 + $0x282]]
        %v353 = vstv %s352
        %v354 = vmul.f32 %v200, %v353
        %356 = vrot.lane.b32.xlu0 %v354, 126
        %v357 = vpop.permute.xlu0 %356
        %v359 = vadd.f32 %v351, %v357
        %s360 = sld [smem:[#allocation2 + $0x302]]
        %v361 = vstv %s360
        %v362 = vmul.f32 %v200, %v361
        %364 = vrot.lane.b32.xlu0 %v362, 125
        %v365 = vpop.permute.xlu0 %364
        %v367 = vadd.f32 %v359, %v365
        %s368 = sld [smem:[#allocation2 + $0x382]]
        %v369 = vstv %s368
        %v370 = vadd.f32 %v367, %v369
        %372 = vset.pattern.permute.xlu0 0
        %373 = vperm.xlu0 %372, %v370
        %v374 = vpop.permute.xlu0 %373
        %v376 = vperm.slane %v340, 1
        %v377 = vadd.f32 %v374, %v376
        %v378 = vperm.slane %v199, 3
        %v379 = vadd.f32 %v377, %v378
        %v380 = vsel %vm207, %v378, %v379
        %s381 = sld [smem:[#allocation2 + $0x3]]
        %v382 = vstv %s381
        %v383 = vmul.f32 %v201, %v382
        %s384 = sld [smem:[#allocation2 + $0x83]]
        %v385 = vstv %s384
        %v386 = vmul.f32 %v202, %v385
        %v388 = vrot.slane %v386, 1
        %v390 = vadd.f32 %v383, %v388
        %s391 = sld [smem:[#allocation2 + $0x103]]
        %v392 = vstv %s391
        %v393 = vmul.f32 %v199, %v392
        %v395 = vrot.slane %v393, 2
        %v397 = vadd.f32 %v390, %v395
        %s398 = sld [smem:[#allocation2 + $0x183]]
        %v399 = vstv %s398
        %v400 = vmul.f32 %v200, %v399
        %s401 = sld [smem:[#allocation2 + $0x203]]
        %v402 = vstv %s401
        %v403 = vmul.f32 %v200, %v402
        %405 = vrot.lane.b32.xlu0 %v403, 127
        %v406 = vpop.permute.xlu0 %405
        %v408 = vadd.f32 %v400, %v406
        %s409 = sld [smem:[#allocation2 + $0x283]]
        %v410 = vstv %s409
        %v411 = vmul.f32 %v200, %v410
        %413 = vrot.lane.b32.xlu0 %v411, 126
        %v414 = vpop.permute.xlu0 %413
        %v416 = vadd.f32 %v408, %v414
        %s417 = sld [smem:[#allocation2 + $0x303]]
        %v418 = vstv %s417
        %v419 = vmul.f32 %v200, %v418
        %421 = vrot.lane.b32.xlu0 %v419, 125
        %v422 = vpop.permute.xlu0 %421
        %v424 = vadd.f32 %v416, %v422
        %s425 = sld [smem:[#allocation2 + $0x383]]
        %v426 = vstv %s425
        %v427 = vadd.f32 %v424, %v426
        %429 = vset.pattern.permute.xlu0 0
        %430 = vperm.xlu0 %429, %v427
        %v431 = vpop.permute.xlu0 %430
        %v433 = vperm.slane %v397, 1
        %v434 = vadd.f32 %v431, %v433
        %v435 = vsub.f32 0.0, %v434
        %v436 = vmul.f32 %v435, 1.442695
        %v437 = vpow.pop %v436
        %v438 = vadd.f32 %v437, 1.0
        %v439 = vrcp.pop %v438
        %s440 = sld [smem:[#allocation2 + $0x4]]
        %v441 = vstv %s440
        %v442 = vmul.f32 %v201, %v441
        %s443 = sld [smem:[#allocation2 + $0x84]]
        %v444 = vstv %s443
        %v445 = vmul.f32 %v202, %v444
        %v447 = vrot.slane %v445, 1
        %v449 = vadd.f32 %v442, %v447
        %s450 = sld [smem:[#allocation2 + $0x104]]
        %v451 = vstv %s450
        %v452 = vmul.f32 %v199, %v451
        %v454 = vrot.slane %v452, 2
        %v456 = vadd.f32 %v449, %v454
        %s457 = sld [smem:[#allocation2 + $0x184]]
        %v458 = vstv %s457
        %v459 = vmul.f32 %v200, %v458
        %s460 = sld [smem:[#allocation2 + $0x204]]
        %v461 = vstv %s460
        %v462 = vmul.f32 %v200, %v461
        %464 = vrot.lane.b32.xlu0 %v462, 127
        %v465 = vpop.permute.xlu0 %464
        %v467 = vadd.f32 %v459, %v465
        %s468 = sld [smem:[#allocation2 + $0x284]]
        %v469 = vstv %s468
        %v470 = vmul.f32 %v200, %v469
        %472 = vrot.lane.b32.xlu0 %v470, 126
        %v473 = vpop.permute.xlu0 %472
        %v475 = vadd.f32 %v467, %v473
        %s476 = sld [smem:[#allocation2 + $0x304]]
        %v477 = vstv %s476
        %v478 = vmul.f32 %v200, %v477
        %480 = vrot.lane.b32.xlu0 %v478, 125
        %v481 = vpop.permute.xlu0 %480
        %v483 = vadd.f32 %v475, %v481
        %s484 = sld [smem:[#allocation2 + $0x384]]
        %v485 = vstv %s484
        %v486 = vadd.f32 %v483, %v485
        %488 = vset.pattern.permute.xlu0 0
        %489 = vperm.xlu0 %488, %v486
        %v490 = vpop.permute.xlu0 %489
        %v492 = vperm.slane %v456, 1
        %v493 = vadd.f32 %v490, %v492
        %v494 = vsub.f32 0.0, %v493
        %v495 = vmul.f32 %v494, 1.442695
        %v496 = vpow.pop %v495
        %v497 = vadd.f32 %v496, 1.0
        %v498 = vrcp.pop %v497
        %vm499 = vcmp.gt.f32.partialorder %v439, 0.9
        %vm500 = vmor %vm499, %vm207
        %v501 = vsel %vm500, 1, 0
        %v502 = vcvt.s32.f32 %v501
        %503 = vst [vmem:[%s198] sm:$0xff] %v265
        %s504 = scalar_lea.vmem %s198, 8
        %505 = vst [vmem:[%s504] sm:$0xff] %v323
        %s506 = scalar_lea.vmem %s198, 16
        %507 = vst [vmem:[%s506] sm:$0xff] %v380
        %s508 = scalar_lea.vmem %s198, 24
        %509 = vst [vmem:[%s508] sm:$0xff] %v502
        %s510 = scalar_lea.vmem %s198, 32
        %511 = vst [vmem:[%s510] sm:$0xff] %v498
        %v512 = vsub.f32 %v265, 8.0
        %v513 = vmul.f32 %v512, %v380
        %v514 = vmul.f32 %v513, 0.0625
        %s515 = scalar_lea.vmem %s198, 40
        %516 = vst [vmem:[%s515] sm:$0xff] %v514
        %v517 = vsub.f32 %v323, 8.0
        %v518 = vmul.f32 %v517, %v380
        %v519 = vmul.f32 %v518, 0.0625
        %s520 = scalar_lea.vmem %s198, 48
        %521 = vst [vmem:[%s520] sm:$0xff] %v519
        %s522 = scalar_lea.vmem %s198, 56
        %523 = vst [vmem:[%s522] sm:$0xff] %v380
        %p524 = scmp.lt.s32.totalorder %s15, 1
        %s525 = scalar_select %p524, %s15, 1
        %s526 = smul.addr %s525, 8
        %s527 = smul.addr %s526, 8
        %s528 = scalar_lea.vmem %s3, %s527
        // Predicated region
        $region37: #{predictor3d_forward.5} parent=31 // pred_check
          %p529 = pneg %p106
        $region38: #{predictor3d_forward.5} parent=31 // pred_check_branch
          %531 = sbr.rel (%p529) target = $region40
        $region39: #{predictor3d_forward.5} parent=31 // pred_region
          _
        $region40: #{predictor3d_forward.5} parent=31 // pred_fallthru
          _
      $region32: #{predictor3d_forward.5} parent=5 // pred_fallthru
        _
      %p532 = scmp.le.s32.totalorder 2, %s10
      // Predicated region
      $region41: #{predictor3d_forward.5} parent=5 // pred_check
        %p533 = pneg %p532
      $region42: #{predictor3d_forward.5} parent=5 // pred_check_branch
        %535 = sbr.rel (%p533) target = $region44
      $region43: #{predictor3d_forward.5} parent=5 // pred_region
        %s536 = ssub.s32 %s10, 2
        // Predicated region
        $region45: #{predictor3d_forward.5} parent=43 // pred_check
          %p537 = pneg %p112
        $region46: #{predictor3d_forward.5} parent=43 // pred_check_branch
          %539 = sbr.rel (%p537) target = $region48
        $region47: #{predictor3d_forward.5} parent=43 // pred_region
          %p540 = scmp.lt.s32.totalorder %s16, 1
          %s541 = scalar_select %p540, %s16, 1
          %s542 = smul.addr %s541, 8
          %s543 = smul.addr %s542, 8
          %s544 = scalar_lea.vmem %s3, %s543
        $region48: #{predictor3d_forward.5} parent=43 // pred_fallthru
          _
      $region44: #{predictor3d_forward.5} parent=5 // pred_fallthru
        _
    $region6: #{predictor3d_forward.5} parent=1 // loop_footer
      %s14 = sadd.s32 1, %s10
    $region7: #{predictor3d_forward.5} parent=1 // loop_footer_branch
      %9 = sbr.rel target = $region3
    $region8: #{predictor3d_forward.5} parent=1 // loop_exit
      _
    %545 = vsyncpa [#allocation3], 1
    %s546 = scalar_lea.sflag [#allocation3], 1
    %547 = vsyncpa %s546, 1

// kernel: predictor3d_forward.3
$region0: #{predictor3d_forward.3}
  #allocation0 [shape = 'u32[]', space=smem, size = 0x4, offset = 0x4, fixed_abs, tag = 'smem constant byte address 0x4 - core index']
  #allocation1 [shape = 'u32[72,128]{1,0:T(1,128)}', space=vmem, size = 0x9000, scoped, tag = 'internal scratch']
  %s0 = inlined_call_operand.vmem [shape: f32[24,16], index: 0, kind: input, shape index: {}]
  %s1 = inlined_call_operand.vmem [shape: f32[16,32], index: 1, kind: input, shape index: {}]
  %s2 = inlined_call_operand.vmem [shape: f32[48,16,16], index: 2, kind: input, shape index: {}]
  %s3 = inlined_call_operand.hbm [shape: f32[48,24,32], index: 3, kind: output, shape index: {0}]
  %s4 = inlined_call_operand.vmem [shape: f32[48,32], index: 4, kind: output, shape index: {1}]
  %5 = xla_tuple %s3, %s4
  %s6 = sld [smem:[#allocation0]]
  $region30: #{predictor3d_forward.3} parent=0
    _
  %s8 = ssub.s32 1, %s6
  %s9 = scalar_select 0, %s8, %s6
  $region1: #{predictor3d_forward.3} parent=0
    #allocation2 [shape = 'u8[589824]{0}', space=vmem, size = 0x90000, scoped, tag = 'output window, operand 0, single buffered']
    #allocation3 [shape = 's32[1]{0}', space=sflag, size = 0x4, scoped, tag = 'scoped memory for predictor3d_forward.3']
    %10 = vsyncpa [#allocation3], 0
    // Predicated region
    $region2: #{predictor3d_forward.3} parent=1 // pred_check
      _
    $region3: #{predictor3d_forward.3} parent=1 // pred_check_branch
      %12 = sbr.rel (0) target = $region5
    $region4: #{predictor3d_forward.3} parent=1 // pred_region
      _
    $region5: #{predictor3d_forward.3} parent=1 // pred_fallthru
      _
    // Predicated region
    $region6: #{predictor3d_forward.3} parent=1 // pred_check
      _
    $region7: #{predictor3d_forward.3} parent=1 // pred_check_branch
      %14 = sbr.rel (0) target = $region9
    $region8: #{predictor3d_forward.3} parent=1 // pred_region
      _
    $region9: #{predictor3d_forward.3} parent=1 // pred_fallthru
      _
    // Predicated region
    $region10: #{predictor3d_forward.3} parent=1 // pred_check
      _
    $region11: #{predictor3d_forward.3} parent=1 // pred_check_branch
      %16 = sbr.rel (0) target = $region13
    $region12: #{predictor3d_forward.3} parent=1 // pred_region
      _
    $region13: #{predictor3d_forward.3} parent=1 // pred_fallthru
      _
    %v17 = vld [vmem:[%s2] sm:$0xff]
    %v18 = vld [vmem:[%s2 + $0x8] sm:$0xff]
    %v19 = vld [vmem:[%s2 + $0x10] sm:$0xff]
    %v20 = vld [vmem:[%s2 + $0x18] sm:$0xff]
    %v21 = vld [vmem:[%s2 + $0x20] sm:$0xff]
    %v22 = vld [vmem:[%s2 + $0x28] sm:$0xff]
    %v23 = vld [vmem:[%s2 + $0x30] sm:$0xff]
    %v24 = vld [vmem:[%s2 + $0x38] sm:$0xff]
    %v25 = vld [vmem:[%s2 + $0x40] sm:$0xff]
    %v26 = vld [vmem:[%s2 + $0x48] sm:$0xff]
    %v27 = vld [vmem:[%s2 + $0x50] sm:$0xff]
    %v28 = vld [vmem:[%s2 + $0x58] sm:$0xff]
    %v29 = vld [vmem:[%s2 + $0x60] sm:$0xff]
    %v30 = vld [vmem:[%s2 + $0x68] sm:$0xff]
    %v31 = vld [vmem:[%s2 + $0x70] sm:$0xff]
    %v32 = vld [vmem:[%s2 + $0x78] sm:$0xff]
    %v33 = vld [vmem:[%s2 + $0x80] sm:$0xff]
    %v34 = vld [vmem:[%s2 + $0x88] sm:$0xff]
    %v35 = vld [vmem:[%s2 + $0x90] sm:$0xff]
    %v36 = vld [vmem:[%s2 + $0x98] sm:$0xff]
    %v37 = vld [vmem:[%s2 + $0xa0] sm:$0xff]
    %v38 = vld [vmem:[%s2 + $0xa8] sm:$0xff]
    %v39 = vld [vmem:[%s2 + $0xb0] sm:$0xff]
    %v40 = vld [vmem:[%s2 + $0xb8] sm:$0xff]
    %v41 = vld [vmem:[%s2 + $0xc0] sm:$0xff]
    %v42 = vld [vmem:[%s2 + $0xc8] sm:$0xff]
    %v43 = vld [vmem:[%s2 + $0xd0] sm:$0xff]
    %v44 = vld [vmem:[%s2 + $0xd8] sm:$0xff]
    %v45 = vld [vmem:[%s2 + $0xe0] sm:$0xff]
    %v46 = vld [vmem:[%s2 + $0xe8] sm:$0xff]
    %v47 = vld [vmem:[%s2 + $0xf0] sm:$0xff]
    %v48 = vld [vmem:[%s2 + $0xf8] sm:$0xff]
    %v49 = vld [vmem:[%s2 + $0x100] sm:$0xff]
    %v50 = vld [vmem:[%s2 + $0x108] sm:$0xff]
    %v51 = vld [vmem:[%s2 + $0x110] sm:$0xff]
    %v52 = vld [vmem:[%s2 + $0x118] sm:$0xff]
    %v53 = vld [vmem:[%s2 + $0x120] sm:$0xff]
    %v54 = vld [vmem:[%s2 + $0x128] sm:$0xff]
    %v55 = vld [vmem:[%s2 + $0x130] sm:$0xff]
    %v56 = vld [vmem:[%s2 + $0x138] sm:$0xff]
    %v57 = vld [vmem:[%s2 + $0x140] sm:$0xff]
    %v58 = vld [vmem:[%s2 + $0x148] sm:$0xff]
    %v59 = vld [vmem:[%s2 + $0x150] sm:$0xff]
    %v60 = vld [vmem:[%s2 + $0x158] sm:$0xff]
    %v61 = vld [vmem:[%s2 + $0x160] sm:$0xff]
    %v62 = vld [vmem:[%s2 + $0x168] sm:$0xff]
    %v63 = vld [vmem:[%s2 + $0x170] sm:$0xff]
    %v64 = vld [vmem:[%s2 + $0x178] sm:$0xff]
    %v65 = vld [vmem:[%s2 + $0x180] sm:$0xff]
    %v66 = vld [vmem:[%s2 + $0x188] sm:$0xff]
    %v67 = vld [vmem:[%s2 + $0x190] sm:$0xff]
    %v68 = vld [vmem:[%s2 + $0x198] sm:$0xff]
    %v69 = vld [vmem:[%s2 + $0x1a0] sm:$0xff]
    %v70 = vld [vmem:[%s2 + $0x1a8] sm:$0xff]
    %v71 = vld [vmem:[%s2 + $0x1b0] sm:$0xff]
    %v72 = vld [vmem:[%s2 + $0x1b8] sm:$0xff]
    %v73 = vld [vmem:[%s2 + $0x1c0] sm:$0xff]
    %v74 = vld [vmem:[%s2 + $0x1c8] sm:$0xff]
    %v75 = vld [vmem:[%s2 + $0x1d0] sm:$0xff]
    %v76 = vld [vmem:[%s2 + $0x1d8] sm:$0xff]
    %v77 = vld [vmem:[%s2 + $0x1e0] sm:$0xff]
    %v78 = vld [vmem:[%s2 + $0x1e8] sm:$0xff]
    %v79 = vld [vmem:[%s2 + $0x1f0] sm:$0xff]
    %v80 = vld [vmem:[%s2 + $0x1f8] sm:$0xff]
    %v81 = vld [vmem:[%s2 + $0x200] sm:$0xff]
    %v82 = vld [vmem:[%s2 + $0x208] sm:$0xff]
    %v83 = vld [vmem:[%s2 + $0x210] sm:$0xff]
    %v84 = vld [vmem:[%s2 + $0x218] sm:$0xff]
    %v85 = vld [vmem:[%s2 + $0x220] sm:$0xff]
    %v86 = vld [vmem:[%s2 + $0x228] sm:$0xff]
    %v87 = vld [vmem:[%s2 + $0x230] sm:$0xff]
    %v88 = vld [vmem:[%s2 + $0x238] sm:$0xff]
    %v89 = vld [vmem:[%s2 + $0x240] sm:$0xff]
    %v90 = vld [vmem:[%s2 + $0x248] sm:$0xff]
    %v91 = vld [vmem:[%s2 + $0x250] sm:$0xff]
    %v92 = vld [vmem:[%s2 + $0x258] sm:$0xff]
    %v93 = vld [vmem:[%s2 + $0x260] sm:$0xff]
    %v94 = vld [vmem:[%s2 + $0x268] sm:$0xff]
    %v95 = vld [vmem:[%s2 + $0x270] sm:$0xff]
    %v96 = vld [vmem:[%s2 + $0x278] sm:$0xff]
    %v97 = vld [vmem:[%s2 + $0x280] sm:$0xff]
    %v98 = vld [vmem:[%s2 + $0x288] sm:$0xff]
    %v99 = vld [vmem:[%s2 + $0x290] sm:$0xff]
    %v100 = vld [vmem:[%s2 + $0x298] sm:$0xff]
    %v101 = vld [vmem:[%s2 + $0x2a0] sm:$0xff]
    %v102 = vld [vmem:[%s2 + $0x2a8] sm:$0xff]
    %v103 = vld [vmem:[%s2 + $0x2b0] sm:$0xff]
    %v104 = vld [vmem:[%s2 + $0x2b8] sm:$0xff]
    %v105 = vld [vmem:[%s2 + $0x2c0] sm:$0xff]
    %v106 = vld [vmem:[%s2 + $0x2c8] sm:$0xff]
    %v107 = vld [vmem:[%s2 + $0x2d0] sm:$0xff]
    %v108 = vld [vmem:[%s2 + $0x2d8] sm:$0xff]
    %v109 = vld [vmem:[%s2 + $0x2e0] sm:$0xff]
    %v110 = vld [vmem:[%s2 + $0x2e8] sm:$0xff]
    %v111 = vld [vmem:[%s2 + $0x2f0] sm:$0xff]
    %v112 = vld [vmem:[%s2 + $0x2f8] sm:$0xff]
    %v113 = vld [vmem:[%s1] sm:$0xff]
    %v114 = vld [vmem:[%s1 + $0x8] sm:$0xff]
    %vm115 = vcmask 130048
    %v117 = vsel %vm115, %v17, 0
    %v120 = vsel %vm115, %v18, 0
    %v123 = vsel %vm115, %v19, 0
    %v126 = vsel %vm115, %v20, 0
    %v129 = vsel %vm115, %v21, 0
    %v132 = vsel %vm115, %v22, 0
    %v135 = vsel %vm115, %v23, 0
    %v138 = vsel %vm115, %v24, 0
    %v141 = vsel %vm115, %v25, 0
    %v144 = vsel %vm115, %v26, 0
    %v147 = vsel %vm115, %v27, 0
    %v150 = vsel %vm115, %v28, 0
    %v153 = vsel %vm115, %v29, 0
    %v156 = vsel %vm115, %v30, 0
    %v159 = vsel %vm115, %v31, 0
    %v162 = vsel %vm115, %v32, 0
    %v165 = vsel %vm115, %v33, 0
    %v168 = vsel %vm115, %v34, 0
    %v171 = vsel %vm115, %v35, 0
    %v174 = vsel %vm115, %v36, 0
    %v177 = vsel %vm115, %v37, 0
    %v180 = vsel %vm115, %v38, 0
    %v183 = vsel %vm115, %v39, 0
    %v186 = vsel %vm115, %v40, 0
    %v189 = vsel %vm115, %v41, 0
    %v192 = vsel %vm115, %v42, 0
    %v195 = vsel %vm115, %v43, 0
    %v198 = vsel %vm115, %v44, 0
    %v201 = vsel %vm115, %v45, 0
    %v204 = vsel %vm115, %v46, 0
    %v207 = vsel %vm115, %v47, 0
    %v210 = vsel %vm115, %v48, 0
    %v213 = vsel %vm115, %v49, 0
    %v216 = vsel %vm115, %v50, 0
    %v219 = vsel %vm115, %v51, 0
    %v222 = vsel %vm115, %v52, 0
    %v225 = vsel %vm115, %v53, 0
    %v228 = vsel %vm115, %v54, 0
    %v231 = vsel %vm115, %v55, 0
    %v234 = vsel %vm115, %v56, 0
    %v237 = vsel %vm115, %v57, 0
    %v240 = vsel %vm115, %v58, 0
    %v243 = vsel %vm115, %v59, 0
    %v246 = vsel %vm115, %v60, 0
    %v249 = vsel %vm115, %v61, 0
    %v252 = vsel %vm115, %v62, 0
    %v255 = vsel %vm115, %v63, 0
    %v258 = vsel %vm115, %v64, 0
    %v261 = vsel %vm115, %v65, 0
    %v264 = vsel %vm115, %v66, 0
    %v267 = vsel %vm115, %v67, 0
    %v270 = vsel %vm115, %v68, 0
    %v273 = vsel %vm115, %v69, 0
    %v276 = vsel %vm115, %v70, 0
    %v279 = vsel %vm115, %v71, 0
    %v282 = vsel %vm115, %v72, 0
    %v285 = vsel %vm115, %v73, 0
    %v288 = vsel %vm115, %v74, 0
    %v291 = vsel %vm115, %v75, 0
    %v294 = vsel %vm115, %v76, 0
    %v297 = vsel %vm115, %v77, 0
    %v300 = vsel %vm115, %v78, 0
    %v303 = vsel %vm115, %v79, 0
    %v306 = vsel %vm115, %v80, 0
    %v309 = vsel %vm115, %v81, 0
    %v312 = vsel %vm115, %v82, 0
    %v315 = vsel %vm115, %v83, 0
    %v318 = vsel %vm115, %v84, 0
    %v321 = vsel %vm115, %v85, 0
    %v324 = vsel %vm115, %v86, 0
    %v327 = vsel %vm115, %v87, 0
    %v330 = vsel %vm115, %v88, 0
    %v333 = vsel %vm115, %v89, 0
    %v336 = vsel %vm115, %v90, 0
    %v339 = vsel %vm115, %v91, 0
    %v342 = vsel %vm115, %v92, 0
    %v345 = vsel %vm115, %v93, 0
    %v348 = vsel %vm115, %v94, 0
    %v351 = vsel %vm115, %v95, 0
    %v354 = vsel %vm115, %v96, 0
    %v357 = vsel %vm115, %v97, 0
    %v360 = vsel %vm115, %v98, 0
    %v363 = vsel %vm115, %v99, 0
    %v366 = vsel %vm115, %v100, 0
    %v369 = vsel %vm115, %v101, 0
    %v372 = vsel %vm115, %v102, 0
    %v375 = vsel %vm115, %v103, 0
    %v378 = vsel %vm115, %v104, 0
    %v381 = vsel %vm115, %v105, 0
    %v384 = vsel %vm115, %v106, 0
    %v387 = vsel %vm115, %v107, 0
    %v390 = vsel %vm115, %v108, 0
    %v393 = vsel %vm115, %v109, 0
    %v396 = vsel %vm115, %v110, 0
    %v399 = vsel %vm115, %v111, 0
    %v402 = vsel %vm115, %v112, 0
    %404 = vmatpush.msra.mxu0 0.0
    %405 = vmatpush.msra.mxu0 0.0
    %406 = vmatpush.msra.mxu0 0.0
    %407 = vmatpush.msra.mxu0 0.0
    %408 = vmatpush.msra.mxu0 0.0
    %409 = vmatpush.msra.mxu0 0.0
    %410 = vmatpush.msra.mxu0 0.0
    %411 = vmatpush.msra.mxu0 0.0
    %412 = vmatpush.msra.mxu0 0.0
    %413 = vmatpush.msra.mxu0 0.0
    %414 = vmatpush.msra.mxu0 0.0
    %415 = vmatpush.msra.mxu0 0.0
    %416 = vmatpush.msra.mxu0 0.0
    %417 = vmatpush.msra.mxu0 0.0
    %418 = vmatpush.msra.mxu0 %v114
    %419 = vmatpush.msra.mxu0 %v113
    %420 = vmatmul.f32.gmra.mxu0 %v117
    %v421 = vpop.f32.mrf.mxu0
    %v422 = vadd.f32 0.0, %v421
    %423 = vmatmul.f32.gmra.mxu0 %v120
    %v424 = vpop.f32.mrf.mxu0
    %v425 = vadd.f32 0.0, %v424
    %426 = vmatmul.f32.gmra.mxu0 %v123
    %v427 = vpop.f32.mrf.mxu0
    %v428 = vadd.f32 0.0, %v427
    %429 = vmatmul.f32.gmra.mxu0 %v126
    %v430 = vpop.f32.mrf.mxu0
    %v431 = vadd.f32 0.0, %v430
    %432 = vmatmul.f32.gmra.mxu0 %v129
    %v433 = vpop.f32.mrf.mxu0
    %v434 = vadd.f32 0.0, %v433
    %435 = vmatmul.f32.gmra.mxu0 %v132
    %v436 = vpop.f32.mrf.mxu0
    %v437 = vadd.f32 0.0, %v436
    %438 = vmatmul.f32.gmra.mxu0 %v135
    %v439 = vpop.f32.mrf.mxu0
    %v440 = vadd.f32 0.0, %v439
    %441 = vmatmul.f32.gmra.mxu0 %v138
    %v442 = vpop.f32.mrf.mxu0
    %v443 = vadd.f32 0.0, %v442
    %444 = vmatmul.f32.gmra.mxu0 %v141
    %v445 = vpop.f32.mrf.mxu0
    %v446 = vadd.f32 0.0, %v445
    %447 = vmatmul.f32.gmra.mxu0 %v144
    %v448 = vpop.f32.mrf.mxu0
    %v449 = vadd.f32 0.0, %v448
    %450 = vmatmul.f32.gmra.mxu0 %v147
    %v451 = vpop.f32.mrf.mxu0
    %v452 = vadd.f32 0.0, %v451
    %453 = vmatmul.f32.gmra.mxu0 %v150
    %v454 = vpop.f32.mrf.mxu0
    %v455 = vadd.f32 0.0, %v454
    %456 = vmatmul.f32.gmra.mxu0 %v153
    %v457 = vpop.f32.mrf.mxu0
    %v458 = vadd.f32 0.0, %v457
    %459 = vmatmul.f32.gmra.mxu0 %v156
    %v460 = vpop.f32.mrf.mxu0
    %v461 = vadd.f32 0.0, %v460
    %462 = vmatmul.f32.gmra.mxu0 %v159
    %v463 = vpop.f32.mrf.mxu0
    %v464 = vadd.f32 0.0, %v463
    %465 = vmatmul.f32.gmra.mxu0 %v162
    %v466 = vpop.f32.mrf.mxu0
    %v467 = vadd.f32 0.0, %v466
    %468 = vmatmul.f32.gmra.mxu0 %v165
    %v469 = vpop.f32.mrf.mxu0
    %v470 = vadd.f32 0.0, %v469
    %471 = vmatmul.f32.gmra.mxu0 %v168
    %v472 = vpop.f32.mrf.mxu0
    %v473 = vadd.f32 0.0, %v472
    %474 = vmatmul.f32.gmra.mxu0 %v171
    %v475 = vpop.f32.mrf.mxu0
    %v476 = vadd.f32 0.0, %v475
    %477 = vmatmul.f32.gmra.mxu0 %v174
    %v478 = vpop.f32.mrf.mxu0
    %v479 = vadd.f32 0.0, %v478
    %480 = vmatmul.f32.gmra.mxu0 %v177
    %v481 = vpop.f32.mrf.mxu0
    %v482 = vadd.f32 0.0, %v481
    %483 = vmatmul.f32.gmra.mxu0 %v180
    %v484 = vpop.f32.mrf.mxu0
    %v485 = vadd.f32 0.0, %v484
    %486 = vmatmul.f32.gmra.mxu0 %v183
    %v487 = vpop.f32.mrf.mxu0
    %v488 = vadd.f32 0.0, %v487
    %489 = vmatmul.f32.gmra.mxu0 %v186
    %v490 = vpop.f32.mrf.mxu0
    %v491 = vadd.f32 0.0, %v490
    %492 = vmatmul.f32.gmra.mxu0 %v189
    %v493 = vpop.f32.mrf.mxu0
    %v494 = vadd.f32 0.0, %v493
    %495 = vmatmul.f32.gmra.mxu0 %v192
    %v496 = vpop.f32.mrf.mxu0
    %v497 = vadd.f32 0.0, %v496
    %498 = vmatmul.f32.gmra.mxu0 %v195
    %v499 = vpop.f32.mrf.mxu0
    %v500 = vadd.f32 0.0, %v499
    %501 = vmatmul.f32.gmra.mxu0 %v198
    %v502 = vpop.f32.mrf.mxu0
    %v503 = vadd.f32 0.0, %v502
    %504 = vmatmul.f32.gmra.mxu0 %v201
    %v505 = vpop.f32.mrf.mxu0
    %v506 = vadd.f32 0.0, %v505
    %507 = vmatmul.f32.gmra.mxu0 %v204
    %v508 = vpop.f32.mrf.mxu0
    %v509 = vadd.f32 0.0, %v508
    %510 = vmatmul.f32.gmra.mxu0 %v207
    %v511 = vpop.f32.mrf.mxu0
    %v512 = vadd.f32 0.0, %v511
    %513 = vmatmul.f32.gmra.mxu0 %v210
    %v514 = vpop.f32.mrf.mxu0
    %v515 = vadd.f32 0.0, %v514
    %516 = vmatmul.f32.gmra.mxu0 %v213
    %v517 = vpop.f32.mrf.mxu0
    %v518 = vadd.f32 0.0, %v517
    %519 = vmatmul.f32.gmra.mxu0 %v216
    %v520 = vpop.f32.mrf.mxu0
    %v521 = vadd.f32 0.0, %v520
    %522 = vmatmul.f32.gmra.mxu0 %v219
    %v523 = vpop.f32.mrf.mxu0
    %v524 = vadd.f32 0.0, %v523
    %525 = vmatmul.f32.gmra.mxu0 %v222
    %v526 = vpop.f32.mrf.mxu0
    %v527 = vadd.f32 0.0, %v526
    %528 = vmatmul.f32.gmra.mxu0 %v225
    %v529 = vpop.f32.mrf.mxu0
    %v530 = vadd.f32 0.0, %v529
    %531 = vmatmul.f32.gmra.mxu0 %v228
    %v532 = vpop.f32.mrf.mxu0
    %v533 = vadd.f32 0.0, %v532
    %534 = vmatmul.f32.gmra.mxu0 %v231
    %v535 = vpop.f32.mrf.mxu0
    %v536 = vadd.f32 0.0, %v535
    %537 = vmatmul.f32.gmra.mxu0 %v234
    %v538 = vpop.f32.mrf.mxu0
    %v539 = vadd.f32 0.0, %v538
    %540 = vmatmul.f32.gmra.mxu0 %v237
    %v541 = vpop.f32.mrf.mxu0
    %v542 = vadd.f32 0.0, %v541
    %543 = vmatmul.f32.gmra.mxu0 %v240
    %v544 = vpop.f32.mrf.mxu0
    %v545 = vadd.f32 0.0, %v544
    %546 = vmatmul.f32.gmra.mxu0 %v243
    %v547 = vpop.f32.mrf.mxu0
    %v548 = vadd.f32 0.0, %v547
    %549 = vmatmul.f32.gmra.mxu0 %v246
    %v550 = vpop.f32.mrf.mxu0
    %v551 = vadd.f32 0.0, %v550
    %552 = vmatmul.f32.gmra.mxu0 %v249
    %v553 = vpop.f32.mrf.mxu0
    %v554 = vadd.f32 0.0, %v553
    %555 = vmatmul.f32.gmra.mxu0 %v252
    %v556 = vpop.f32.mrf.mxu0
    %v557 = vadd.f32 0.0, %v556
    %558 = vmatmul.f32.gmra.mxu0 %v255
    %v559 = vpop.f32.mrf.mxu0
    %v560 = vadd.f32 0.0, %v559
    %561 = vmatmul.f32.gmra.mxu0 %v258
    %v562 = vpop.f32.mrf.mxu0
    %v563 = vadd.f32 0.0, %v562
    %564 = vmatmul.f32.gmra.mxu0 %v261
    %v565 = vpop.f32.mrf.mxu0
    %v566 = vadd.f32 0.0, %v565
    %567 = vmatmul.f32.gmra.mxu0 %v264
    %v568 = vpop.f32.mrf.mxu0
    %v569 = vadd.f32 0.0, %v568
    %570 = vmatmul.f32.gmra.mxu0 %v267
    %v571 = vpop.f32.mrf.mxu0
    %v572 = vadd.f32 0.0, %v571
    %573 = vmatmul.f32.gmra.mxu0 %v270
    %v574 = vpop.f32.mrf.mxu0
    %v575 = vadd.f32 0.0, %v574
    %576 = vmatmul.f32.gmra.mxu0 %v273
    %v577 = vpop.f32.mrf.mxu0
    %v578 = vadd.f32 0.0, %v577
    %579 = vmatmul.f32.gmra.mxu0 %v276
    %v580 = vpop.f32.mrf.mxu0
    %v581 = vadd.f32 0.0, %v580
    %582 = vmatmul.f32.gmra.mxu0 %v279
    %v583 = vpop.f32.mrf.mxu0
    %v584 = vadd.f32 0.0, %v583
    %585 = vmatmul.f32.gmra.mxu0 %v282
    %v586 = vpop.f32.mrf.mxu0
    %v587 = vadd.f32 0.0, %v586
    %588 = vmatmul.f32.gmra.mxu0 %v285
    %v589 = vpop.f32.mrf.mxu0
    %v590 = vadd.f32 0.0, %v589
    %591 = vmatmul.f32.gmra.mxu0 %v288
    %v592 = vpop.f32.mrf.mxu0
    %v593 = vadd.f32 0.0, %v592
    %594 = vmatmul.f32.gmra.mxu0 %v291
    %v595 = vpop.f32.mrf.mxu0
    %v596 = vadd.f32 0.0, %v595
    %597 = vmatmul.f32.gmra.mxu0 %v294
    %v598 = vpop.f32.mrf.mxu0
    %v599 = vadd.f32 0.0, %v598
    %600 = vmatmul.f32.gmra.mxu0 %v297
    %v601 = vpop.f32.mrf.mxu0
    %v602 = vadd.f32 0.0, %v601
    %603 = vmatmul.f32.gmra.mxu0 %v300
    %v604 = vpop.f32.mrf.mxu0
    %v605 = vadd.f32 0.0, %v604
    %606 = vmatmul.f32.gmra.mxu0 %v303
    %v607 = vpop.f32.mrf.mxu0
    %v608 = vadd.f32 0.0, %v607
    %609 = vmatmul.f32.gmra.mxu0 %v306
    %v610 = vpop.f32.mrf.mxu0
    %v611 = vadd.f32 0.0, %v610
    %612 = vmatmul.f32.gmra.mxu0 %v309
    %v613 = vpop.f32.mrf.mxu0
    %v614 = vadd.f32 0.0, %v613
    %615 = vmatmul.f32.gmra.mxu0 %v312
    %v616 = vpop.f32.mrf.mxu0
    %v617 = vadd.f32 0.0, %v616
    %618 = vmatmul.f32.gmra.mxu0 %v315
    %v619 = vpop.f32.mrf.mxu0
    %v620 = vadd.f32 0.0, %v619
    %621 = vmatmul.f32.gmra.mxu0 %v318
    %v622 = vpop.f32.mrf.mxu0
    %v623 = vadd.f32 0.0, %v622
    %624 = vmatmul.f32.gmra.mxu0 %v321
    %v625 = vpop.f32.mrf.mxu0
    %v626 = vadd.f32 0.0, %v625
    %627 = vmatmul.f32.gmra.mxu0 %v324
    %v628 = vpop.f32.mrf.mxu0
    %v629 = vadd.f32 0.0, %v628
    %630 = vmatmul.f32.gmra.mxu0 %v327
    %v631 = vpop.f32.mrf.mxu0
    %v632 = vadd.f32 0.0, %v631
    %633 = vmatmul.f32.gmra.mxu0 %v330
    %v634 = vpop.f32.mrf.mxu0
    %v635 = vadd.f32 0.0, %v634
    %636 = vmatmul.f32.gmra.mxu0 %v333
    %v637 = vpop.f32.mrf.mxu0
    %v638 = vadd.f32 0.0, %v637
    %639 = vmatmul.f32.gmra.mxu0 %v336
    %v640 = vpop.f32.mrf.mxu0
    %v641 = vadd.f32 0.0, %v640
    %642 = vmatmul.f32.gmra.mxu0 %v339
    %v643 = vpop.f32.mrf.mxu0
    %v644 = vadd.f32 0.0, %v643
    %645 = vmatmul.f32.gmra.mxu0 %v342
    %v646 = vpop.f32.mrf.mxu0
    %v647 = vadd.f32 0.0, %v646
    %648 = vmatmul.f32.gmra.mxu0 %v345
    %v649 = vpop.f32.mrf.mxu0
    %v650 = vadd.f32 0.0, %v649
    %651 = vmatmul.f32.gmra.mxu0 %v348
    %v652 = vpop.f32.mrf.mxu0
    %v653 = vadd.f32 0.0, %v652
    %654 = vmatmul.f32.gmra.mxu0 %v351
    %v655 = vpop.f32.mrf.mxu0
    %v656 = vadd.f32 0.0, %v655
    %657 = vmatmul.f32.gmra.mxu0 %v354
    %v658 = vpop.f32.mrf.mxu0
    %v659 = vadd.f32 0.0, %v658
    %660 = vmatmul.f32.gmra.mxu0 %v357
    %v661 = vpop.f32.mrf.mxu0
    %v662 = vadd.f32 0.0, %v661
    %663 = vmatmul.f32.gmra.mxu0 %v360
    %v664 = vpop.f32.mrf.mxu0
    %v665 = vadd.f32 0.0, %v664
    %666 = vmatmul.f32.gmra.mxu0 %v363
    %v667 = vpop.f32.mrf.mxu0
    %v668 = vadd.f32 0.0, %v667
    %669 = vmatmul.f32.gmra.mxu0 %v366
    %v670 = vpop.f32.mrf.mxu0
    %v671 = vadd.f32 0.0, %v670
    %672 = vmatmul.f32.gmra.mxu0 %v369
    %v673 = vpop.f32.mrf.mxu0
    %v674 = vadd.f32 0.0, %v673
    %675 = vmatmul.f32.gmra.mxu0 %v372
    %v676 = vpop.f32.mrf.mxu0
    %v677 = vadd.f32 0.0, %v676
    %678 = vmatmul.f32.gmra.mxu0 %v375
    %v679 = vpop.f32.mrf.mxu0
    %v680 = vadd.f32 0.0, %v679
    %681 = vmatmul.f32.gmra.mxu0 %v378
    %v682 = vpop.f32.mrf.mxu0
    %v683 = vadd.f32 0.0, %v682
    %684 = vmatmul.f32.gmra.mxu0 %v381
    %v685 = vpop.f32.mrf.mxu0
    %v686 = vadd.f32 0.0, %v685
    %687 = vmatmul.f32.gmra.mxu0 %v384
    %v688 = vpop.f32.mrf.mxu0
    %v689 = vadd.f32 0.0, %v688
    %690 = vmatmul.f32.gmra.mxu0 %v387
    %v691 = vpop.f32.mrf.mxu0
    %v692 = vadd.f32 0.0, %v691
    %693 = vmatmul.f32.gmra.mxu0 %v390
    %v694 = vpop.f32.mrf.mxu0
    %v695 = vadd.f32 0.0, %v694
    %696 = vmatmul.f32.gmra.mxu0 %v393
    %v697 = vpop.f32.mrf.mxu0
    %v698 = vadd.f32 0.0, %v697
    %699 = vmatmul.f32.gmra.mxu0 %v396
    %v700 = vpop.f32.mrf.mxu0
    %v701 = vadd.f32 0.0, %v700
    %702 = vmatmul.f32.gmra.mxu0 %v399
    %v703 = vpop.f32.mrf.mxu0
    %v704 = vadd.f32 0.0, %v703
    %705 = vmatmul.f32.gmra.mxu0 %v402
    %v706 = vpop.f32.mrf.mxu0
    %v707 = vadd.f32 0.0, %v706
    %708 = vdwg.mxu0
    %v709 = vld [vmem:[%s0] sm:$0xff]
    %v710 = vld [vmem:[%s0 + $0x8] sm:$0xff]
    %v711 = vld [vmem:[%s0 + $0x10] sm:$0xff]
    %v713 = vsel %vm115, %v709, 0
    %v716 = vsel %vm115, %v710, 0
    %v719 = vsel %vm115, %v711, 0
    %721 = vmatpush.msra.mxu0 0.0
    %722 = vmatpush.msra.mxu0 0.0
    %723 = vmatpush.msra.mxu0 0.0
    %724 = vmatpush.msra.mxu0 0.0
    %725 = vmatpush.msra.mxu0 0.0
    %726 = vmatpush.msra.mxu0 0.0
    %727 = vmatpush.msra.mxu0 0.0
    %728 = vmatpush.msra.mxu0 0.0
    %729 = vmatpush.msra.mxu0 0.0
    %730 = vmatpush.msra.mxu0 0.0
    %731 = vmatpush.msra.mxu0 0.0
    %732 = vmatpush.msra.mxu0 0.0
    %733 = vmatpush.msra.mxu0 0.0
    %734 = vmatpush.msra.mxu0 0.0
    %735 = vmatpush.msra.mxu0 %v425
    %736 = vmatpush.msra.mxu0 %v422
    %737 = vmatmul.f32.gmra.mxu0 %v713
    %v738 = vpop.f32.mrf.mxu0
    %v739 = vadd.f32 0.0, %v738
    %740 = vmatmul.f32.gmra.mxu0 %v716
    %v741 = vpop.f32.mrf.mxu0
    %v742 = vadd.f32 0.0, %v741
    %743 = vmatmul.f32.gmra.mxu0 %v719
    %v744 = vpop.f32.mrf.mxu0
    %v745 = vadd.f32 0.0, %v744
    %746 = vdwg.mxu0
    %vm747 = vcmask 261120
    %748 = vst.msk [vmem:[#allocation2] sm:$0xff] %vm747, %v739
    %749 = vst.msk [vmem:[#allocation2 + $0x8] sm:$0xff] %vm747, %v742
    %750 = vst.msk [vmem:[#allocation2 + $0x10] sm:$0xff] %vm747, %v745
    %v751 = vsel %vm747, %v739, 0.0
    %v752 = vsel %vm747, %v742, 0.0
    %v753 = vadd.f32 %v751, %v752
    %v754 = vsel %vm747, %v745, 0.0
    %v755 = vadd.f32 %v753, %v754
    %v756 = vrot.slane %v755, 4
    %v757 = vadd.f32 %v755, %v756
    %v758 = vrot.slane %v757, 2
    %v759 = vadd.f32 %v757, %v758
    %v760 = vrot.slane %v759, 1
    %v761 = vadd.f32 %v759, %v760
    %vm762 = vcmask 253952
    %763 = vst.msk [vmem:[%s4] sm:$0x1] %vm762, %v761
    %764 = vmatpush.msra.mxu0 0.0
    %765 = vmatpush.msra.mxu0 0.0
    %766 = vmatpush.msra.mxu0 0.0
    %767 = vmatpush.msra.mxu0 0.0
    %768 = vmatpush.msra.mxu0 0.0
    %769 = vmatpush.msra.mxu0 0.0
    %770 = vmatpush.msra.mxu0 0.0
    %771 = vmatpush.msra.mxu0 0.0
    %772 = vmatpush.msra.mxu0 0.0
    %773 = vmatpush.msra.mxu0 0.0
    %774 = vmatpush.msra.mxu0 0.0
    %775 = vmatpush.msra.mxu0 0.0
    %776 = vmatpush.msra.mxu0 0.0
    %777 = vmatpush.msra.mxu0 0.0
    %778 = vmatpush.msra.mxu0 %v431
    %779 = vmatpush.msra.mxu0 %v428
    %780 = vmatmul.f32.gmra.mxu0 %v713
    %v781 = vpop.f32.mrf.mxu0
    %v782 = vadd.f32 0.0, %v781
    %783 = vmatmul.f32.gmra.mxu0 %v716
    %v784 = vpop.f32.mrf.mxu0
    %v785 = vadd.f32 0.0, %v784
    %786 = vmatmul.f32.gmra.mxu0 %v719
    %v787 = vpop.f32.mrf.mxu0
    %v788 = vadd.f32 0.0, %v787
    %789 = vdwg.mxu0
    %s790 = scalar_lea.vmem [#allocation2], 24
    %791 = vst.msk [vmem:[%s790] sm:$0xff] %vm747, %v782
    %792 = vst.msk [vmem:[%s790 + $0x8] sm:$0xff] %vm747, %v785
    %793 = vst.msk [vmem:[%s790 + $0x10] sm:$0xff] %vm747, %v788
    %v794 = vsel %vm747, %v782, 0.0
    %v795 = vsel %vm747, %v785, 0.0
    %v796 = vadd.f32 %v794, %v795
    %v797 = vsel %vm747, %v788, 0.0
    %v798 = vadd.f32 %v796, %v797
    %v799 = vrot.slane %v798, 4
    %v800 = vadd.f32 %v798, %v799
    %v801 = vrot.slane %v800, 2
    %v802 = vadd.f32 %v800, %v801
    %v803 = vrot.slane %v802, 1
    %v804 = vadd.f32 %v802, %v803
    %805 = vst.msk [vmem:[%s4 + $0x1] sm:$0x1] %vm762, %v804
    %806 = vmatpush.msra.mxu0 0.0
    %807 = vmatpush.msra.mxu0 0.0
    %808 = vmatpush.msra.mxu0 0.0
    %809 = vmatpush.msra.mxu0 0.0
    %810 = vmatpush.msra.mxu0 0.0
    %811 = vmatpush.msra.mxu0 0.0
    %812 = vmatpush.msra.mxu0 0.0
    %813 = vmatpush.msra.mxu0 0.0
    %814 = vmatpush.msra.mxu0 0.0
    %815 = vmatpush.msra.mxu0 0.0
    %816 = vmatpush.msra.mxu0 0.0
    %817 = vmatpush.msra.mxu0 0.0
    %818 = vmatpush.msra.mxu0 0.0
    %819 = vmatpush.msra.mxu0 0.0
    %820 = vmatpush.msra.mxu0 %v437
    %821 = vmatpush.msra.mxu0 %v434
    %822 = vmatmul.f32.gmra.mxu0 %v713
    %v823 = vpop.f32.mrf.mxu0
    %v824 = vadd.f32 0.0, %v823
    %825 = vmatmul.f32.gmra.mxu0 %v716
    %v826 = vpop.f32.mrf.mxu0
    %v827 = vadd.f32 0.0, %v826
    %828 = vmatmul.f32.gmra.mxu0 %v719
    %v829 = vpop.f32.mrf.mxu0
    %v830 = vadd.f32 0.0, %v829
    %831 = vdwg.mxu0
    %s832 = scalar_lea.vmem [#allocation2], 48
    %833 = vst.msk [vmem:[%s832] sm:$0xff] %vm747, %v824
    %834 = vst.msk [vmem:[%s832 + $0x8] sm:$0xff] %vm747, %v827
    %835 = vst.msk [vmem:[%s832 + $0x10] sm:$0xff] %vm747, %v830
    %v836 = vsel %vm747, %v824, 0.0
    %v837 = vsel %vm747, %v827, 0.0
    %v838 = vadd.f32 %v836, %v837
    %v839 = vsel %vm747, %v830, 0.0
    %v840 = vadd.f32 %v838, %v839
    %v841 = vrot.slane %v840, 4
    %v842 = vadd.f32 %v840, %v841
    %v843 = vrot.slane %v842, 2
    %v844 = vadd.f32 %v842, %v843
    %v845 = vrot.slane %v844, 1
    %v846 = vadd.f32 %v844, %v845
    %847 = vst.msk [vmem:[%s4 + $0x2] sm:$0x1] %vm762, %v846
    %848 = vmatpush.msra.mxu0 0.0
    %849 = vmatpush.msra.mxu0 0.0
    %850 = vmatpush.msra.mxu0 0.0
    %851 = vmatpush.msra.mxu0 0.0
    %852 = vmatpush.msra.mxu0 0.0
    %853 = vmatpush.msra.mxu0 0.0
    %854 = vmatpush.msra.mxu0 0.0
    %855 = vmatpush.msra.mxu0 0.0
    %856 = vmatpush.msra.mxu0 0.0
    %857 = vmatpush.msra.mxu0 0.0
    %858 = vmatpush.msra.mxu0 0.0
    %859 = vmatpush.msra.mxu0 0.0
    %860 = vmatpush.msra.mxu0 0.0
    %861 = vmatpush.msra.mxu0 0.0
    %862 = vmatpush.msra.mxu0 %v443
    %863 = vmatpush.msra.mxu0 %v440
    %864 = vmatmul.f32.gmra.mxu0 %v713
    %v865 = vpop.f32.mrf.mxu0
    %v866 = vadd.f32 0.0, %v865
    %867 = vmatmul.f32.gmra.mxu0 %v716
    %v868 = vpop.f32.mrf.mxu0
    %v869 = vadd.f32 0.0, %v868
    %870 = vmatmul.f32.gmra.mxu0 %v719
    %v871 = vpop.f32.mrf.mxu0
    %v872 = vadd.f32 0.0, %v871
    %873 = vdwg.mxu0
    %s874 = scalar_lea.vmem [#allocation2], 72
    %875 = vst.msk [vmem:[%s874] sm:$0xff] %vm747, %v866
    %876 = vst.msk [vmem:[%s874 + $0x8] sm:$0xff] %vm747, %v869
    %877 = vst.msk [vmem:[%s874 + $0x10] sm:$0xff] %vm747, %v872
    %v878 = vsel %vm747, %v866, 0.0
    %v879 = vsel %vm747, %v869, 0.0
    %v880 = vadd.f32 %v878, %v879
    %v881 = vsel %vm747, %v872, 0.0
    %v882 = vadd.f32 %v880, %v881
    %v883 = vrot.slane %v882, 4
    %v884 = vadd.f32 %v882, %v883
    %v885 = vrot.slane %v884, 2
    %v886 = vadd.f32 %v884, %v885
    %v887 = vrot.slane %v886, 1
    %v888 = vadd.f32 %v886, %v887
    %889 = vst.msk [vmem:[%s4 + $0x3] sm:$0x1] %vm762, %v888
    %890 = vmatpush.msra.mxu0 0.0
    %891 = vmatpush.msra.mxu0 0.0
    %892 = vmatpush.msra.mxu0 0.0
    %893 = vmatpush.msra.mxu0 0.0
    %894 = vmatpush.msra.mxu0 0.0
    %895 = vmatpush.msra.mxu0 0.0
    %896 = vmatpush.msra.mxu0 0.0
    %897 = vmatpush.msra.mxu0 0.0
    %898 = vmatpush.msra.mxu0 0.0
    %899 = vmatpush.msra.mxu0 0.0
    %900 = vmatpush.msra.mxu0 0.0
    %901 = vmatpush.msra.mxu0 0.0
    %902 = vmatpush.msra.mxu0 0.0
    %903 = vmatpush.msra.mxu0 0.0
    %904 = vmatpush.msra.mxu0 %v449
    %905 = vmatpush.msra.mxu0 %v446
    %906 = vmatmul.f32.gmra.mxu0 %v713
    %v907 = vpop.f32.mrf.mxu0
    %v908 = vadd.f32 0.0, %v907
    %909 = vmatmul.f32.gmra.mxu0 %v716
    %v910 = vpop.f32.mrf.mxu0
    %v911 = vadd.f32 0.0, %v910
    %912 = vmatmul.f32.gmra.mxu0 %v719
    %v913 = vpop.f32.mrf.mxu0
    %v914 = vadd.f32 0.0, %v913
    %915 = vdwg.mxu0
    %s916 = scalar_lea.vmem [#allocation2], 96
    %917 = vst.msk [vmem:[%s916] sm:$0xff] %vm747, %v908
    %918 = vst.msk [vmem:[%s916 + $0x8] sm:$0xff] %vm747, %v911
    %919 = vst.msk [vmem:[%s916 + $0x10] sm:$0xff] %vm747, %v914
    %v920 = vsel %vm747, %v908, 0.0
    %v921 = vsel %vm747, %v911, 0.0
    %v922 = vadd.f32 %v920, %v921
    %v923 = vsel %vm747, %v914, 0.0
    %v924 = vadd.f32 %v922, %v923
    %v925 = vrot.slane %v924, 4
    %v926 = vadd.f32 %v924, %v925
    %v927 = vrot.slane %v926, 2
    %v928 = vadd.f32 %v926, %v927
    %v929 = vrot.slane %v928, 1
    %v930 = vadd.f32 %v928, %v929
    %931 = vst.msk [vmem:[%s4 + $0x4] sm:$0x1] %vm762, %v930
    %932 = vmatpush.msra.mxu0 0.0
    %933 = vmatpush.msra.mxu0 0.0
    %934 = vmatpush.msra.mxu0 0.0
    %935 = vmatpush.msra.mxu0 0.0
    %936 = vmatpush.msra.mxu0 0.0
    %937 = vmatpush.msra.mxu0 0.0
    %938 = vmatpush.msra.mxu0 0.0
    %939 = vmatpush.msra.mxu0 0.0
    %940 = vmatpush.msra.mxu0 0.0
    %941 = vmatpush.msra.mxu0 0.0
    %942 = vmatpush.msra.mxu0 0.0
    %943 = vmatpush.msra.mxu0 0.0
    %944 = vmatpush.msra.mxu0 0.0
    %945 = vmatpush.msra.mxu0 0.0
    %946 = vmatpush.msra.mxu0 %v455
    %947 = vmatpush.msra.mxu0 %v452
    %948 = vmatmul.f32.gmra.mxu0 %v713
    %v949 = vpop.f32.mrf.mxu0
    %v950 = vadd.f32 0.0, %v949
    %951 = vmatmul.f32.gmra.mxu0 %v716
    %v952 = vpop.f32.mrf.mxu0
    %v953 = vadd.f32 0.0, %v952
    %954 = vmatmul.f32.gmra.mxu0 %v719
    %v955 = vpop.f32.mrf.mxu0
    %v956 = vadd.f32 0.0, %v955
    %957 = vdwg.mxu0
    %s958 = scalar_lea.vmem [#allocation2], 120
    %959 = vst.msk [vmem:[%s958] sm:$0xff] %vm747, %v950
    %960 = vst.msk [vmem:[%s958 + $0x8] sm:$0xff] %vm747, %v953
    %961 = vst.msk [vmem:[%s958 + $0x10] sm:$0xff] %vm747, %v956
    %v962 = vsel %vm747, %v950, 0.0
    %v963 = vsel %vm747, %v953, 0.0
    %v964 = vadd.f32 %v962, %v963
    %v965 = vsel %vm747, %v956, 0.0
    %v966 = vadd.f32 %v964, %v965
    %v967 = vrot.slane %v966, 4
    %v968 = vadd.f32 %v966, %v967
    %v969 = vrot.slane %v968, 2
    %v970 = vadd.f32 %v968, %v969
    %v971 = vrot.slane %v970, 1
    %v972 = vadd.f32 %v970, %v971
    %973 = vst.msk [vmem:[%s4 + $0x5] sm:$0x1] %vm762, %v972
    %974 = vmatpush.msra.mxu0 0.0
    %975 = vmatpush.msra.mxu0 0.0
    %976 = vmatpush.msra.mxu0 0.0
    %977 = vmatpush.msra.mxu0 0.0
    %978 = vmatpush.msra.mxu0 0.0
    %979 = vmatpush.msra.mxu0 0.0
    %980 = vmatpush.msra.mxu0 0.0
    %981 = vmatpush.msra.mxu0 0.0
    %982 = vmatpush.msra.mxu0 0.0
    %983 = vmatpush.msra.mxu0 0.0
    %984 = vmatpush.msra.mxu0 0.0
    %985 = vmatpush.msra.mxu0 0.0
    %986 = vmatpush.msra.mxu0 0.0
    %987 = vmatpush.msra.mxu0 0.0
    %988 = vmatpush.msra.mxu0 %v461
    %989 = vmatpush.msra.mxu0 %v458
    %990 = vmatmul.f32.gmra.mxu0 %v713
    %v991 = vpop.f32.mrf.mxu0
    %v992 = vadd.f32 0.0, %v991
    %993 = vmatmul.f32.gmra.mxu0 %v716
    %v994 = vpop.f32.mrf.mxu0
    %v995 = vadd.f32 0.0, %v994
    %996 = vmatmul.f32.gmra.mxu0 %v719
    %v997 = vpop.f32.mrf.mxu0
    %v998 = vadd.f32 0.0, %v997
    %999 = vdwg.mxu0
    %s1000 = scalar_lea.vmem [#allocation2], 144
    %1001 = vst.msk [vmem:[%s1000] sm:$0xff] %vm747, %v992
    %1002 = vst.msk [vmem:[%s1000 + $0x8] sm:$0xff] %vm747, %v995
    %1003 = vst.msk [vmem:[%s1000 + $0x10] sm:$0xff] %vm747, %v998
    %v1004 = vsel %vm747, %v992, 0.0
    %v1005 = vsel %vm747, %v995, 0.0
    %v1006 = vadd.f32 %v1004, %v1005
    %v1007 = vsel %vm747, %v998, 0.0
    %v1008 = vadd.f32 %v1006, %v1007
    %v1009 = vrot.slane %v1008, 4
    %v1010 = vadd.f32 %v1008, %v1009
    %v1011 = vrot.slane %v1010, 2
    %v1012 = vadd.f32 %v1010, %v1011
    %v1013 = vrot.slane %v1012, 1
    %v1014 = vadd.f32 %v1012, %v1013
    %1015 = vst.msk [vmem:[%s4 + $0x6] sm:$0x1] %vm762, %v1014
    %1016 = vmatpush.msra.mxu0 0.0
    %1017 = vmatpush.msra.mxu0 0.0
    %1018 = vmatpush.msra.mxu0 0.0
    %1019 = vmatpush.msra.mxu0 0.0
    %1020 = vmatpush.msra.mxu0 0.0
    %1021 = vmatpush.msra.mxu0 0.0
    %1022 = vmatpush.msra.mxu0 0.0
    %1023 = vmatpush.msra.mxu0 0.0
    %1024 = vmatpush.msra.mxu0 0.0
    %1025 = vmatpush.msra.mxu0 0.0
    %1026 = vmatpush.msra.mxu0 0.0
    %1027 = vmatpush.msra.mxu0 0.0
    %1028 = vmatpush.msra.mxu0 0.0
    %1029 = vmatpush.msra.mxu0 0.0
    %1030 = vmatpush.msra.mxu0 %v467
    %1031 = vmatpush.msra.mxu0 %v464
    %1032 = vmatmul.f32.gmra.mxu0 %v713
    %v1033 = vpop.f32.mrf.mxu0
    %v1034 = vadd.f32 0.0, %v1033
    %1035 = vmatmul.f32.gmra.mxu0 %v716
    %v1036 = vpop.f32.mrf.mxu0
    %v1037 = vadd.f32 0.0, %v1036
    %1038 = vmatmul.f32.gmra.mxu0 %v719
    %v1039 = vpop.f32.mrf.mxu0
    %v1040 = vadd.f32 0.0, %v1039
    %1041 = vdwg.mxu0
    %s1042 = scalar_lea.vmem [#allocation2], 168
    %1043 = vst.msk [vmem:[%s1042] sm:$0xff] %vm747, %v1034
    %1044 = vst.msk [vmem:[%s1042 + $0x8] sm:$0xff] %vm747, %v1037
    %1045 = vst.msk [vmem:[%s1042 + $0x10] sm:$0xff] %vm747, %v1040
    %v1046 = vsel %vm747, %v1034, 0.0
    %v1047 = vsel %vm747, %v1037, 0.0
    %v1048 = vadd.f32 %v1046, %v1047
    %v1049 = vsel %vm747, %v1040, 0.0
    %v1050 = vadd.f32 %v1048, %v1049
    %v1051 = vrot.slane %v1050, 4
    %v1052 = vadd.f32 %v1050, %v1051
    %v1053 = vrot.slane %v1052, 2
    %v1054 = vadd.f32 %v1052, %v1053
    %v1055 = vrot.slane %v1054, 1
    %v1056 = vadd.f32 %v1054, %v1055
    %1057 = vst.msk [vmem:[%s4 + $0x7] sm:$0x1] %vm762, %v1056
    %1058 = vmatpush.msra.mxu0 0.0
    %1059 = vmatpush.msra.mxu0 0.0
    %1060 = vmatpush.msra.mxu0 0.0
    %1061 = vmatpush.msra.mxu0 0.0
    %1062 = vmatpush.msra.mxu0 0.0
    %1063 = vmatpush.msra.mxu0 0.0
    %1064 = vmatpush.msra.mxu0 0.0
    %1065 = vmatpush.msra.mxu0 0.0
    %1066 = vmatpush.msra.mxu0 0.0
    %1067 = vmatpush.msra.mxu0 0.0
    %1068 = vmatpush.msra.mxu0 0.0
    %1069 = vmatpush.msra.mxu0 0.0
    %1070 = vmatpush.msra.mxu0 0.0
    %1071 = vmatpush.msra.mxu0 0.0
    %1072 = vmatpush.msra.mxu0 %v473
    %1073 = vmatpush.msra.mxu0 %v470
    %1074 = vmatmul.f32.gmra.mxu0 %v713
    %v1075 = vpop.f32.mrf.mxu0
    %v1076 = vadd.f32 0.0, %v1075
    %1077 = vmatmul.f32.gmra.mxu0 %v716
    %v1078 = vpop.f32.mrf.mxu0
    %v1079 = vadd.f32 0.0, %v1078
    %1080 = vmatmul.f32.gmra.mxu0 %v719
    %v1081 = vpop.f32.mrf.mxu0
    %v1082 = vadd.f32 0.0, %v1081
    %1083 = vdwg.mxu0
    %s1084 = scalar_lea.vmem [#allocation2], 192
    %1085 = vst.msk [vmem:[%s1084] sm:$0xff] %vm747, %v1076
    %1086 = vst.msk [vmem:[%s1084 + $0x8] sm:$0xff] %vm747, %v1079
    %1087 = vst.msk [vmem:[%s1084 + $0x10] sm:$0xff] %vm747, %v1082
    %v1088 = vsel %vm747, %v1076, 0.0
    %v1089 = vsel %vm747, %v1079, 0.0
    %v1090 = vadd.f32 %v1088, %v1089
    %v1091 = vsel %vm747, %v1082, 0.0
    %v1092 = vadd.f32 %v1090, %v1091
    %v1093 = vrot.slane %v1092, 4
    %v1094 = vadd.f32 %v1092, %v1093
    %v1095 = vrot.slane %v1094, 2
    %v1096 = vadd.f32 %v1094, %v1095
    %v1097 = vrot.slane %v1096, 1
    %v1098 = vadd.f32 %v1096, %v1097
    %1099 = vst.msk [vmem:[%s4 + $0x8] sm:$0x1] %vm762, %v1098
    %1100 = vmatpush.msra.mxu0 0.0
    %1101 = vmatpush.msra.mxu0 0.0
    %1102 = vmatpush.msra.mxu0 0.0
    %1103 = vmatpush.msra.mxu0 0.0
    %1104 = vmatpush.msra.mxu0 0.0
    %1105 = vmatpush.msra.mxu0 0.0
    %1106 = vmatpush.msra.mxu0 0.0
    %1107 = vmatpush.msra.mxu0 0.0
    %1108 = vmatpush.msra.mxu0 0.0
    %1109 = vmatpush.msra.mxu0 0.0
    %1110 = vmatpush.msra.mxu0 0.0
    %1111 = vmatpush.msra.mxu0 0.0
    %1112 = vmatpush.msra.mxu0 0.0
    %1113 = vmatpush.msra.mxu0 0.0
    %1114 = vmatpush.msra.mxu0 %v479
    %1115 = vmatpush.msra.mxu0 %v476
    %1116 = vmatmul.f32.gmra.mxu0 %v713
    %v1117 = vpop.f32.mrf.mxu0
    %v1118 = vadd.f32 0.0, %v1117
    %1119 = vmatmul.f32.gmra.mxu0 %v716
    %v1120 = vpop.f32.mrf.mxu0
    %v1121 = vadd.f32 0.0, %v1120
    %1122 = vmatmul.f32.gmra.mxu0 %v719
    %v1123 = vpop.f32.mrf.mxu0
    %v1124 = vadd.f32 0.0, %v1123
    %1125 = vdwg.mxu0
    %s1126 = scalar_lea.vmem [#allocation2], 216
    %1127 = vst.msk [vmem:[%s1126] sm:$0xff] %vm747, %v1118
    %1128 = vst.msk [vmem:[%s1126 + $0x8] sm:$0xff] %vm747, %v1121
    %1129 = vst.msk [vmem:[%s1126 + $0x10] sm:$0xff] %vm747, %v1124
    %v1130 = vsel %vm747, %v1118, 0.0
    %v1131 = vsel %vm747, %v1121, 0.0
    %v1132 = vadd.f32 %v1130, %v1131
    %v1133 = vsel %vm747, %v1124, 0.0
    %v1134 = vadd.f32 %v1132, %v1133
    %v1135 = vrot.slane %v1134, 4
    %v1136 = vadd.f32 %v1134, %v1135
    %v1137 = vrot.slane %v1136, 2
    %v1138 = vadd.f32 %v1136, %v1137
    %v1139 = vrot.slane %v1138, 1
    %v1140 = vadd.f32 %v1138, %v1139
    %1141 = vst.msk [vmem:[%s4 + $0x9] sm:$0x1] %vm762, %v1140
    %1142 = vmatpush.msra.mxu0 0.0
    %1143 = vmatpush.msra.mxu0 0.0
    %1144 = vmatpush.msra.mxu0 0.0
    %1145 = vmatpush.msra.mxu0 0.0
    %1146 = vmatpush.msra.mxu0 0.0
    %1147 = vmatpush.msra.mxu0 0.0
    %1148 = vmatpush.msra.mxu0 0.0
    %1149 = vmatpush.msra.mxu0 0.0
    %1150 = vmatpush.msra.mxu0 0.0
    %1151 = vmatpush.msra.mxu0 0.0
    %1152 = vmatpush.msra.mxu0 0.0
    %1153 = vmatpush.msra.mxu0 0.0
    %1154 = vmatpush.msra.mxu0 0.0
    %1155 = vmatpush.msra.mxu0 0.0
    %1156 = vmatpush.msra.mxu0 %v485
    %1157 = vmatpush.msra.mxu0 %v482
    %1158 = vmatmul.f32.gmra.mxu0 %v713
    %v1159 = vpop.f32.mrf.mxu0
    %v1160 = vadd.f32 0.0, %v1159
    %1161 = vmatmul.f32.gmra.mxu0 %v716
    %v1162 = vpop.f32.mrf.mxu0
    %v1163 = vadd.f32 0.0, %v1162
    %1164 = vmatmul.f32.gmra.mxu0 %v719
    %v1165 = vpop.f32.mrf.mxu0
    %v1166 = vadd.f32 0.0, %v1165
    %1167 = vdwg.mxu0
    %s1168 = scalar_lea.vmem [#allocation2], 240
    %1169 = vst.msk [vmem:[%s1168] sm:$0xff] %vm747, %v1160
    %1170 = vst.msk [vmem:[%s1168 + $0x8] sm:$0xff] %vm747, %v1163
    %1171 = vst.msk [vmem:[%s1168 + $0x10] sm:$0xff] %vm747, %v1166
    %v1172 = vsel %vm747, %v1160, 0.0
    %v1173 = vsel %vm747, %v1163, 0.0
    %v1174 = vadd.f32 %v1172, %v1173
    %v1175 = vsel %vm747, %v1166, 0.0
    %v1176 = vadd.f32 %v1174, %v1175
    %v1177 = vrot.slane %v1176, 4
    %v1178 = vadd.f32 %v1176, %v1177
    %v1179 = vrot.slane %v1178, 2
    %v1180 = vadd.f32 %v1178, %v1179
    %v1181 = vrot.slane %v1180, 1
    %v1182 = vadd.f32 %v1180, %v1181
    %1183 = vst.msk [vmem:[%s4 + $0xa] sm:$0x1] %vm762, %v1182
    %1184 = vmatpush.msra.mxu0 0.0
    %1185 = vmatpush.msra.mxu0 0.0
    %1186 = vmatpush.msra.mxu0 0.0
    %1187 = vmatpush.msra.mxu0 0.0
    %1188 = vmatpush.msra.mxu0 0.0
    %1189 = vmatpush.msra.mxu0 0.0
    %1190 = vmatpush.msra.mxu0 0.0
    %1191 = vmatpush.msra.mxu0 0.0
    %1192 = vmatpush.msra.mxu0 0.0
    %1193 = vmatpush.msra.mxu0 0.0
    %1194 = vmatpush.msra.mxu0 0.0
    %1195 = vmatpush.msra.mxu0 0.0
    %1196 = vmatpush.msra.mxu0 0.0
    %1197 = vmatpush.msra.mxu0 0.0
    %1198 = vmatpush.msra.mxu0 %v491
    %1199 = vmatpush.msra.mxu0 %v488
    %1200 = vmatmul.f32.gmra.mxu0 %v713
    %v1201 = vpop.f32.mrf.mxu0
    %v1202 = vadd.f32 0.0, %v1201
    %1203 = vmatmul.f32.gmra.mxu0 %v716
    %v1204 = vpop.f32.mrf.mxu0
    %v1205 = vadd.f32 0.0, %v1204
    %1206 = vmatmul.f32.gmra.mxu0 %v719
    %v1207 = vpop.f32.mrf.mxu0
    %v1208 = vadd.f32 0.0, %v1207
    %1209 = vdwg.mxu0
    %s1210 = scalar_lea.vmem [#allocation2], 264
    %1211 = vst.msk [vmem:[%s1210] sm:$0xff] %vm747, %v1202
    %1212 = vst.msk [vmem:[%s1210 + $0x8] sm:$0xff] %vm747, %v1205
    %1213 = vst.msk [vmem:[%s1210 + $0x10] sm:$0xff] %vm747, %v1208
    %v1214 = vsel %vm747, %v1202, 0.0
    %v1215 = vsel %vm747, %v1205, 0.0
    %v1216 = vadd.f32 %v1214, %v1215
    %v1217 = vsel %vm747, %v1208, 0.0
    %v1218 = vadd.f32 %v1216, %v1217
    %v1219 = vrot.slane %v1218, 4
    %v1220 = vadd.f32 %v1218, %v1219
    %v1221 = vrot.slane %v1220, 2
    %v1222 = vadd.f32 %v1220, %v1221
    %v1223 = vrot.slane %v1222, 1
    %v1224 = vadd.f32 %v1222, %v1223
    %1225 = vst.msk [vmem:[%s4 + $0xb] sm:$0x1] %vm762, %v1224
    %1226 = vmatpush.msra.mxu0 0.0
    %1227 = vmatpush.msra.mxu0 0.0
    %1228 = vmatpush.msra.mxu0 0.0
    %1229 = vmatpush.msra.mxu0 0.0
    %1230 = vmatpush.msra.mxu0 0.0
    %1231 = vmatpush.msra.mxu0 0.0
    %1232 = vmatpush.msra.mxu0 0.0
    %1233 = vmatpush.msra.mxu0 0.0
    %1234 = vmatpush.msra.mxu0 0.0
    %1235 = vmatpush.msra.mxu0 0.0
    %1236 = vmatpush.msra.mxu0 0.0
    %1237 = vmatpush.msra.mxu0 0.0
    %1238 = vmatpush.msra.mxu0 0.0
    %1239 = vmatpush.msra.mxu0 0.0
    %1240 = vmatpush.msra.mxu0 %v497
    %1241 = vmatpush.msra.mxu0 %v494
    %1242 = vmatmul.f32.gmra.mxu0 %v713
    %v1243 = vpop.f32.mrf.mxu0
    %v1244 = vadd.f32 0.0, %v1243
    %1245 = vmatmul.f32.gmra.mxu0 %v716
    %v1246 = vpop.f32.mrf.mxu0
    %v1247 = vadd.f32 0.0, %v1246
    %1248 = vmatmul.f32.gmra.mxu0 %v719
    %v1249 = vpop.f32.mrf.mxu0
    %v1250 = vadd.f32 0.0, %v1249
    %1251 = vdwg.mxu0
    %s1252 = scalar_lea.vmem [#allocation2], 288
    %1253 = vst.msk [vmem:[%s1252] sm:$0xff] %vm747, %v1244
    %1254 = vst.msk [vmem:[%s1252 + $0x8] sm:$0xff] %vm747, %v1247
    %1255 = vst.msk [vmem:[%s1252 + $0x10] sm:$0xff] %vm747, %v1250
    %v1256 = vsel %vm747, %v1244, 0.0
    %v1257 = vsel %vm747, %v1247, 0.0
    %v1258 = vadd.f32 %v1256, %v1257
    %v1259 = vsel %vm747, %v1250, 0.0
    %v1260 = vadd.f32 %v1258, %v1259
    %v1261 = vrot.slane %v1260, 4
    %v1262 = vadd.f32 %v1260, %v1261
    %v1263 = vrot.slane %v1262, 2
    %v1264 = vadd.f32 %v1262, %v1263
    %v1265 = vrot.slane %v1264, 1
    %v1266 = vadd.f32 %v1264, %v1265
    %1267 = vst.msk [vmem:[%s4 + $0xc] sm:$0x1] %vm762, %v1266
    %1268 = vmatpush.msra.mxu0 0.0
    %1269 = vmatpush.msra.mxu0 0.0
    %1270 = vmatpush.msra.mxu0 0.0
    %1271 = vmatpush.msra.mxu0 0.0
    %1272 = vmatpush.msra.mxu0 0.0
    %1273 = vmatpush.msra.mxu0 0.0
    %1274 = vmatpush.msra.mxu0 0.0
    %1275 = vmatpush.msra.mxu0 0.0
    %1276 = vmatpush.msra.mxu0 0.0
    %1277 = vmatpush.msra.mxu0 0.0
    %1278 = vmatpush.msra.mxu0 0.0
    %1279 = vmatpush.msra.mxu0 0.0
    %1280 = vmatpush.msra.mxu0 0.0
    %1281 = vmatpush.msra.mxu0 0.0
    %1282 = vmatpush.msra.mxu0 %v503
    %1283 = vmatpush.msra.mxu0 %v500
    %1284 = vmatmul.f32.gmra.mxu0 %v713
    %v1285 = vpop.f32.mrf.mxu0
    %v1286 = vadd.f32 0.0, %v1285
    %1287 = vmatmul.f32.gmra.mxu0 %v716
    %v1288 = vpop.f32.mrf.mxu0
    %v1289 = vadd.f32 0.0, %v1288
    %1290 = vmatmul.f32.gmra.mxu0 %v719
    %v1291 = vpop.f32.mrf.mxu0
    %v1292 = vadd.f32 0.0, %v1291
    %1293 = vdwg.mxu0
    %s1294 = scalar_lea.vmem [#allocation2], 312
    %1295 = vst.msk [vmem:[%s1294] sm:$0xff] %vm747, %v1286
    %1296 = vst.msk [vmem:[%s1294 + $0x8] sm:$0xff] %vm747, %v1289
    %1297 = vst.msk [vmem:[%s1294 + $0x10] sm:$0xff] %vm747, %v1292
    %v1298 = vsel %vm747, %v1286, 0.0
    %v1299 = vsel %vm747, %v1289, 0.0
    %v1300 = vadd.f32 %v1298, %v1299
    %v1301 = vsel %vm747, %v1292, 0.0
    %v1302 = vadd.f32 %v1300, %v1301
    %v1303 = vrot.slane %v1302, 4
    %v1304 = vadd.f32 %v1302, %v1303
    %v1305 = vrot.slane %v1304, 2
    %v1306 = vadd.f32 %v1304, %v1305
    %v1307 = vrot.slane %v1306, 1
    %v1308 = vadd.f32 %v1306, %v1307
    %1309 = vst.msk [vmem:[%s4 + $0xd] sm:$0x1] %vm762, %v1308
    %1310 = vmatpush.msra.mxu0 0.0
    %1311 = vmatpush.msra.mxu0 0.0
    %1312 = vmatpush.msra.mxu0 0.0
    %1313 = vmatpush.msra.mxu0 0.0
    %1314 = vmatpush.msra.mxu0 0.0
    %1315 = vmatpush.msra.mxu0 0.0
    %1316 = vmatpush.msra.mxu0 0.0
    %1317 = vmatpush.msra.mxu0 0.0
    %1318 = vmatpush.msra.mxu0 0.0
    %1319 = vmatpush.msra.mxu0 0.0
    %1320 = vmatpush.msra.mxu0 0.0
    %1321 = vmatpush.msra.mxu0 0.0
    %1322 = vmatpush.msra.mxu0 0.0
    %1323 = vmatpush.msra.mxu0 0.0
    %1324 = vmatpush.msra.mxu0 %v509
    %1325 = vmatpush.msra.mxu0 %v506
    %1326 = vmatmul.f32.gmra.mxu0 %v713
    %v1327 = vpop.f32.mrf.mxu0
    %v1328 = vadd.f32 0.0, %v1327
    %1329 = vmatmul.f32.gmra.mxu0 %v716
    %v1330 = vpop.f32.mrf.mxu0
    %v1331 = vadd.f32 0.0, %v1330
    %1332 = vmatmul.f32.gmra.mxu0 %v719
    %v1333 = vpop.f32.mrf.mxu0
    %v1334 = vadd.f32 0.0, %v1333
    %1335 = vdwg.mxu0
    %s1336 = scalar_lea.vmem [#allocation2], 336
    %1337 = vst.msk [vmem:[%s1336] sm:$0xff] %vm747, %v1328
    %1338 = vst.msk [vmem:[%s1336 + $0x8] sm:$0xff] %vm747, %v1331
    %1339 = vst.msk [vmem:[%s1336 + $0x10] sm:$0xff] %vm747, %v1334
    %v1340 = vsel %vm747, %v1328, 0.0
    %v1341 = vsel %vm747, %v1331, 0.0
    %v1342 = vadd.f32 %v1340, %v1341
    %v1343 = vsel %vm747, %v1334, 0.0
    %v1344 = vadd.f32 %v1342, %v1343
    %v1345 = vrot.slane %v1344, 4
    %v1346 = vadd.f32 %v1344, %v1345
    %v1347 = vrot.slane %v1346, 2
    %v1348 = vadd.f32 %v1346, %v1347
    %v1349 = vrot.slane %v1348, 1
    %v1350 = vadd.f32 %v1348, %v1349
    %1351 = vst.msk [vmem:[%s4 + $0xe] sm:$0x1] %vm762, %v1350
    %1352 = vmatpush.msra.mxu0 0.0
    %1353 = vmatpush.msra.mxu0 0.0
    %1354 = vmatpush.msra.mxu0 0.0
    %1355 = vmatpush.msra.mxu0 0.0
    %1356 = vmatpush.msra.mxu0 0.0
    %1357 = vmatpush.msra.mxu0 0.0
    %1358 = vmatpush.msra.mxu0 0.0
    %1359 = vmatpush.msra.mxu0 0.0
    %1360 = vmatpush.msra.mxu0 0.0
    %1361 = vmatpush.msra.mxu0 0.0
    %1362 = vmatpush.msra.mxu0 0.0
    %1363 = vmatpush.msra.mxu0 0.0
    %1364 = vmatpush.msra.mxu0 0.0
    %1365 = vmatpush.msra.mxu0 0.0
    %1366 = vmatpush.msra.mxu0 %v515
    %1367 = vmatpush.msra.mxu0 %v512
    %1368 = vmatmul.f32.gmra.mxu0 %v713
    %v1369 = vpop.f32.mrf.mxu0
    %v1370 = vadd.f32 0.0, %v1369
    %1371 = vmatmul.f32.gmra.mxu0 %v716
    %v1372 = vpop.f32.mrf.mxu0
    %v1373 = vadd.f32 0.0, %v1372
    %1374 = vmatmul.f32.gmra.mxu0 %v719
    %v1375 = vpop.f32.mrf.mxu0
    %v1376 = vadd.f32 0.0, %v1375
    %1377 = vdwg.mxu0
    %s1378 = scalar_lea.vmem [#allocation2], 360
    %1379 = vst.msk [vmem:[%s1378] sm:$0xff] %vm747, %v1370
    %1380 = vst.msk [vmem:[%s1378 + $0x8] sm:$0xff] %vm747, %v1373
    %1381 = vst.msk [vmem:[%s1378 + $0x10] sm:$0xff] %vm747, %v1376
    %v1382 = vsel %vm747, %v1370, 0.0
    %v1383 = vsel %vm747, %v1373, 0.0
    %v1384 = vadd.f32 %v1382, %v1383
    %v1385 = vsel %vm747, %v1376, 0.0
    %v1386 = vadd.f32 %v1384, %v1385
    %v1387 = vrot.slane %v1386, 4
    %v1388 = vadd.f32 %v1386, %v1387
    %v1389 = vrot.slane %v1388, 2
    %v1390 = vadd.f32 %v1388, %v1389
    %v1391 = vrot.slane %v1390, 1
    %v1392 = vadd.f32 %v1390, %v1391
    %1393 = vst.msk [vmem:[%s4 + $0xf] sm:$0x1] %vm762, %v1392
    %1394 = vmatpush.msra.mxu0 0.0
    %1395 = vmatpush.msra.mxu0 0.0
    %1396 = vmatpush.msra.mxu0 0.0
    %1397 = vmatpush.msra.mxu0 0.0
    %1398 = vmatpush.msra.mxu0 0.0
    %1399 = vmatpush.msra.mxu0 0.0
    %1400 = vmatpush.msra.mxu0 0.0
    %1401 = vmatpush.msra.mxu0 0.0
    %1402 = vmatpush.msra.mxu0 0.0
    %1403 = vmatpush.msra.mxu0 0.0
    %1404 = vmatpush.msra.mxu0 0.0
    %1405 = vmatpush.msra.mxu0 0.0
    %1406 = vmatpush.msra.mxu0 0.0
    %1407 = vmatpush.msra.mxu0 0.0
    %1408 = vmatpush.msra.mxu0 %v521
    %1409 = vmatpush.msra.mxu0 %v518
    %1410 = vmatmul.f32.gmra.mxu0 %v713
    %v1411 = vpop.f32.mrf.mxu0
    %v1412 = vadd.f32 0.0, %v1411
    %1413 = vmatmul.f32.gmra.mxu0 %v716
    %v1414 = vpop.f32.mrf.mxu0
    %v1415 = vadd.f32 0.0, %v1414
    %1416 = vmatmul.f32.gmra.mxu0 %v719
    %v1417 = vpop.f32.mrf.mxu0
    %v1418 = vadd.f32 0.0, %v1417
    %1419 = vdwg.mxu0
    %s1420 = scalar_lea.vmem [#allocation2], 384
    %1421 = vst.msk [vmem:[%s1420] sm:$0xff] %vm747, %v1412
    %1422 = vst.msk [vmem:[%s1420 + $0x8] sm:$0xff] %vm747, %v1415
    %1423 = vst.msk [vmem:[%s1420 + $0x10] sm:$0xff] %vm747, %v1418
    %v1424 = vsel %vm747, %v1412, 0.0
    %v1425 = vsel %vm747, %v1415, 0.0
    %v1426 = vadd.f32 %v1424, %v1425
    %v1427 = vsel %vm747, %v1418, 0.0
    %v1428 = vadd.f32 %v1426, %v1427
    %v1429 = vrot.slane %v1428, 4
    %v1430 = vadd.f32 %v1428, %v1429
    %v1431 = vrot.slane %v1430, 2
    %v1432 = vadd.f32 %v1430, %v1431
    %v1433 = vrot.slane %v1432, 1
    %v1434 = vadd.f32 %v1432, %v1433
    %1435 = vst.msk [vmem:[%s4 + $0x10] sm:$0x1] %vm762, %v1434
    %1436 = vmatpush.msra.mxu0 0.0
    %1437 = vmatpush.msra.mxu0 0.0
    %1438 = vmatpush.msra.mxu0 0.0
    %1439 = vmatpush.msra.mxu0 0.0
    %1440 = vmatpush.msra.mxu0 0.0
    %1441 = vmatpush.msra.mxu0 0.0
    %1442 = vmatpush.msra.mxu0 0.0
    %1443 = vmatpush.msra.mxu0 0.0
    %1444 = vmatpush.msra.mxu0 0.0
    %1445 = vmatpush.msra.mxu0 0.0
    %1446 = vmatpush.msra.mxu0 0.0
    %1447 = vmatpush.msra.mxu0 0.0
    %1448 = vmatpush.msra.mxu0 0.0
    %1449 = vmatpush.msra.mxu0 0.0
    %1450 = vmatpush.msra.mxu0 %v527
    %1451 = vmatpush.msra.mxu0 %v524
    %1452 = vmatmul.f32.gmra.mxu0 %v713
    %v1453 = vpop.f32.mrf.mxu0
    %v1454 = vadd.f32 0.0, %v1453
    %1455 = vmatmul.f32.gmra.mxu0 %v716
    %v1456 = vpop.f32.mrf.mxu0
    %v1457 = vadd.f32 0.0, %v1456
    %1458 = vmatmul.f32.gmra.mxu0 %v719
    %v1459 = vpop.f32.mrf.mxu0
    %v1460 = vadd.f32 0.0, %v1459
    %1461 = vdwg.mxu0
    %s1462 = scalar_lea.vmem [#allocation2], 408
    %1463 = vst.msk [vmem:[%s1462] sm:$0xff] %vm747, %v1454
    %1464 = vst.msk [vmem:[%s1462 + $0x8] sm:$0xff] %vm747, %v1457
    %1465 = vst.msk [vmem:[%s1462 + $0x10] sm:$0xff] %vm747, %v1460
    %v1466 = vsel %vm747, %v1454, 0.0
    %v1467 = vsel %vm747, %v1457, 0.0
    %v1468 = vadd.f32 %v1466, %v1467
    %v1469 = vsel %vm747, %v1460, 0.0
    %v1470 = vadd.f32 %v1468, %v1469
    %v1471 = vrot.slane %v1470, 4
    %v1472 = vadd.f32 %v1470, %v1471
    %v1473 = vrot.slane %v1472, 2
    %v1474 = vadd.f32 %v1472, %v1473
    %v1475 = vrot.slane %v1474, 1
    %v1476 = vadd.f32 %v1474, %v1475
    %1477 = vst.msk [vmem:[%s4 + $0x11] sm:$0x1] %vm762, %v1476
    %1478 = vmatpush.msra.mxu0 0.0
    %1479 = vmatpush.msra.mxu0 0.0
    %1480 = vmatpush.msra.mxu0 0.0
    %1481 = vmatpush.msra.mxu0 0.0
    %1482 = vmatpush.msra.mxu0 0.0
    %1483 = vmatpush.msra.mxu0 0.0
    %1484 = vmatpush.msra.mxu0 0.0
    %1485 = vmatpush.msra.mxu0 0.0
    %1486 = vmatpush.msra.mxu0 0.0
    %1487 = vmatpush.msra.mxu0 0.0
    %1488 = vmatpush.msra.mxu0 0.0
    %1489 = vmatpush.msra.mxu0 0.0
    %1490 = vmatpush.msra.mxu0 0.0
    %1491 = vmatpush.msra.mxu0 0.0
    %1492 = vmatpush.msra.mxu0 %v533
    %1493 = vmatpush.msra.mxu0 %v530
    %1494 = vmatmul.f32.gmra.mxu0 %v713
    %v1495 = vpop.f32.mrf.mxu0
    %v1496 = vadd.f32 0.0, %v1495
    %1497 = vmatmul.f32.gmra.mxu0 %v716
    %v1498 = vpop.f32.mrf.mxu0
    %v1499 = vadd.f32 0.0, %v1498
    %1500 = vmatmul.f32.gmra.mxu0 %v719
    %v1501 = vpop.f32.mrf.mxu0
    %v1502 = vadd.f32 0.0, %v1501
    %1503 = vdwg.mxu0
    %s1504 = scalar_lea.vmem [#allocation2], 432
    %1505 = vst.msk [vmem:[%s1504] sm:$0xff] %vm747, %v1496
    %1506 = vst.msk [vmem:[%s1504 + $0x8] sm:$0xff] %vm747, %v1499
    %1507 = vst.msk [vmem:[%s1504 + $0x10] sm:$0xff] %vm747, %v1502
    %v1508 = vsel %vm747, %v1496, 0.0
    %v1509 = vsel %vm747, %v1499, 0.0
    %v1510 = vadd.f32 %v1508, %v1509
    %v1511 = vsel %vm747, %v1502, 0.0
    %v1512 = vadd.f32 %v1510, %v1511
    %v1513 = vrot.slane %v1512, 4
    %v1514 = vadd.f32 %v1512, %v1513
    %v1515 = vrot.slane %v1514, 2
    %v1516 = vadd.f32 %v1514, %v1515
    %v1517 = vrot.slane %v1516, 1
    %v1518 = vadd.f32 %v1516, %v1517
    %1519 = vst.msk [vmem:[%s4 + $0x12] sm:$0x1] %vm762, %v1518
    %1520 = vmatpush.msra.mxu0 0.0
    %1521 = vmatpush.msra.mxu0 0.0
    %1522 = vmatpush.msra.mxu0 0.0
    %1523 = vmatpush.msra.mxu0 0.0
    %1524 = vmatpush.msra.mxu0 0.0
    %1525 = vmatpush.msra.mxu0 0.0
    %1526 = vmatpush.msra.mxu0 0.0
    %1527 = vmatpush.msra.mxu0 0.0
    %1528 = vmatpush.msra.mxu0 0.0
    %1529 = vmatpush.msra.mxu0 0.0
    %1530 = vmatpush.msra.mxu0 0.0
    %1531 = vmatpush.msra.mxu0 0.0
    %1532 = vmatpush.msra.mxu0 0.0
    %1533 = vmatpush.msra.mxu0 0.0
    %1534 = vmatpush.msra.mxu0 %v539
    %1535 = vmatpush.msra.mxu0 %v536
    %1536 = vmatmul.f32.gmra.mxu0 %v713
    %v1537 = vpop.f32.mrf.mxu0
    %v1538 = vadd.f32 0.0, %v1537
    %1539 = vmatmul.f32.gmra.mxu0 %v716
    %v1540 = vpop.f32.mrf.mxu0
    %v1541 = vadd.f32 0.0, %v1540
    %1542 = vmatmul.f32.gmra.mxu0 %v719
    %v1543 = vpop.f32.mrf.mxu0
    %v1544 = vadd.f32 0.0, %v1543
    %1545 = vdwg.mxu0
    %s1546 = scalar_lea.vmem [#allocation2], 456
    %1547 = vst.msk [vmem:[%s1546] sm:$0xff] %vm747, %v1538
    %1548 = vst.msk [vmem:[%s1546 + $0x8] sm:$0xff] %vm747, %v1541
    %1549 = vst.msk [vmem:[%s1546 + $0x10] sm:$0xff] %vm747, %v1544
    %v1550 = vsel %vm747, %v1538, 0.0
    %v1551 = vsel %vm747, %v1541, 0.0
    %v1552 = vadd.f32 %v1550, %v1551
    %v1553 = vsel %vm747, %v1544, 0.0
    %v1554 = vadd.f32 %v1552, %v1553
    %v1555 = vrot.slane %v1554, 4
    %v1556 = vadd.f32 %v1554, %v1555
    %v1557 = vrot.slane %v1556, 2
    %v1558 = vadd.f32 %v1556, %v1557
    %v1559 = vrot.slane %v1558, 1
    %v1560 = vadd.f32 %v1558, %v1559
    %1561 = vst.msk [vmem:[%s4 + $0x13] sm:$0x1] %vm762, %v1560
    %1562 = vmatpush.msra.mxu0 0.0
    %1563 = vmatpush.msra.mxu0 0.0
    %1564 = vmatpush.msra.mxu0 0.0
    %1565 = vmatpush.msra.mxu0 0.0
    %1566 = vmatpush.msra.mxu0 0.0
    %1567 = vmatpush.msra.mxu0 0.0
    %1568 = vmatpush.msra.mxu0 0.0
    %1569 = vmatpush.msra.mxu0 0.0
    %1570 = vmatpush.msra.mxu0 0.0
    %1571 = vmatpush.msra.mxu0 0.0
    %1572 = vmatpush.msra.mxu0 0.0
    %1573 = vmatpush.msra.mxu0 0.0
    %1574 = vmatpush.msra.mxu0 0.0
    %1575 = vmatpush.msra.mxu0 0.0
    %1576 = vmatpush.msra.mxu0 %v545
    %1577 = vmatpush.msra.mxu0 %v542
    %1578 = vmatmul.f32.gmra.mxu0 %v713
    %v1579 = vpop.f32.mrf.mxu0
    %v1580 = vadd.f32 0.0, %v1579
    %1581 = vmatmul.f32.gmra.mxu0 %v716
    %v1582 = vpop.f32.mrf.mxu0
    %v1583 = vadd.f32 0.0, %v1582
    %1584 = vmatmul.f32.gmra.mxu0 %v719
    %v1585 = vpop.f32.mrf.mxu0
    %v1586 = vadd.f32 0.0, %v1585
    %1587 = vdwg.mxu0
    %s1588 = scalar_lea.vmem [#allocation2], 480
    %1589 = vst.msk [vmem:[%s1588] sm:$0xff] %vm747, %v1580
    %1590 = vst.msk [vmem:[%s1588 + $0x8] sm:$0xff] %vm747, %v1583
    %1591 = vst.msk [vmem:[%s1588 + $0x10] sm:$0xff] %vm747, %v1586
    %v1592 = vsel %vm747, %v1580, 0.0
    %v1593 = vsel %vm747, %v1583, 0.0
    %v1594 = vadd.f32 %v1592, %v1593
    %v1595 = vsel %vm747, %v1586, 0.0
    %v1596 = vadd.f32 %v1594, %v1595
    %v1597 = vrot.slane %v1596, 4
    %v1598 = vadd.f32 %v1596, %v1597
    %v1599 = vrot.slane %v1598, 2
    %v1600 = vadd.f32 %v1598, %v1599
    %v1601 = vrot.slane %v1600, 1
    %v1602 = vadd.f32 %v1600, %v1601
    %1603 = vst.msk [vmem:[%s4 + $0x14] sm:$0x1] %vm762, %v1602
    %1604 = vmatpush.msra.mxu0 0.0
    %1605 = vmatpush.msra.mxu0 0.0
    %1606 = vmatpush.msra.mxu0 0.0
    %1607 = vmatpush.msra.mxu0 0.0
    %1608 = vmatpush.msra.mxu0 0.0
    %1609 = vmatpush.msra.mxu0 0.0
    %1610 = vmatpush.msra.mxu0 0.0
    %1611 = vmatpush.msra.mxu0 0.0
    %1612 = vmatpush.msra.mxu0 0.0
    %1613 = vmatpush.msra.mxu0 0.0
    %1614 = vmatpush.msra.mxu0 0.0
    %1615 = vmatpush.msra.mxu0 0.0
    %1616 = vmatpush.msra.mxu0 0.0
    %1617 = vmatpush.msra.mxu0 0.0
    %1618 = vmatpush.msra.mxu0 %v551
    %1619 = vmatpush.msra.mxu0 %v548
    %1620 = vmatmul.f32.gmra.mxu0 %v713
    %v1621 = vpop.f32.mrf.mxu0
    %v1622 = vadd.f32 0.0, %v1621
    %1623 = vmatmul.f32.gmra.mxu0 %v716
    %v1624 = vpop.f32.mrf.mxu0
    %v1625 = vadd.f32 0.0, %v1624
    %1626 = vmatmul.f32.gmra.mxu0 %v719
    %v1627 = vpop.f32.mrf.mxu0
    %v1628 = vadd.f32 0.0, %v1627
    %1629 = vdwg.mxu0
    %s1630 = scalar_lea.vmem [#allocation2], 504
    %1631 = vst.msk [vmem:[%s1630] sm:$0xff] %vm747, %v1622
    %1632 = vst.msk [vmem:[%s1630 + $0x8] sm:$0xff] %vm747, %v1625
    %1633 = vst.msk [vmem:[%s1630 + $0x10] sm:$0xff] %vm747, %v1628
    %v1634 = vsel %vm747, %v1622, 0.0
    %v1635 = vsel %vm747, %v1625, 0.0
    %v1636 = vadd.f32 %v1634, %v1635
    %v1637 = vsel %vm747, %v1628, 0.0
    %v1638 = vadd.f32 %v1636, %v1637
    %v1639 = vrot.slane %v1638, 4
    %v1640 = vadd.f32 %v1638, %v1639
    %v1641 = vrot.slane %v1640, 2
    %v1642 = vadd.f32 %v1640, %v1641
    %v1643 = vrot.slane %v1642, 1
    %v1644 = vadd.f32 %v1642, %v1643
    %1645 = vst.msk [vmem:[%s4 + $0x15] sm:$0x1] %vm762, %v1644
    %1646 = vmatpush.msra.mxu0 0.0
    %1647 = vmatpush.msra.mxu0 0.0
    %1648 = vmatpush.msra.mxu0 0.0
    %1649 = vmatpush.msra.mxu0 0.0
    %1650 = vmatpush.msra.mxu0 0.0
    %1651 = vmatpush.msra.mxu0 0.0
    %1652 = vmatpush.msra.mxu0 0.0
    %1653 = vmatpush.msra.mxu0 0.0
    %1654 = vmatpush.msra.mxu0 0.0
    %1655 = vmatpush.msra.mxu0 0.0
    %1656 = vmatpush.msra.mxu0 0.0
    %1657 = vmatpush.msra.mxu0 0.0
    %1658 = vmatpush.msra.mxu0 0.0
    %1659 = vmatpush.msra.mxu0 0.0
    %1660 = vmatpush.msra.mxu0 %v557
    %1661 = vmatpush.msra.mxu0 %v554
    %1662 = vmatmul.f32.gmra.mxu0 %v713
    %v1663 = vpop.f32.mrf.mxu0
    %v1664 = vadd.f32 0.0, %v1663
    %1665 = vmatmul.f32.gmra.mxu0 %v716
    %v1666 = vpop.f32.mrf.mxu0
    %v1667 = vadd.f32 0.0, %v1666
    %1668 = vmatmul.f32.gmra.mxu0 %v719
    %v1669 = vpop.f32.mrf.mxu0
    %v1670 = vadd.f32 0.0, %v1669
    %1671 = vdwg.mxu0
    %s1672 = scalar_lea.vmem [#allocation2], 528
    %1673 = vst.msk [vmem:[%s1672] sm:$0xff] %vm747, %v1664
    %1674 = vst.msk [vmem:[%s1672 + $0x8] sm:$0xff] %vm747, %v1667
    %1675 = vst.msk [vmem:[%s1672 + $0x10] sm:$0xff] %vm747, %v1670
    %v1676 = vsel %vm747, %v1664, 0.0
    %v1677 = vsel %vm747, %v1667, 0.0
    %v1678 = vadd.f32 %v1676, %v1677
    %v1679 = vsel %vm747, %v1670, 0.0
    %v1680 = vadd.f32 %v1678, %v1679
    %v1681 = vrot.slane %v1680, 4
    %v1682 = vadd.f32 %v1680, %v1681
    %v1683 = vrot.slane %v1682, 2
    %v1684 = vadd.f32 %v1682, %v1683
    %v1685 = vrot.slane %v1684, 1
    %v1686 = vadd.f32 %v1684, %v1685
    %1687 = vst.msk [vmem:[%s4 + $0x16] sm:$0x1] %vm762, %v1686
    %1688 = vmatpush.msra.mxu0 0.0
    %1689 = vmatpush.msra.mxu0 0.0
    %1690 = vmatpush.msra.mxu0 0.0
    %1691 = vmatpush.msra.mxu0 0.0
    %1692 = vmatpush.msra.mxu0 0.0
    %1693 = vmatpush.msra.mxu0 0.0
    %1694 = vmatpush.msra.mxu0 0.0
    %1695 = vmatpush.msra.mxu0 0.0
    %1696 = vmatpush.msra.mxu0 0.0
    %1697 = vmatpush.msra.mxu0 0.0
    %1698 = vmatpush.msra.mxu0 0.0
    %1699 = vmatpush.msra.mxu0 0.0
    %1700 = vmatpush.msra.mxu0 0.0
    %1701 = vmatpush.msra.mxu0 0.0
    %1702 = vmatpush.msra.mxu0 %v563
    %1703 = vmatpush.msra.mxu0 %v560
    %1704 = vmatmul.f32.gmra.mxu0 %v713
    %v1705 = vpop.f32.mrf.mxu0
    %v1706 = vadd.f32 0.0, %v1705
    %1707 = vmatmul.f32.gmra.mxu0 %v716
    %v1708 = vpop.f32.mrf.mxu0
    %v1709 = vadd.f32 0.0, %v1708
    %1710 = vmatmul.f32.gmra.mxu0 %v719
    %v1711 = vpop.f32.mrf.mxu0
    %v1712 = vadd.f32 0.0, %v1711
    %1713 = vdwg.mxu0
    %s1714 = scalar_lea.vmem [#allocation2], 552
    %1715 = vst.msk [vmem:[%s1714] sm:$0xff] %vm747, %v1706
    %1716 = vst.msk [vmem:[%s1714 + $0x8] sm:$0xff] %vm747, %v1709
    %1717 = vst.msk [vmem:[%s1714 + $0x10] sm:$0xff] %vm747, %v1712
    %v1718 = vsel %vm747, %v1706, 0.0
    %v1719 = vsel %vm747, %v1709, 0.0
    %v1720 = vadd.f32 %v1718, %v1719
    %v1721 = vsel %vm747, %v1712, 0.0
    %v1722 = vadd.f32 %v1720, %v1721
    %v1723 = vrot.slane %v1722, 4
    %v1724 = vadd.f32 %v1722, %v1723
    %v1725 = vrot.slane %v1724, 2
    %v1726 = vadd.f32 %v1724, %v1725
    %v1727 = vrot.slane %v1726, 1
    %v1728 = vadd.f32 %v1726, %v1727
    %1729 = vst.msk [vmem:[%s4 + $0x17] sm:$0x1] %vm762, %v1728
    %1730 = vmatpush.msra.mxu0 0.0
    %1731 = vmatpush.msra.mxu0 0.0
    %1732 = vmatpush.msra.mxu0 0.0
    %1733 = vmatpush.msra.mxu0 0.0
    %1734 = vmatpush.msra.mxu0 0.0
    %1735 = vmatpush.msra.mxu0 0.0
    %1736 = vmatpush.msra.mxu0 0.0
    %1737 = vmatpush.msra.mxu0 0.0
    %1738 = vmatpush.msra.mxu0 0.0
    %1739 = vmatpush.msra.mxu0 0.0
    %1740 = vmatpush.msra.mxu0 0.0
    %1741 = vmatpush.msra.mxu0 0.0
    %1742 = vmatpush.msra.mxu0 0.0
    %1743 = vmatpush.msra.mxu0 0.0
    %1744 = vmatpush.msra.mxu0 %v569
    %1745 = vmatpush.msra.mxu0 %v566
    %1746 = vmatmul.f32.gmra.mxu0 %v713
    %v1747 = vpop.f32.mrf.mxu0
    %v1748 = vadd.f32 0.0, %v1747
    %1749 = vmatmul.f32.gmra.mxu0 %v716
    %v1750 = vpop.f32.mrf.mxu0
    %v1751 = vadd.f32 0.0, %v1750
    %1752 = vmatmul.f32.gmra.mxu0 %v719
    %v1753 = vpop.f32.mrf.mxu0
    %v1754 = vadd.f32 0.0, %v1753
    %1755 = vdwg.mxu0
    %s1756 = scalar_lea.vmem [#allocation2], 576
    %1757 = vst.msk [vmem:[%s1756] sm:$0xff] %vm747, %v1748
    %1758 = vst.msk [vmem:[%s1756 + $0x8] sm:$0xff] %vm747, %v1751
    %1759 = vst.msk [vmem:[%s1756 + $0x10] sm:$0xff] %vm747, %v1754
    %v1760 = vsel %vm747, %v1748, 0.0
    %v1761 = vsel %vm747, %v1751, 0.0
    %v1762 = vadd.f32 %v1760, %v1761
    %v1763 = vsel %vm747, %v1754, 0.0
    %v1764 = vadd.f32 %v1762, %v1763
    %v1765 = vrot.slane %v1764, 4
    %v1766 = vadd.f32 %v1764, %v1765
    %v1767 = vrot.slane %v1766, 2
    %v1768 = vadd.f32 %v1766, %v1767
    %v1769 = vrot.slane %v1768, 1
    %v1770 = vadd.f32 %v1768, %v1769
    %1771 = vst.msk [vmem:[%s4 + $0x18] sm:$0x1] %vm762, %v1770
    %1772 = vmatpush.msra.mxu0 0.0
    %1773 = vmatpush.msra.mxu0 0.0
    %1774 = vmatpush.msra.mxu0 0.0
    %1775 = vmatpush.msra.mxu0 0.0
    %1776 = vmatpush.msra.mxu0 0.0
    %1777 = vmatpush.msra.mxu0 0.0
    %1778 = vmatpush.msra.mxu0 0.0
    %1779 = vmatpush.msra.mxu0 0.0
    %1780 = vmatpush.msra.mxu0 0.0
    %1781 = vmatpush.msra.mxu0 0.0
    %1782 = vmatpush.msra.mxu0 0.0
    %1783 = vmatpush.msra.mxu0 0.0
    %1784 = vmatpush.msra.mxu0 0.0
    %1785 = vmatpush.msra.mxu0 0.0
    %1786 = vmatpush.msra.mxu0 %v575
    %1787 = vmatpush.msra.mxu0 %v572
    %1788 = vmatmul.f32.gmra.mxu0 %v713
    %v1789 = vpop.f32.mrf.mxu0
    %v1790 = vadd.f32 0.0, %v1789
    %1791 = vmatmul.f32.gmra.mxu0 %v716
    %v1792 = vpop.f32.mrf.mxu0
    %v1793 = vadd.f32 0.0, %v1792
    %1794 = vmatmul.f32.gmra.mxu0 %v719
    %v1795 = vpop.f32.mrf.mxu0
    %v1796 = vadd.f32 0.0, %v1795
    %1797 = vdwg.mxu0
    %s1798 = scalar_lea.vmem [#allocation2], 600
    %1799 = vst.msk [vmem:[%s1798] sm:$0xff] %vm747, %v1790
    %1800 = vst.msk [vmem:[%s1798 + $0x8] sm:$0xff] %vm747, %v1793
    %1801 = vst.msk [vmem:[%s1798 + $0x10] sm:$0xff] %vm747, %v1796
    %v1802 = vsel %vm747, %v1790, 0.0
    %v1803 = vsel %vm747, %v1793, 0.0
    %v1804 = vadd.f32 %v1802, %v1803
    %v1805 = vsel %vm747, %v1796, 0.0
    %v1806 = vadd.f32 %v1804, %v1805
    %v1807 = vrot.slane %v1806, 4
    %v1808 = vadd.f32 %v1806, %v1807
    %v1809 = vrot.slane %v1808, 2
    %v1810 = vadd.f32 %v1808, %v1809
    %v1811 = vrot.slane %v1810, 1
    %v1812 = vadd.f32 %v1810, %v1811
    %1813 = vst.msk [vmem:[%s4 + $0x19] sm:$0x1] %vm762, %v1812
    %1814 = vmatpush.msra.mxu0 0.0
    %1815 = vmatpush.msra.mxu0 0.0
    %1816 = vmatpush.msra.mxu0 0.0
    %1817 = vmatpush.msra.mxu0 0.0
    %1818 = vmatpush.msra.mxu0 0.0
    %1819 = vmatpush.msra.mxu0 0.0
    %1820 = vmatpush.msra.mxu0 0.0
    %1821 = vmatpush.msra.mxu0 0.0
    %1822 = vmatpush.msra.mxu0 0.0
    %1823 = vmatpush.msra.mxu0 0.0
    %1824 = vmatpush.msra.mxu0 0.0
    %1825 = vmatpush.msra.mxu0 0.0
    %1826 = vmatpush.msra.mxu0 0.0
    %1827 = vmatpush.msra.mxu0 0.0
    %1828 = vmatpush.msra.mxu0 %v581
    %1829 = vmatpush.msra.mxu0 %v578
    %1830 = vmatmul.f32.gmra.mxu0 %v713
    %v1831 = vpop.f32.mrf.mxu0
    %v1832 = vadd.f32 0.0, %v1831
    %1833 = vmatmul.f32.gmra.mxu0 %v716
    %v1834 = vpop.f32.mrf.mxu0
    %v1835 = vadd.f32 0.0, %v1834
    %1836 = vmatmul.f32.gmra.mxu0 %v719
    %v1837 = vpop.f32.mrf.mxu0
    %v1838 = vadd.f32 0.0, %v1837
    %1839 = vdwg.mxu0
    %s1840 = scalar_lea.vmem [#allocation2], 624
    %1841 = vst.msk [vmem:[%s1840] sm:$0xff] %vm747, %v1832
    %1842 = vst.msk [vmem:[%s1840 + $0x8] sm:$0xff] %vm747, %v1835
    %1843 = vst.msk [vmem:[%s1840 + $0x10] sm:$0xff] %vm747, %v1838
    %v1844 = vsel %vm747, %v1832, 0.0
    %v1845 = vsel %vm747, %v1835, 0.0
    %v1846 = vadd.f32 %v1844, %v1845
    %v1847 = vsel %vm747, %v1838, 0.0
    %v1848 = vadd.f32 %v1846, %v1847
    %v1849 = vrot.slane %v1848, 4
    %v1850 = vadd.f32 %v1848, %v1849
    %v1851 = vrot.slane %v1850, 2
    %v1852 = vadd.f32 %v1850, %v1851
    %v1853 = vrot.slane %v1852, 1
    %v1854 = vadd.f32 %v1852, %v1853
    %1855 = vst.msk [vmem:[%s4 + $0x1a] sm:$0x1] %vm762, %v1854
    %1856 = vmatpush.msra.mxu0 0.0
    %1857 = vmatpush.msra.mxu0 0.0
    %1858 = vmatpush.msra.mxu0 0.0
    %1859 = vmatpush.msra.mxu0 0.0
    %1860 = vmatpush.msra.mxu0 0.0
    %1861 = vmatpush.msra.mxu0 0.0
    %1862 = vmatpush.msra.mxu0 0.0
    %1863 = vmatpush.msra.mxu0 0.0
    %1864 = vmatpush.msra.mxu0 0.0
    %1865 = vmatpush.msra.mxu0 0.0
    %1866 = vmatpush.msra.mxu0 0.0
    %1867 = vmatpush.msra.mxu0 0.0
    %1868 = vmatpush.msra.mxu0 0.0
    %1869 = vmatpush.msra.mxu0 0.0
    %1870 = vmatpush.msra.mxu0 %v587
    %1871 = vmatpush.msra.mxu0 %v584
    %1872 = vmatmul.f32.gmra.mxu0 %v713
    %v1873 = vpop.f32.mrf.mxu0
    %v1874 = vadd.f32 0.0, %v1873
    %1875 = vmatmul.f32.gmra.mxu0 %v716
    %v1876 = vpop.f32.mrf.mxu0
    %v1877 = vadd.f32 0.0, %v1876
    %1878 = vmatmul.f32.gmra.mxu0 %v719
    %v1879 = vpop.f32.mrf.mxu0
    %v1880 = vadd.f32 0.0, %v1879
    %1881 = vdwg.mxu0
    %s1882 = scalar_lea.vmem [#allocation2], 648
    %1883 = vst.msk [vmem:[%s1882] sm:$0xff] %vm747, %v1874
    %1884 = vst.msk [vmem:[%s1882 + $0x8] sm:$0xff] %vm747, %v1877
    %1885 = vst.msk [vmem:[%s1882 + $0x10] sm:$0xff] %vm747, %v1880
    %v1886 = vsel %vm747, %v1874, 0.0
    %v1887 = vsel %vm747, %v1877, 0.0
    %v1888 = vadd.f32 %v1886, %v1887
    %v1889 = vsel %vm747, %v1880, 0.0
    %v1890 = vadd.f32 %v1888, %v1889
    %v1891 = vrot.slane %v1890, 4
    %v1892 = vadd.f32 %v1890, %v1891
    %v1893 = vrot.slane %v1892, 2
    %v1894 = vadd.f32 %v1892, %v1893
    %v1895 = vrot.slane %v1894, 1
    %v1896 = vadd.f32 %v1894, %v1895
    %1897 = vst.msk [vmem:[%s4 + $0x1b] sm:$0x1] %vm762, %v1896
    %1898 = vmatpush.msra.mxu0 0.0
    %1899 = vmatpush.msra.mxu0 0.0
    %1900 = vmatpush.msra.mxu0 0.0
    %1901 = vmatpush.msra.mxu0 0.0
    %1902 = vmatpush.msra.mxu0 0.0
    %1903 = vmatpush.msra.mxu0 0.0
    %1904 = vmatpush.msra.mxu0 0.0
    %1905 = vmatpush.msra.mxu0 0.0
    %1906 = vmatpush.msra.mxu0 0.0
    %1907 = vmatpush.msra.mxu0 0.0
    %1908 = vmatpush.msra.mxu0 0.0
    %1909 = vmatpush.msra.mxu0 0.0
    %1910 = vmatpush.msra.mxu0 0.0
    %1911 = vmatpush.msra.mxu0 0.0
    %1912 = vmatpush.msra.mxu0 %v593
    %1913 = vmatpush.msra.mxu0 %v590
    %1914 = vmatmul.f32.gmra.mxu0 %v713
    %v1915 = vpop.f32.mrf.mxu0
    %v1916 = vadd.f32 0.0, %v1915
    %1917 = vmatmul.f32.gmra.mxu0 %v716
    %v1918 = vpop.f32.mrf.mxu0
    %v1919 = vadd.f32 0.0, %v1918
    %1920 = vmatmul.f32.gmra.mxu0 %v719
    %v1921 = vpop.f32.mrf.mxu0
    %v1922 = vadd.f32 0.0, %v1921
    %1923 = vdwg.mxu0
    %s1924 = scalar_lea.vmem [#allocation2], 672
    %1925 = vst.msk [vmem:[%s1924] sm:$0xff] %vm747, %v1916
    %1926 = vst.msk [vmem:[%s1924 + $0x8] sm:$0xff] %vm747, %v1919
    %1927 = vst.msk [vmem:[%s1924 + $0x10] sm:$0xff] %vm747, %v1922
    %v1928 = vsel %vm747, %v1916, 0.0
    %v1929 = vsel %vm747, %v1919, 0.0
    %v1930 = vadd.f32 %v1928, %v1929
    %v1931 = vsel %vm747, %v1922, 0.0
    %v1932 = vadd.f32 %v1930, %v1931
    %v1933 = vrot.slane %v1932, 4
    %v1934 = vadd.f32 %v1932, %v1933
    %v1935 = vrot.slane %v1934, 2
    %v1936 = vadd.f32 %v1934, %v1935
    %v1937 = vrot.slane %v1936, 1
    %v1938 = vadd.f32 %v1936, %v1937
    %1939 = vst.msk [vmem:[%s4 + $0x1c] sm:$0x1] %vm762, %v1938
    %1940 = vmatpush.msra.mxu0 0.0
    %1941 = vmatpush.msra.mxu0 0.0
    %1942 = vmatpush.msra.mxu0 0.0
    %1943 = vmatpush.msra.mxu0 0.0
    %1944 = vmatpush.msra.mxu0 0.0
    %1945 = vmatpush.msra.mxu0 0.0
    %1946 = vmatpush.msra.mxu0 0.0
    %1947 = vmatpush.msra.mxu0 0.0
    %1948 = vmatpush.msra.mxu0 0.0
    %1949 = vmatpush.msra.mxu0 0.0
    %1950 = vmatpush.msra.mxu0 0.0
    %1951 = vmatpush.msra.mxu0 0.0
    %1952 = vmatpush.msra.mxu0 0.0
    %1953 = vmatpush.msra.mxu0 0.0
    %1954 = vmatpush.msra.mxu0 %v599
    %1955 = vmatpush.msra.mxu0 %v596
    %1956 = vmatmul.f32.gmra.mxu0 %v713
    %v1957 = vpop.f32.mrf.mxu0
    %v1958 = vadd.f32 0.0, %v1957
    %1959 = vmatmul.f32.gmra.mxu0 %v716
    %v1960 = vpop.f32.mrf.mxu0
    %v1961 = vadd.f32 0.0, %v1960
    %1962 = vmatmul.f32.gmra.mxu0 %v719
    %v1963 = vpop.f32.mrf.mxu0
    %v1964 = vadd.f32 0.0, %v1963
    %1965 = vdwg.mxu0
    %s1966 = scalar_lea.vmem [#allocation2], 696
    %1967 = vst.msk [vmem:[%s1966] sm:$0xff] %vm747, %v1958
    %1968 = vst.msk [vmem:[%s1966 + $0x8] sm:$0xff] %vm747, %v1961
    %1969 = vst.msk [vmem:[%s1966 + $0x10] sm:$0xff] %vm747, %v1964
    %v1970 = vsel %vm747, %v1958, 0.0
    %v1971 = vsel %vm747, %v1961, 0.0
    %v1972 = vadd.f32 %v1970, %v1971
    %v1973 = vsel %vm747, %v1964, 0.0
    %v1974 = vadd.f32 %v1972, %v1973
    %v1975 = vrot.slane %v1974, 4
    %v1976 = vadd.f32 %v1974, %v1975
    %v1977 = vrot.slane %v1976, 2
    %v1978 = vadd.f32 %v1976, %v1977
    %v1979 = vrot.slane %v1978, 1
    %v1980 = vadd.f32 %v1978, %v1979
    %1981 = vst.msk [vmem:[%s4 + $0x1d] sm:$0x1] %vm762, %v1980
    %1982 = vmatpush.msra.mxu0 0.0
    %1983 = vmatpush.msra.mxu0 0.0
    %1984 = vmatpush.msra.mxu0 0.0
    %1985 = vmatpush.msra.mxu0 0.0
    %1986 = vmatpush.msra.mxu0 0.0
    %1987 = vmatpush.msra.mxu0 0.0
    %1988 = vmatpush.msra.mxu0 0.0
    %1989 = vmatpush.msra.mxu0 0.0
    %1990 = vmatpush.msra.mxu0 0.0
    %1991 = vmatpush.msra.mxu0 0.0
    %1992 = vmatpush.msra.mxu0 0.0
    %1993 = vmatpush.msra.mxu0 0.0
    %1994 = vmatpush.msra.mxu0 0.0
    %1995 = vmatpush.msra.mxu0 0.0
    %1996 = vmatpush.msra.mxu0 %v605
    %1997 = vmatpush.msra.mxu0 %v602
    %1998 = vmatmul.f32.gmra.mxu0 %v713
    %v1999 = vpop.f32.mrf.mxu0
    %v2000 = vadd.f32 0.0, %v1999
    %2001 = vmatmul.f32.gmra.mxu0 %v716
    %v2002 = vpop.f32.mrf.mxu0
    %v2003 = vadd.f32 0.0, %v2002
    %2004 = vmatmul.f32.gmra.mxu0 %v719
    %v2005 = vpop.f32.mrf.mxu0
    %v2006 = vadd.f32 0.0, %v2005
    %2007 = vdwg.mxu0
    %s2008 = scalar_lea.vmem [#allocation2], 720
    %2009 = vst.msk [vmem:[%s2008] sm:$0xff] %vm747, %v2000
    %2010 = vst.msk [vmem:[%s2008 + $0x8] sm:$0xff] %vm747, %v2003
    %2011 = vst.msk [vmem:[%s2008 + $0x10] sm:$0xff] %vm747, %v2006
    %v2012 = vsel %vm747, %v2000, 0.0
    %v2013 = vsel %vm747, %v2003, 0.0
    %v2014 = vadd.f32 %v2012, %v2013
    %v2015 = vsel %vm747, %v2006, 0.0
    %v2016 = vadd.f32 %v2014, %v2015
    %v2017 = vrot.slane %v2016, 4
    %v2018 = vadd.f32 %v2016, %v2017
    %v2019 = vrot.slane %v2018, 2
    %v2020 = vadd.f32 %v2018, %v2019
    %v2021 = vrot.slane %v2020, 1
    %v2022 = vadd.f32 %v2020, %v2021
    %2023 = vst.msk [vmem:[%s4 + $0x1e] sm:$0x1] %vm762, %v2022
    %2024 = vmatpush.msra.mxu0 0.0
    %2025 = vmatpush.msra.mxu0 0.0
    %2026 = vmatpush.msra.mxu0 0.0
    %2027 = vmatpush.msra.mxu0 0.0
    %2028 = vmatpush.msra.mxu0 0.0
    %2029 = vmatpush.msra.mxu0 0.0
    %2030 = vmatpush.msra.mxu0 0.0
    %2031 = vmatpush.msra.mxu0 0.0
    %2032 = vmatpush.msra.mxu0 0.0
    %2033 = vmatpush.msra.mxu0 0.0
    %2034 = vmatpush.msra.mxu0 0.0
    %2035 = vmatpush.msra.mxu0 0.0
    %2036 = vmatpush.msra.mxu0 0.0
    %2037 = vmatpush.msra.mxu0 0.0
    %2038 = vmatpush.msra.mxu0 %v611
    %2039 = vmatpush.msra.mxu0 %v608
    %2040 = vmatmul.f32.gmra.mxu0 %v713
    %v2041 = vpop.f32.mrf.mxu0
    %v2042 = vadd.f32 0.0, %v2041
    %2043 = vmatmul.f32.gmra.mxu0 %v716
    %v2044 = vpop.f32.mrf.mxu0
    %v2045 = vadd.f32 0.0, %v2044
    %2046 = vmatmul.f32.gmra.mxu0 %v719
    %v2047 = vpop.f32.mrf.mxu0
    %v2048 = vadd.f32 0.0, %v2047
    %2049 = vdwg.mxu0
    %s2050 = scalar_lea.vmem [#allocation2], 744
    %2051 = vst.msk [vmem:[%s2050] sm:$0xff] %vm747, %v2042
    %2052 = vst.msk [vmem:[%s2050 + $0x8] sm:$0xff] %vm747, %v2045
    %2053 = vst.msk [vmem:[%s2050 + $0x10] sm:$0xff] %vm747, %v2048
    %v2054 = vsel %vm747, %v2042, 0.0
    %v2055 = vsel %vm747, %v2045, 0.0
    %v2056 = vadd.f32 %v2054, %v2055
    %v2057 = vsel %vm747, %v2048, 0.0
    %v2058 = vadd.f32 %v2056, %v2057
    %v2059 = vrot.slane %v2058, 4
    %v2060 = vadd.f32 %v2058, %v2059
    %v2061 = vrot.slane %v2060, 2
    %v2062 = vadd.f32 %v2060, %v2061
    %v2063 = vrot.slane %v2062, 1
    %v2064 = vadd.f32 %v2062, %v2063
    %2065 = vst.msk [vmem:[%s4 + $0x1f] sm:$0x1] %vm762, %v2064
    %2066 = vmatpush.msra.mxu0 0.0
    %2067 = vmatpush.msra.mxu0 0.0
    %2068 = vmatpush.msra.mxu0 0.0
    %2069 = vmatpush.msra.mxu0 0.0
    %2070 = vmatpush.msra.mxu0 0.0
    %2071 = vmatpush.msra.mxu0 0.0
    %2072 = vmatpush.msra.mxu0 0.0
    %2073 = vmatpush.msra.mxu0 0.0
    %2074 = vmatpush.msra.mxu0 0.0
    %2075 = vmatpush.msra.mxu0 0.0
    %2076 = vmatpush.msra.mxu0 0.0
    %2077 = vmatpush.msra.mxu0 0.0
    %2078 = vmatpush.msra.mxu0 0.0
    %2079 = vmatpush.msra.mxu0 0.0
    %2080 = vmatpush.msra.mxu0 %v617
    %2081 = vmatpush.msra.mxu0 %v614
    %2082 = vmatmul.f32.gmra.mxu0 %v713
    %v2083 = vpop.f32.mrf.mxu0
    %v2084 = vadd.f32 0.0, %v2083
    %2085 = vmatmul.f32.gmra.mxu0 %v716
    %v2086 = vpop.f32.mrf.mxu0
    %v2087 = vadd.f32 0.0, %v2086
    %2088 = vmatmul.f32.gmra.mxu0 %v719
    %v2089 = vpop.f32.mrf.mxu0
    %v2090 = vadd.f32 0.0, %v2089
    %2091 = vdwg.mxu0
    %s2092 = scalar_lea.vmem [#allocation2], 768
    %2093 = vst.msk [vmem:[%s2092] sm:$0xff] %vm747, %v2084
    %2094 = vst.msk [vmem:[%s2092 + $0x8] sm:$0xff] %vm747, %v2087
    %2095 = vst.msk [vmem:[%s2092 + $0x10] sm:$0xff] %vm747, %v2090
    %v2096 = vsel %vm747, %v2084, 0.0
    %v2097 = vsel %vm747, %v2087, 0.0
    %v2098 = vadd.f32 %v2096, %v2097
    %v2099 = vsel %vm747, %v2090, 0.0
    %v2100 = vadd.f32 %v2098, %v2099
    %v2101 = vrot.slane %v2100, 4
    %v2102 = vadd.f32 %v2100, %v2101
    %v2103 = vrot.slane %v2102, 2
    %v2104 = vadd.f32 %v2102, %v2103
    %v2105 = vrot.slane %v2104, 1
    %v2106 = vadd.f32 %v2104, %v2105
    %2107 = vst.msk [vmem:[%s4 + $0x20] sm:$0x1] %vm762, %v2106
    %2108 = vmatpush.msra.mxu0 0.0
    %2109 = vmatpush.msra.mxu0 0.0
    %2110 = vmatpush.msra.mxu0 0.0
    %2111 = vmatpush.msra.mxu0 0.0
    %2112 = vmatpush.msra.mxu0 0.0
    %2113 = vmatpush.msra.mxu0 0.0
    %2114 = vmatpush.msra.mxu0 0.0
    %2115 = vmatpush.msra.mxu0 0.0
    %2116 = vmatpush.msra.mxu0 0.0
    %2117 = vmatpush.msra.mxu0 0.0
    %2118 = vmatpush.msra.mxu0 0.0
    %2119 = vmatpush.msra.mxu0 0.0
    %2120 = vmatpush.msra.mxu0 0.0
    %2121 = vmatpush.msra.mxu0 0.0
    %2122 = vmatpush.msra.mxu0 %v623
    %2123 = vmatpush.msra.mxu0 %v620
    %2124 = vmatmul.f32.gmra.mxu0 %v713
    %v2125 = vpop.f32.mrf.mxu0
    %v2126 = vadd.f32 0.0, %v2125
    %2127 = vmatmul.f32.gmra.mxu0 %v716
    %v2128 = vpop.f32.mrf.mxu0
    %v2129 = vadd.f32 0.0, %v2128
    %2130 = vmatmul.f32.gmra.mxu0 %v719
    %v2131 = vpop.f32.mrf.mxu0
    %v2132 = vadd.f32 0.0, %v2131
    %2133 = vdwg.mxu0
    %s2134 = scalar_lea.vmem [#allocation2], 792
    %2135 = vst.msk [vmem:[%s2134] sm:$0xff] %vm747, %v2126
    %2136 = vst.msk [vmem:[%s2134 + $0x8] sm:$0xff] %vm747, %v2129
    %2137 = vst.msk [vmem:[%s2134 + $0x10] sm:$0xff] %vm747, %v2132
    %v2138 = vsel %vm747, %v2126, 0.0
    %v2139 = vsel %vm747, %v2129, 0.0
    %v2140 = vadd.f32 %v2138, %v2139
    %v2141 = vsel %vm747, %v2132, 0.0
    %v2142 = vadd.f32 %v2140, %v2141
    %v2143 = vrot.slane %v2142, 4
    %v2144 = vadd.f32 %v2142, %v2143
    %v2145 = vrot.slane %v2144, 2
    %v2146 = vadd.f32 %v2144, %v2145
    %v2147 = vrot.slane %v2146, 1
    %v2148 = vadd.f32 %v2146, %v2147
    %2149 = vst.msk [vmem:[%s4 + $0x21] sm:$0x1] %vm762, %v2148
    %2150 = vmatpush.msra.mxu0 0.0
    %2151 = vmatpush.msra.mxu0 0.0
    %2152 = vmatpush.msra.mxu0 0.0
    %2153 = vmatpush.msra.mxu0 0.0
    %2154 = vmatpush.msra.mxu0 0.0
    %2155 = vmatpush.msra.mxu0 0.0
    %2156 = vmatpush.msra.mxu0 0.0
    %2157 = vmatpush.msra.mxu0 0.0
    %2158 = vmatpush.msra.mxu0 0.0
    %2159 = vmatpush.msra.mxu0 0.0
    %2160 = vmatpush.msra.mxu0 0.0
    %2161 = vmatpush.msra.mxu0 0.0
    %2162 = vmatpush.msra.mxu0 0.0
    %2163 = vmatpush.msra.mxu0 0.0
    %2164 = vmatpush.msra.mxu0 %v629
    %2165 = vmatpush.msra.mxu0 %v626
    %2166 = vmatmul.f32.gmra.mxu0 %v713
    %v2167 = vpop.f32.mrf.mxu0
    %v2168 = vadd.f32 0.0, %v2167
    %2169 = vmatmul.f32.gmra.mxu0 %v716
    %v2170 = vpop.f32.mrf.mxu0
    %v2171 = vadd.f32 0.0, %v2170
    %2172 = vmatmul.f32.gmra.mxu0 %v719
    %v2173 = vpop.f32.mrf.mxu0
    %v2174 = vadd.f32 0.0, %v2173
    %2175 = vdwg.mxu0
    %s2176 = scalar_lea.vmem [#allocation2], 816
    %2177 = vst.msk [vmem:[%s2176] sm:$0xff] %vm747, %v2168
    %2178 = vst.msk [vmem:[%s2176 + $0x8] sm:$0xff] %vm747, %v2171
    %2179 = vst.msk [vmem:[%s2176 + $0x10] sm:$0xff] %vm747, %v2174
    %v2180 = vsel %vm747, %v2168, 0.0
    %v2181 = vsel %vm747, %v2171, 0.0
    %v2182 = vadd.f32 %v2180, %v2181
    %v2183 = vsel %vm747, %v2174, 0.0
    %v2184 = vadd.f32 %v2182, %v2183
    %v2185 = vrot.slane %v2184, 4
    %v2186 = vadd.f32 %v2184, %v2185
    %v2187 = vrot.slane %v2186, 2
    %v2188 = vadd.f32 %v2186, %v2187
    %v2189 = vrot.slane %v2188, 1
    %v2190 = vadd.f32 %v2188, %v2189
    %2191 = vst.msk [vmem:[%s4 + $0x22] sm:$0x1] %vm762, %v2190
    %2192 = vmatpush.msra.mxu0 0.0
    %2193 = vmatpush.msra.mxu0 0.0
    %2194 = vmatpush.msra.mxu0 0.0
    %2195 = vmatpush.msra.mxu0 0.0
    %2196 = vmatpush.msra.mxu0 0.0
    %2197 = vmatpush.msra.mxu0 0.0
    %2198 = vmatpush.msra.mxu0 0.0
    %2199 = vmatpush.msra.mxu0 0.0
    %2200 = vmatpush.msra.mxu0 0.0
    %2201 = vmatpush.msra.mxu0 0.0
    %2202 = vmatpush.msra.mxu0 0.0
    %2203 = vmatpush.msra.mxu0 0.0
    %2204 = vmatpush.msra.mxu0 0.0
    %2205 = vmatpush.msra.mxu0 0.0
    %2206 = vmatpush.msra.mxu0 %v635
    %2207 = vmatpush.msra.mxu0 %v632
    %2208 = vmatmul.f32.gmra.mxu0 %v713
    %v2209 = vpop.f32.mrf.mxu0
    %v2210 = vadd.f32 0.0, %v2209
    %2211 = vmatmul.f32.gmra.mxu0 %v716
    %v2212 = vpop.f32.mrf.mxu0
    %v2213 = vadd.f32 0.0, %v2212
    %2214 = vmatmul.f32.gmra.mxu0 %v719
    %v2215 = vpop.f32.mrf.mxu0
    %v2216 = vadd.f32 0.0, %v2215
    %2217 = vdwg.mxu0
    %s2218 = scalar_lea.vmem [#allocation2], 840
    %2219 = vst.msk [vmem:[%s2218] sm:$0xff] %vm747, %v2210
    %2220 = vst.msk [vmem:[%s2218 + $0x8] sm:$0xff] %vm747, %v2213
    %2221 = vst.msk [vmem:[%s2218 + $0x10] sm:$0xff] %vm747, %v2216
    %v2222 = vsel %vm747, %v2210, 0.0
    %v2223 = vsel %vm747, %v2213, 0.0
    %v2224 = vadd.f32 %v2222, %v2223
    %v2225 = vsel %vm747, %v2216, 0.0
    %v2226 = vadd.f32 %v2224, %v2225
    %v2227 = vrot.slane %v2226, 4
    %v2228 = vadd.f32 %v2226, %v2227
    %v2229 = vrot.slane %v2228, 2
    %v2230 = vadd.f32 %v2228, %v2229
    %v2231 = vrot.slane %v2230, 1
    %v2232 = vadd.f32 %v2230, %v2231
    %2233 = vst.msk [vmem:[%s4 + $0x23] sm:$0x1] %vm762, %v2232
    %2234 = vmatpush.msra.mxu0 0.0
    %2235 = vmatpush.msra.mxu0 0.0
    %2236 = vmatpush.msra.mxu0 0.0
    %2237 = vmatpush.msra.mxu0 0.0
    %2238 = vmatpush.msra.mxu0 0.0
    %2239 = vmatpush.msra.mxu0 0.0
    %2240 = vmatpush.msra.mxu0 0.0
    %2241 = vmatpush.msra.mxu0 0.0
    %2242 = vmatpush.msra.mxu0 0.0
    %2243 = vmatpush.msra.mxu0 0.0
    %2244 = vmatpush.msra.mxu0 0.0
    %2245 = vmatpush.msra.mxu0 0.0
    %2246 = vmatpush.msra.mxu0 0.0
    %2247 = vmatpush.msra.mxu0 0.0
    %2248 = vmatpush.msra.mxu0 %v641
    %2249 = vmatpush.msra.mxu0 %v638
    %2250 = vmatmul.f32.gmra.mxu0 %v713
    %v2251 = vpop.f32.mrf.mxu0
    %v2252 = vadd.f32 0.0, %v2251
    %2253 = vmatmul.f32.gmra.mxu0 %v716
    %v2254 = vpop.f32.mrf.mxu0
    %v2255 = vadd.f32 0.0, %v2254
    %2256 = vmatmul.f32.gmra.mxu0 %v719
    %v2257 = vpop.f32.mrf.mxu0
    %v2258 = vadd.f32 0.0, %v2257
    %2259 = vdwg.mxu0
    %s2260 = scalar_lea.vmem [#allocation2], 864
    %2261 = vst.msk [vmem:[%s2260] sm:$0xff] %vm747, %v2252
    %2262 = vst.msk [vmem:[%s2260 + $0x8] sm:$0xff] %vm747, %v2255
    %2263 = vst.msk [vmem:[%s2260 + $0x10] sm:$0xff] %vm747, %v2258
    %v2264 = vsel %vm747, %v2252, 0.0
    %v2265 = vsel %vm747, %v2255, 0.0
    %v2266 = vadd.f32 %v2264, %v2265
    %v2267 = vsel %vm747, %v2258, 0.0
    %v2268 = vadd.f32 %v2266, %v2267
    %v2269 = vrot.slane %v2268, 4
    %v2270 = vadd.f32 %v2268, %v2269
    %v2271 = vrot.slane %v2270, 2
    %v2272 = vadd.f32 %v2270, %v2271
    %v2273 = vrot.slane %v2272, 1
    %v2274 = vadd.f32 %v2272, %v2273
    %2275 = vst.msk [vmem:[%s4 + $0x24] sm:$0x1] %vm762, %v2274
    %2276 = vmatpush.msra.mxu0 0.0
    %2277 = vmatpush.msra.mxu0 0.0
    %2278 = vmatpush.msra.mxu0 0.0
    %2279 = vmatpush.msra.mxu0 0.0
    %2280 = vmatpush.msra.mxu0 0.0
    %2281 = vmatpush.msra.mxu0 0.0
    %2282 = vmatpush.msra.mxu0 0.0
    %2283 = vmatpush.msra.mxu0 0.0
    %2284 = vmatpush.msra.mxu0 0.0
    %2285 = vmatpush.msra.mxu0 0.0
    %2286 = vmatpush.msra.mxu0 0.0
    %2287 = vmatpush.msra.mxu0 0.0
    %2288 = vmatpush.msra.mxu0 0.0
    %2289 = vmatpush.msra.mxu0 0.0
    %2290 = vmatpush.msra.mxu0 %v647
    %2291 = vmatpush.msra.mxu0 %v644
    %2292 = vmatmul.f32.gmra.mxu0 %v713
    %v2293 = vpop.f32.mrf.mxu0
    %v2294 = vadd.f32 0.0, %v2293
    %2295 = vmatmul.f32.gmra.mxu0 %v716
    %v2296 = vpop.f32.mrf.mxu0
    %v2297 = vadd.f32 0.0, %v2296
    %2298 = vmatmul.f32.gmra.mxu0 %v719
    %v2299 = vpop.f32.mrf.mxu0
    %v2300 = vadd.f32 0.0, %v2299
    %2301 = vdwg.mxu0
    %s2302 = scalar_lea.vmem [#allocation2], 888
    %2303 = vst.msk [vmem:[%s2302] sm:$0xff] %vm747, %v2294
    %2304 = vst.msk [vmem:[%s2302 + $0x8] sm:$0xff] %vm747, %v2297
    %2305 = vst.msk [vmem:[%s2302 + $0x10] sm:$0xff] %vm747, %v2300
    %v2306 = vsel %vm747, %v2294, 0.0
    %v2307 = vsel %vm747, %v2297, 0.0
    %v2308 = vadd.f32 %v2306, %v2307
    %v2309 = vsel %vm747, %v2300, 0.0
    %v2310 = vadd.f32 %v2308, %v2309
    %v2311 = vrot.slane %v2310, 4
    %v2312 = vadd.f32 %v2310, %v2311
    %v2313 = vrot.slane %v2312, 2
    %v2314 = vadd.f32 %v2312, %v2313
    %v2315 = vrot.slane %v2314, 1
    %v2316 = vadd.f32 %v2314, %v2315
    %2317 = vst.msk [vmem:[%s4 + $0x25] sm:$0x1] %vm762, %v2316
    %2318 = vmatpush.msra.mxu0 0.0
    %2319 = vmatpush.msra.mxu0 0.0
    %2320 = vmatpush.msra.mxu0 0.0
    %2321 = vmatpush.msra.mxu0 0.0
    %2322 = vmatpush.msra.mxu0 0.0
    %2323 = vmatpush.msra.mxu0 0.0
    %2324 = vmatpush.msra.mxu0 0.0
    %2325 = vmatpush.msra.mxu0 0.0
    %2326 = vmatpush.msra.mxu0 0.0
    %2327 = vmatpush.msra.mxu0 0.0
    %2328 = vmatpush.msra.mxu0 0.0
    %2329 = vmatpush.msra.mxu0 0.0
    %2330 = vmatpush.msra.mxu0 0.0
    %2331 = vmatpush.msra.mxu0 0.0
    %2332 = vmatpush.msra.mxu0 %v653
    %2333 = vmatpush.msra.mxu0 %v650
    %2334 = vmatmul.f32.gmra.mxu0 %v713
    %v2335 = vpop.f32.mrf.mxu0
    %v2336 = vadd.f32 0.0, %v2335
    %2337 = vmatmul.f32.gmra.mxu0 %v716
    %v2338 = vpop.f32.mrf.mxu0
    %v2339 = vadd.f32 0.0, %v2338
    %2340 = vmatmul.f32.gmra.mxu0 %v719
    %v2341 = vpop.f32.mrf.mxu0
    %v2342 = vadd.f32 0.0, %v2341
    %2343 = vdwg.mxu0
    %s2344 = scalar_lea.vmem [#allocation2], 912
    %2345 = vst.msk [vmem:[%s2344] sm:$0xff] %vm747, %v2336
    %2346 = vst.msk [vmem:[%s2344 + $0x8] sm:$0xff] %vm747, %v2339
    %2347 = vst.msk [vmem:[%s2344 + $0x10] sm:$0xff] %vm747, %v2342
    %v2348 = vsel %vm747, %v2336, 0.0
    %v2349 = vsel %vm747, %v2339, 0.0
    %v2350 = vadd.f32 %v2348, %v2349
    %v2351 = vsel %vm747, %v2342, 0.0
    %v2352 = vadd.f32 %v2350, %v2351
    %v2353 = vrot.slane %v2352, 4
    %v2354 = vadd.f32 %v2352, %v2353
    %v2355 = vrot.slane %v2354, 2
    %v2356 = vadd.f32 %v2354, %v2355
    %v2357 = vrot.slane %v2356, 1
    %v2358 = vadd.f32 %v2356, %v2357
    %2359 = vst.msk [vmem:[%s4 + $0x26] sm:$0x1] %vm762, %v2358
    %2360 = vmatpush.msra.mxu0 0.0
    %2361 = vmatpush.msra.mxu0 0.0
    %2362 = vmatpush.msra.mxu0 0.0
    %2363 = vmatpush.msra.mxu0 0.0
    %2364 = vmatpush.msra.mxu0 0.0
    %2365 = vmatpush.msra.mxu0 0.0
    %2366 = vmatpush.msra.mxu0 0.0
    %2367 = vmatpush.msra.mxu0 0.0
    %2368 = vmatpush.msra.mxu0 0.0
    %2369 = vmatpush.msra.mxu0 0.0
    %2370 = vmatpush.msra.mxu0 0.0
    %2371 = vmatpush.msra.mxu0 0.0
    %2372 = vmatpush.msra.mxu0 0.0
    %2373 = vmatpush.msra.mxu0 0.0
    %2374 = vmatpush.msra.mxu0 %v659
    %2375 = vmatpush.msra.mxu0 %v656
    %2376 = vmatmul.f32.gmra.mxu0 %v713
    %v2377 = vpop.f32.mrf.mxu0
    %v2378 = vadd.f32 0.0, %v2377
    %2379 = vmatmul.f32.gmra.mxu0 %v716
    %v2380 = vpop.f32.mrf.mxu0
    %v2381 = vadd.f32 0.0, %v2380
    %2382 = vmatmul.f32.gmra.mxu0 %v719
    %v2383 = vpop.f32.mrf.mxu0
    %v2384 = vadd.f32 0.0, %v2383
    %2385 = vdwg.mxu0
    %s2386 = scalar_lea.vmem [#allocation2], 936
    %2387 = vst.msk [vmem:[%s2386] sm:$0xff] %vm747, %v2378
    %2388 = vst.msk [vmem:[%s2386 + $0x8] sm:$0xff] %vm747, %v2381
    %2389 = vst.msk [vmem:[%s2386 + $0x10] sm:$0xff] %vm747, %v2384
    %v2390 = vsel %vm747, %v2378, 0.0
    %v2391 = vsel %vm747, %v2381, 0.0
    %v2392 = vadd.f32 %v2390, %v2391
    %v2393 = vsel %vm747, %v2384, 0.0
    %v2394 = vadd.f32 %v2392, %v2393
    %v2395 = vrot.slane %v2394, 4
    %v2396 = vadd.f32 %v2394, %v2395
    %v2397 = vrot.slane %v2396, 2
    %v2398 = vadd.f32 %v2396, %v2397
    %v2399 = vrot.slane %v2398, 1
    %v2400 = vadd.f32 %v2398, %v2399
    %2401 = vst.msk [vmem:[%s4 + $0x27] sm:$0x1] %vm762, %v2400
    %2402 = vmatpush.msra.mxu0 0.0
    %2403 = vmatpush.msra.mxu0 0.0
    %2404 = vmatpush.msra.mxu0 0.0
    %2405 = vmatpush.msra.mxu0 0.0
    %2406 = vmatpush.msra.mxu0 0.0
    %2407 = vmatpush.msra.mxu0 0.0
    %2408 = vmatpush.msra.mxu0 0.0
    %2409 = vmatpush.msra.mxu0 0.0
    %2410 = vmatpush.msra.mxu0 0.0
    %2411 = vmatpush.msra.mxu0 0.0
    %2412 = vmatpush.msra.mxu0 0.0
    %2413 = vmatpush.msra.mxu0 0.0
    %2414 = vmatpush.msra.mxu0 0.0
    %2415 = vmatpush.msra.mxu0 0.0
    %2416 = vmatpush.msra.mxu0 %v665
    %2417 = vmatpush.msra.mxu0 %v662
    %2418 = vmatmul.f32.gmra.mxu0 %v713
    %v2419 = vpop.f32.mrf.mxu0
    %v2420 = vadd.f32 0.0, %v2419
    %2421 = vmatmul.f32.gmra.mxu0 %v716
    %v2422 = vpop.f32.mrf.mxu0
    %v2423 = vadd.f32 0.0, %v2422
    %2424 = vmatmul.f32.gmra.mxu0 %v719
    %v2425 = vpop.f32.mrf.mxu0
    %v2426 = vadd.f32 0.0, %v2425
    %2427 = vdwg.mxu0
    %s2428 = scalar_lea.vmem [#allocation2], 960
    %2429 = vst.msk [vmem:[%s2428] sm:$0xff] %vm747, %v2420
    %2430 = vst.msk [vmem:[%s2428 + $0x8] sm:$0xff] %vm747, %v2423
    %2431 = vst.msk [vmem:[%s2428 + $0x10] sm:$0xff] %vm747, %v2426
    %v2432 = vsel %vm747, %v2420, 0.0
    %v2433 = vsel %vm747, %v2423, 0.0
    %v2434 = vadd.f32 %v2432, %v2433
    %v2435 = vsel %vm747, %v2426, 0.0
    %v2436 = vadd.f32 %v2434, %v2435
    %v2437 = vrot.slane %v2436, 4
    %v2438 = vadd.f32 %v2436, %v2437
    %v2439 = vrot.slane %v2438, 2
    %v2440 = vadd.f32 %v2438, %v2439
    %v2441 = vrot.slane %v2440, 1
    %v2442 = vadd.f32 %v2440, %v2441
    %2443 = vst.msk [vmem:[%s4 + $0x28] sm:$0x1] %vm762, %v2442
    %2444 = vmatpush.msra.mxu0 0.0
    %2445 = vmatpush.msra.mxu0 0.0
    %2446 = vmatpush.msra.mxu0 0.0
    %2447 = vmatpush.msra.mxu0 0.0
    %2448 = vmatpush.msra.mxu0 0.0
    %2449 = vmatpush.msra.mxu0 0.0
    %2450 = vmatpush.msra.mxu0 0.0
    %2451 = vmatpush.msra.mxu0 0.0
    %2452 = vmatpush.msra.mxu0 0.0
    %2453 = vmatpush.msra.mxu0 0.0
    %2454 = vmatpush.msra.mxu0 0.0
    %2455 = vmatpush.msra.mxu0 0.0
    %2456 = vmatpush.msra.mxu0 0.0
    %2457 = vmatpush.msra.mxu0 0.0
    %2458 = vmatpush.msra.mxu0 %v671
    %2459 = vmatpush.msra.mxu0 %v668
    %2460 = vmatmul.f32.gmra.mxu0 %v713
    %v2461 = vpop.f32.mrf.mxu0
    %v2462 = vadd.f32 0.0, %v2461
    %2463 = vmatmul.f32.gmra.mxu0 %v716
    %v2464 = vpop.f32.mrf.mxu0
    %v2465 = vadd.f32 0.0, %v2464
    %2466 = vmatmul.f32.gmra.mxu0 %v719
    %v2467 = vpop.f32.mrf.mxu0
    %v2468 = vadd.f32 0.0, %v2467
    %2469 = vdwg.mxu0
    %s2470 = scalar_lea.vmem [#allocation2], 984
    %2471 = vst.msk [vmem:[%s2470] sm:$0xff] %vm747, %v2462
    %2472 = vst.msk [vmem:[%s2470 + $0x8] sm:$0xff] %vm747, %v2465
    %2473 = vst.msk [vmem:[%s2470 + $0x10] sm:$0xff] %vm747, %v2468
    %v2474 = vsel %vm747, %v2462, 0.0
    %v2475 = vsel %vm747, %v2465, 0.0
    %v2476 = vadd.f32 %v2474, %v2475
    %v2477 = vsel %vm747, %v2468, 0.0
    %v2478 = vadd.f32 %v2476, %v2477
    %v2479 = vrot.slane %v2478, 4
    %v2480 = vadd.f32 %v2478, %v2479
    %v2481 = vrot.slane %v2480, 2
    %v2482 = vadd.f32 %v2480, %v2481
    %v2483 = vrot.slane %v2482, 1
    %v2484 = vadd.f32 %v2482, %v2483
    %2485 = vst.msk [vmem:[%s4 + $0x29] sm:$0x1] %vm762, %v2484
    %2486 = vmatpush.msra.mxu0 0.0
    %2487 = vmatpush.msra.mxu0 0.0
    %2488 = vmatpush.msra.mxu0 0.0
    %2489 = vmatpush.msra.mxu0 0.0
    %2490 = vmatpush.msra.mxu0 0.0
    %2491 = vmatpush.msra.mxu0 0.0
    %2492 = vmatpush.msra.mxu0 0.0
    %2493 = vmatpush.msra.mxu0 0.0
    %2494 = vmatpush.msra.mxu0 0.0
    %2495 = vmatpush.msra.mxu0 0.0
    %2496 = vmatpush.msra.mxu0 0.0
    %2497 = vmatpush.msra.mxu0 0.0
    %2498 = vmatpush.msra.mxu0 0.0
    %2499 = vmatpush.msra.mxu0 0.0
    %2500 = vmatpush.msra.mxu0 %v677
    %2501 = vmatpush.msra.mxu0 %v674
    %2502 = vmatmul.f32.gmra.mxu0 %v713
    %v2503 = vpop.f32.mrf.mxu0
    %v2504 = vadd.f32 0.0, %v2503
    %2505 = vmatmul.f32.gmra.mxu0 %v716
    %v2506 = vpop.f32.mrf.mxu0
    %v2507 = vadd.f32 0.0, %v2506
    %2508 = vmatmul.f32.gmra.mxu0 %v719
    %v2509 = vpop.f32.mrf.mxu0
    %v2510 = vadd.f32 0.0, %v2509
    %2511 = vdwg.mxu0
    %s2512 = scalar_lea.vmem [#allocation2], 1008
    %2513 = vst.msk [vmem:[%s2512] sm:$0xff] %vm747, %v2504
    %2514 = vst.msk [vmem:[%s2512 + $0x8] sm:$0xff] %vm747, %v2507
    %2515 = vst.msk [vmem:[%s2512 + $0x10] sm:$0xff] %vm747, %v2510
    %v2516 = vsel %vm747, %v2504, 0.0
    %v2517 = vsel %vm747, %v2507, 0.0
    %v2518 = vadd.f32 %v2516, %v2517
    %v2519 = vsel %vm747, %v2510, 0.0
    %v2520 = vadd.f32 %v2518, %v2519
    %v2521 = vrot.slane %v2520, 4
    %v2522 = vadd.f32 %v2520, %v2521
    %v2523 = vrot.slane %v2522, 2
    %v2524 = vadd.f32 %v2522, %v2523
    %v2525 = vrot.slane %v2524, 1
    %v2526 = vadd.f32 %v2524, %v2525
    %2527 = vst.msk [vmem:[%s4 + $0x2a] sm:$0x1] %vm762, %v2526
    %2528 = vmatpush.msra.mxu0 0.0
    %2529 = vmatpush.msra.mxu0 0.0
    %2530 = vmatpush.msra.mxu0 0.0
    %2531 = vmatpush.msra.mxu0 0.0
    %2532 = vmatpush.msra.mxu0 0.0
    %2533 = vmatpush.msra.mxu0 0.0
    %2534 = vmatpush.msra.mxu0 0.0
    %2535 = vmatpush.msra.mxu0 0.0
    %2536 = vmatpush.msra.mxu0 0.0
    %2537 = vmatpush.msra.mxu0 0.0
    %2538 = vmatpush.msra.mxu0 0.0
    %2539 = vmatpush.msra.mxu0 0.0
    %2540 = vmatpush.msra.mxu0 0.0
    %2541 = vmatpush.msra.mxu0 0.0
    %2542 = vmatpush.msra.mxu0 %v683
    %2543 = vmatpush.msra.mxu0 %v680
    %2544 = vmatmul.f32.gmra.mxu0 %v713
    %v2545 = vpop.f32.mrf.mxu0
    %v2546 = vadd.f32 0.0, %v2545
    %2547 = vmatmul.f32.gmra.mxu0 %v716
    %v2548 = vpop.f32.mrf.mxu0
    %v2549 = vadd.f32 0.0, %v2548
    %2550 = vmatmul.f32.gmra.mxu0 %v719
    %v2551 = vpop.f32.mrf.mxu0
    %v2552 = vadd.f32 0.0, %v2551
    %2553 = vdwg.mxu0
    %s2554 = scalar_lea.vmem [#allocation2], 1032
    %2555 = vst.msk [vmem:[%s2554] sm:$0xff] %vm747, %v2546
    %2556 = vst.msk [vmem:[%s2554 + $0x8] sm:$0xff] %vm747, %v2549
    %2557 = vst.msk [vmem:[%s2554 + $0x10] sm:$0xff] %vm747, %v2552
    %v2558 = vsel %vm747, %v2546, 0.0
    %v2559 = vsel %vm747, %v2549, 0.0
    %v2560 = vadd.f32 %v2558, %v2559
    %v2561 = vsel %vm747, %v2552, 0.0
    %v2562 = vadd.f32 %v2560, %v2561
    %v2563 = vrot.slane %v2562, 4
    %v2564 = vadd.f32 %v2562, %v2563
    %v2565 = vrot.slane %v2564, 2
    %v2566 = vadd.f32 %v2564, %v2565
    %v2567 = vrot.slane %v2566, 1
    %v2568 = vadd.f32 %v2566, %v2567
    %2569 = vst.msk [vmem:[%s4 + $0x2b] sm:$0x1] %vm762, %v2568
    %2570 = vmatpush.msra.mxu0 0.0
    %2571 = vmatpush.msra.mxu0 0.0
    %2572 = vmatpush.msra.mxu0 0.0
    %2573 = vmatpush.msra.mxu0 0.0
    %2574 = vmatpush.msra.mxu0 0.0
    %2575 = vmatpush.msra.mxu0 0.0
    %2576 = vmatpush.msra.mxu0 0.0
    %2577 = vmatpush.msra.mxu0 0.0
    %2578 = vmatpush.msra.mxu0 0.0
    %2579 = vmatpush.msra.mxu0 0.0
    %2580 = vmatpush.msra.mxu0 0.0
    %2581 = vmatpush.msra.mxu0 0.0
    %2582 = vmatpush.msra.mxu0 0.0
    %2583 = vmatpush.msra.mxu0 0.0
    %2584 = vmatpush.msra.mxu0 %v689
    %2585 = vmatpush.msra.mxu0 %v686
    %2586 = vmatmul.f32.gmra.mxu0 %v713
    %v2587 = vpop.f32.mrf.mxu0
    %v2588 = vadd.f32 0.0, %v2587
    %2589 = vmatmul.f32.gmra.mxu0 %v716
    %v2590 = vpop.f32.mrf.mxu0
    %v2591 = vadd.f32 0.0, %v2590
    %2592 = vmatmul.f32.gmra.mxu0 %v719
    %v2593 = vpop.f32.mrf.mxu0
    %v2594 = vadd.f32 0.0, %v2593
    %2595 = vdwg.mxu0
    %s2596 = scalar_lea.vmem [#allocation2], 1056
    %2597 = vst.msk [vmem:[%s2596] sm:$0xff] %vm747, %v2588
    %2598 = vst.msk [vmem:[%s2596 + $0x8] sm:$0xff] %vm747, %v2591
    %2599 = vst.msk [vmem:[%s2596 + $0x10] sm:$0xff] %vm747, %v2594
    %v2600 = vsel %vm747, %v2588, 0.0
    %v2601 = vsel %vm747, %v2591, 0.0
    %v2602 = vadd.f32 %v2600, %v2601
    %v2603 = vsel %vm747, %v2594, 0.0
    %v2604 = vadd.f32 %v2602, %v2603
    %v2605 = vrot.slane %v2604, 4
    %v2606 = vadd.f32 %v2604, %v2605
    %v2607 = vrot.slane %v2606, 2
    %v2608 = vadd.f32 %v2606, %v2607
    %v2609 = vrot.slane %v2608, 1
    %v2610 = vadd.f32 %v2608, %v2609
    %2611 = vst.msk [vmem:[%s4 + $0x2c] sm:$0x1] %vm762, %v2610
    %2612 = vmatpush.msra.mxu0 0.0
    %2613 = vmatpush.msra.mxu0 0.0
    %2614 = vmatpush.msra.mxu0 0.0
    %2615 = vmatpush.msra.mxu0 0.0
    %2616 = vmatpush.msra.mxu0 0.0
    %2617 = vmatpush.msra.mxu0 0.0
    %2618 = vmatpush.msra.mxu0 0.0
    %2619 = vmatpush.msra.mxu0 0.0
    %2620 = vmatpush.msra.mxu0 0.0
    %2621 = vmatpush.msra.mxu0 0.0
    %2622 = vmatpush.msra.mxu0 0.0
    %2623 = vmatpush.msra.mxu0 0.0
    %2624 = vmatpush.msra.mxu0 0.0
    %2625 = vmatpush.msra.mxu0 0.0
    %2626 = vmatpush.msra.mxu0 %v695
    %2627 = vmatpush.msra.mxu0 %v692
    %2628 = vmatmul.f32.gmra.mxu0 %v713
    %v2629 = vpop.f32.mrf.mxu0
    %v2630 = vadd.f32 0.0, %v2629
    %2631 = vmatmul.f32.gmra.mxu0 %v716
    %v2632 = vpop.f32.mrf.mxu0
    %v2633 = vadd.f32 0.0, %v2632
    %2634 = vmatmul.f32.gmra.mxu0 %v719
    %v2635 = vpop.f32.mrf.mxu0
    %v2636 = vadd.f32 0.0, %v2635
    %2637 = vdwg.mxu0
    %s2638 = scalar_lea.vmem [#allocation2], 1080
    %2639 = vst.msk [vmem:[%s2638] sm:$0xff] %vm747, %v2630
    %2640 = vst.msk [vmem:[%s2638 + $0x8] sm:$0xff] %vm747, %v2633
    %2641 = vst.msk [vmem:[%s2638 + $0x10] sm:$0xff] %vm747, %v2636
    %v2642 = vsel %vm747, %v2630, 0.0
    %v2643 = vsel %vm747, %v2633, 0.0
    %v2644 = vadd.f32 %v2642, %v2643
    %v2645 = vsel %vm747, %v2636, 0.0
    %v2646 = vadd.f32 %v2644, %v2645
    %v2647 = vrot.slane %v2646, 4
    %v2648 = vadd.f32 %v2646, %v2647
    %v2649 = vrot.slane %v2648, 2
    %v2650 = vadd.f32 %v2648, %v2649
    %v2651 = vrot.slane %v2650, 1
    %v2652 = vadd.f32 %v2650, %v2651
    %2653 = vst.msk [vmem:[%s4 + $0x2d] sm:$0x1] %vm762, %v2652
    %2654 = vmatpush.msra.mxu0 0.0
    %2655 = vmatpush.msra.mxu0 0.0
    %2656 = vmatpush.msra.mxu0 0.0
    %2657 = vmatpush.msra.mxu0 0.0
    %2658 = vmatpush.msra.mxu0 0.0
    %2659 = vmatpush.msra.mxu0 0.0
    %2660 = vmatpush.msra.mxu0 0.0
    %2661 = vmatpush.msra.mxu0 0.0
    %2662 = vmatpush.msra.mxu0 0.0
    %2663 = vmatpush.msra.mxu0 0.0
    %2664 = vmatpush.msra.mxu0 0.0
    %2665 = vmatpush.msra.mxu0 0.0
    %2666 = vmatpush.msra.mxu0 0.0
    %2667 = vmatpush.msra.mxu0 0.0
    %2668 = vmatpush.msra.mxu0 %v701
    %2669 = vmatpush.msra.mxu0 %v698
    %2670 = vmatmul.f32.gmra.mxu0 %v713
    %v2671 = vpop.f32.mrf.mxu0
    %v2672 = vadd.f32 0.0, %v2671
    %2673 = vmatmul.f32.gmra.mxu0 %v716
    %v2674 = vpop.f32.mrf.mxu0
    %v2675 = vadd.f32 0.0, %v2674
    %2676 = vmatmul.f32.gmra.mxu0 %v719
    %v2677 = vpop.f32.mrf.mxu0
    %v2678 = vadd.f32 0.0, %v2677
    %2679 = vdwg.mxu0
    %s2680 = scalar_lea.vmem [#allocation2], 1104
    %2681 = vst.msk [vmem:[%s2680] sm:$0xff] %vm747, %v2672
    %2682 = vst.msk [vmem:[%s2680 + $0x8] sm:$0xff] %vm747, %v2675
    %2683 = vst.msk [vmem:[%s2680 + $0x10] sm:$0xff] %vm747, %v2678
    %v2684 = vsel %vm747, %v2672, 0.0
    %v2685 = vsel %vm747, %v2675, 0.0
    %v2686 = vadd.f32 %v2684, %v2685
    %v2687 = vsel %vm747, %v2678, 0.0
    %v2688 = vadd.f32 %v2686, %v2687
    %v2689 = vrot.slane %v2688, 4
    %v2690 = vadd.f32 %v2688, %v2689
    %v2691 = vrot.slane %v2690, 2
    %v2692 = vadd.f32 %v2690, %v2691
    %v2693 = vrot.slane %v2692, 1
    %v2694 = vadd.f32 %v2692, %v2693
    %2695 = vst.msk [vmem:[%s4 + $0x2e] sm:$0x1] %vm762, %v2694
    %2696 = vmatpush.msra.mxu0 0.0
    %2697 = vmatpush.msra.mxu0 0.0
    %2698 = vmatpush.msra.mxu0 0.0
    %2699 = vmatpush.msra.mxu0 0.0
    %2700 = vmatpush.msra.mxu0 0.0
    %2701 = vmatpush.msra.mxu0 0.0
    %2702 = vmatpush.msra.mxu0 0.0
    %2703 = vmatpush.msra.mxu0 0.0
    %2704 = vmatpush.msra.mxu0 0.0
    %2705 = vmatpush.msra.mxu0 0.0
    %2706 = vmatpush.msra.mxu0 0.0
    %2707 = vmatpush.msra.mxu0 0.0
    %2708 = vmatpush.msra.mxu0 0.0
    %2709 = vmatpush.msra.mxu0 0.0
    %2710 = vmatpush.msra.mxu0 %v707
    %2711 = vmatpush.msra.mxu0 %v704
    %2712 = vmatmul.f32.gmra.mxu0 %v713
    %v2713 = vpop.f32.mrf.mxu0
    %v2714 = vadd.f32 0.0, %v2713
    %2715 = vmatmul.f32.gmra.mxu0 %v716
    %v2716 = vpop.f32.mrf.mxu0
    %v2717 = vadd.f32 0.0, %v2716
    %2718 = vmatmul.f32.gmra.mxu0 %v719
    %v2719 = vpop.f32.mrf.mxu0
    %v2720 = vadd.f32 0.0, %v2719
    %2721 = vdwg.mxu0
    %s2722 = scalar_lea.vmem [#allocation2], 1128
    %2723 = vst.msk [vmem:[%s2722] sm:$0xff] %vm747, %v2714
    %2724 = vst.msk [vmem:[%s2722 + $0x8] sm:$0xff] %vm747, %v2717
    %2725 = vst.msk [vmem:[%s2722 + $0x10] sm:$0xff] %vm747, %v2720
    %v2726 = vsel %vm747, %v2714, 0.0
    %v2727 = vsel %vm747, %v2717, 0.0
    %v2728 = vadd.f32 %v2726, %v2727
    %v2729 = vsel %vm747, %v2720, 0.0
    %v2730 = vadd.f32 %v2728, %v2729
    %v2731 = vrot.slane %v2730, 4
    %v2732 = vadd.f32 %v2730, %v2731
    %v2733 = vrot.slane %v2732, 2
    %v2734 = vadd.f32 %v2732, %v2733
    %v2735 = vrot.slane %v2734, 1
    %v2736 = vadd.f32 %v2734, %v2735
    %2737 = vst.msk [vmem:[%s4 + $0x2f] sm:$0x1] %vm762, %v2736
    // Predicated region
    $region14: #{predictor3d_forward.3} parent=1 // pred_check
      _
    $region15: #{predictor3d_forward.3} parent=1 // pred_check_branch
      %2739 = sbr.rel (0) target = $region17
    $region16: #{predictor3d_forward.3} parent=1 // pred_region
      %2741 = vsyncadd [#allocation3], 0
      %s2742 = sshll.u32 [#allocation2], 4
      %s2743 = int_to_ptr.vmem [resolvable:$true] %s2742
      %s2744 = sshll.u32 %s3, 4
      %s2745 = int_to_ptr.hbm [resolvable:$true] %s2744
      %2750 = dma.vmem_to_hbm [thread:$0]  %s2743, 18432, %s2745, [#allocation3], 128, 128, 8
    $region17: #{predictor3d_forward.3} parent=1 // pred_fallthru
      _
    // Predicated region
    $region18: #{predictor3d_forward.3} parent=1 // pred_check
      _
    $region19: #{predictor3d_forward.3} parent=1 // pred_check_branch
      %2752 = sbr.rel (0) target = $region21
    $region20: #{predictor3d_forward.3} parent=1 // pred_region
      _
    $region21: #{predictor3d_forward.3} parent=1 // pred_fallthru
      _
    // Predicated region
    $region22: #{predictor3d_forward.3} parent=1 // pred_check
      _
    $region23: #{predictor3d_forward.3} parent=1 // pred_check_branch
      %2754 = sbr.rel (0) target = $region25
    $region24: #{predictor3d_forward.3} parent=1 // pred_region
      %2756 = dma.done [#allocation3], 18432
    $region25: #{predictor3d_forward.3} parent=1 // pred_fallthru
      _
    // Predicated region
    $region26: #{predictor3d_forward.3} parent=1 // pred_check
      _
    $region27: #{predictor3d_forward.3} parent=1 // pred_check_branch
      %2758 = sbr.rel (0) target = $region29
    $region28: #{predictor3d_forward.3} parent=1 // pred_region
      _
    $region29: #{predictor3d_forward.3} parent=1 // pred_fallthru
      _
    %2759 = vsyncpa [#allocation3], 1

</llo_original>
